<compile_context>
chip_gen: v7x
topology: tpu7x:2x2x1
jax: 0.10.0
libtpu: 0.0.40
codegen_flags: <defaults>
</compile_context>

<pallas_src>
import functools
import math

import jax
import jax.numpy as jnp
from jax import lax
from jax.experimental import pallas as pl
from jax.experimental.pallas import tpu as pltpu

D_MODEL = 64
NHEAD = 4
HEAD_DIM = D_MODEL // NHEAD
NUM_LAYERS = 2
DIM_FF = 4 * D_MODEL
OUTPUT_DIM = 1
LN_EPS = 1e-5
_ATTN_SCALE = 1.0 / math.sqrt(HEAD_DIM)
_BIAS_ROWS = 9      # per layer: bq,bk,bv,bo,b2,g1,be1,g2,be2  (each width D)
_W_PER_LAYER = 6    # per layer: wq,wk,wv,wo,w1,w2


# ------------------------------ kernel helpers ------------------------------

def _layernorm(x, gamma, beta):
    mean = jnp.mean(x, axis=-1, keepdims=True)
    xc = x - mean
    var = jnp.mean(xc * xc, axis=-1, keepdims=True)
    return xc * lax.rsqrt(var + LN_EPS) * gamma + beta


# ------------------------------- fused kernel -------------------------------

def fused_transformer_kernel(*refs, tile_b, seq):
    """One grid step = TILE_B whole sequences of the BasicTransformerModel.

    refs = (x, pe, w_in, [wq,wk,wv,wo,w1,w2]*NUM_LAYERS,
            bias_d_slab, bias_ff_slab, w_out_aug, out)
    Activations live as (tile_b*seq, feature) f32; matmul operands are bf16.
    """
    x_ref, pe_ref, w_in_ref = refs[0], refs[1], refs[2]
    n_w = _W_PER_LAYER * NUM_LAYERS
    layer_w = refs[3:3 + n_w]
    bias_d_ref, bias_ff_ref, w_out_ref, o_ref = refs[3 + n_w:]

    rows = tile_b * seq
    bd = bias_d_ref[...]          # (9*NUM_LAYERS, D)      f32
    bff = bias_ff_ref[...]        # (NUM_LAYERS, DIM_FF)   f32

    def brow(i):                  # (1, D) bias / LayerNorm row (static index)
        return bd[i:i + 1, :]

    def mm(a, w_ref, bias=None):  # bf16 MXU matmul, f32 accumulation
        r = jnp.dot(a.astype(jnp.bfloat16), w_ref[...],
                    preferred_element_type=jnp.float32)
        return r if bias is None else r + bias

    # 1) Input projection; positional encoding (input bias already folded in
    #    host-side) added via a (seq, D) broadcast — no host-tiled PE array.
    h = mm(x_ref[...], w_in_ref)
    h = (h.reshape(tile_b, seq, D_MODEL) + pe_ref[...]).reshape(rows, D_MODEL)

    # 2) Post-norm encoder layers (ReLU FF; dropout = identity in eval mode).
    for layer in range(NUM_LAYERS):
        wq, wk, wv, wo, w1, w2 = layer_w[_W_PER_LAYER * layer:
                                         _W_PER_LAYER * (layer + 1)]
        b = _BIAS_ROWS * layer
        last_only = layer == NUM_LAYERS - 1

        # Final layer: only the last token feeds the output head, so queries,
        # residual stream, FF and both LayerNorms shrink to one row per seq
        # (K/V still see every position) — mathematically exact.
        if last_only:
            hq = h.reshape(tile_b, seq, D_MODEL)[:, seq - 1, :]   # (tile_b, D)
            sq = 1
        else:
            hq, sq = h, seq
        nq = tile_b * sq

        q = mm(hq, wq, brow(b + 0))          # (nq, D)
        k = mm(h, wk, brow(b + 1))           # (rows, D)
        v = mm(h, wv, brow(b + 2))           # (rows, D)

        # Multi-head self-attention: unrolled head loop of 3-D batched einsums;
        # per-head contexts are lane-concatenated so the output projection Wo
        # is a single K=64 MXU contraction.
        ctx = []
        for hh in range(NHEAD):
            lo, hi = hh * HEAD_DIM, (hh + 1) * HEAD_DIM
            qh = q[:, lo:hi].reshape(tile_b, sq, HEAD_DIM)
            kh = k[:, lo:hi].reshape(tile_b, seq, HEAD_DIM)
            vh = v[:, lo:hi].reshape(tile_b, seq, HEAD_DIM)
            s = jnp.einsum('bqd,bkd->bqk', qh.astype(jnp.bfloat16),
                           kh.astype(jnp.bfloat16),
                           preferred_element_type=jnp.float32) * _ATTN_SCALE
            p = jnp.exp(s - jnp.max(s, axis=-1, keepdims=True))
            # EUP approximate reciprocal instead of a VPU divide.
            p = p * pl.reciprocal(jnp.sum(p, axis=-1, keepdims=True),
                                  approx=True)
            oh = jnp.einsum('bqk,bkd->bqd', p.astype(jnp.bfloat16),
                            vh.astype(jnp.bfloat16),
                            preferred_element_type=jnp.float32)
            ctx.append(oh.reshape(nq, HEAD_DIM))
        attn = mm(jnp.concatenate(ctx, axis=-1), wo, brow(b + 3))

        h1 = _layernorm(hq + attn, brow(b + 5), brow(b + 6))
        ff = jnp.maximum(mm(h1, w1, bff[layer:layer + 1, :]), 0.0)
        ff = mm(ff, w2, brow(b + 4))
        h = _layernorm(h1 + ff, brow(b + 7), brow(b + 8))

    # 3) Output head on the last-token hidden state (h is (tile_b, D) here);
    #    the output bias rides as the extra last row of w_out_aug.
    w_out = w_out_ref[...]
    o_ref[...] = (jnp.dot(h, w_out[:D_MODEL, :],
                          preferred_element_type=jnp.float32)
                  + w_out[D_MODEL:D_MODEL + 1, :])


# ------------------------------ pallas wrapper -------------------------------

def _resident(shape):
    """Weight / slab spec: full block, constant index_map -> stays in VMEM."""
    nd = len(shape)
    return pl.BlockSpec(shape, lambda i, _n=nd: (0,) * _n)


def _pick_tile_b(batch, seq, target_rows=512):
    """Largest batch tile giving >=~512 rows per grid step (keeps the MXU M
    dimension fat and amortizes ~0.35us/step grid overhead) while keeping the
    BlockSpec sublane constraint (tile_b == batch, or tile_b % 8 == 0)."""
    if batch * seq <= target_rows or batch % 8 != 0:
        return batch
    tb = min(batch, max(8, ((target_rows // seq) // 8) * 8))
    while batch % tb:
        tb -= 8
    return tb


def basic_transformer_forward(x, packed, use_softmax=False, tile_b=None):
    B, S = x.shape[0], x.shape[1]
    if x.ndim > 3:
        x = x.reshape(B, S, -1)
    x = x.astype(jnp.float32)
    F = x.shape[-1]
    assert packed["pe_b"].shape[0] >= S, "positional encoding shorter than sequence"

    if tile_b is None:
        tile_b = _pick_tile_b(B, S)
    assert B % tile_b == 0

    x_flat = x.reshape(B * S, F)
    pe = packed["pe_b"][:S]                       # (S, D); input bias folded in

    args = [x_flat, pe, packed["w_in"], *packed["layer_w"],
            packed["bias_d"], packed["bias_ff"], packed["w_out"]]
    in_specs = [pl.BlockSpec((tile_b * S, F), lambda i: (i, 0))]   # pipelined
    in_specs += [_resident(a.shape) for a in args[1:]]             # VMEM-resident

    out = pl.pallas_call(
        functools.partial(fused_transformer_kernel, tile_b=tile_b, seq=S),
        grid=(B // tile_b,),
        in_specs=in_specs,
        out_specs=pl.BlockSpec((tile_b, OUTPUT_DIM), lambda i: (i, 0)),
        out_shape=jax.ShapeDtypeStruct((B, OUTPUT_DIM), jnp.float32),
        compiler_params=pltpu.CompilerParams(
            # Batch grid axis is embarrassingly parallel -> both TensorCores on
            # v7x take half the batch; harmless no-op on v5e/v6e.
            dimension_semantics=("parallel",),
            # Explicit, generation-safe scoped-VMEM budget (fits v5e/v6e/v7x;
            # actual footprint at 512-row tiles is only a few MiB).
            vmem_limit_bytes=32 * 1024 * 1024,
        ),
    )(*args)

    if use_softmax:
        out = jax.nn.softmax(out, axis=1)
    return out


# ---------------------------- parameter creation ----------------------------

def _positional_encoding(max_len, d_model):
    pos = jnp.arange(max_len, dtype=jnp.float32)[:, None]
    div = jnp.exp(jnp.arange(0, d_model, 2, dtype=jnp.float32)
                  * (-math.log(10000.0) / d_model))
    pe = jnp.zeros((max_len, d_model), jnp.float32)
    pe = pe.at[:, 0::2].set(jnp.sin(pos * div))
    pe = pe.at[:, 1::2].set(jnp.cos(pos * div))
    return pe


def init_params(key, in_features, max_len=64):
    def nrm(k, shape, scale=0.02):
        return scale * jax.random.normal(k, shape, jnp.float32)

    keys = jax.random.split(key, 2 + 6 * NUM_LAYERS)
    ki = iter(keys)
    params = {
        "w_in": nrm(next(ki), (in_features, D_MODEL)),
        "b_in": jnp.zeros((1, D_MODEL), jnp.float32),
        "pe": _positional_encoding(max_len, D_MODEL),
        "w_out": nrm(next(ki), (D_MODEL, OUTPUT_DIM)),
        "b_out": jnp.zeros((1, OUTPUT_DIM), jnp.float32),
        "layers": [],
    }
    for _ in range(NUM_LAYERS):
        params["layers"].append({
            "wq": nrm(next(ki), (D_MODEL, D_MODEL)),
            "bq": jnp.zeros((1, D_MODEL), jnp.float32),
            "wk": nrm(next(ki), (D_MODEL, D_MODEL)),
            "bk": jnp.zeros((1, D_MODEL), jnp.float32),
            "wv": nrm(next(ki), (D_MODEL, D_MODEL)),
            "bv": jnp.zeros((1, D_MODEL), jnp.float32),
            "wo": nrm(next(ki), (D_MODEL, D_MODEL)),
            "bo": jnp.zeros((1, D_MODEL), jnp.float32),
            "w1": nrm(next(ki), (D_MODEL, DIM_FF)),
            "b1": jnp.zeros((1, DIM_FF), jnp.float32),
            "w2": nrm(next(ki), (DIM_FF, D_MODEL)),
            "b2": jnp.zeros((1, D_MODEL), jnp.float32),
            "g1": jnp.ones((1, D_MODEL), jnp.float32),
            "be1": jnp.zeros((1, D_MODEL), jnp.float32),
            "g2": jnp.ones((1, D_MODEL), jnp.float32),
            "be2": jnp.zeros((1, D_MODEL), jnp.float32),
        })
    return params


def pack_params(params):
    """One-time host-side packing: bf16 weight cast, PE + input-bias fold,
    per-layer (1,64)/(1,256) bias & LayerNorm rows stacked into two slabs,
    output bias appended as an extra row of the output weight."""
    bf = lambda w: w.astype(jnp.bfloat16)
    layer_w, bias_d, bias_ff = [], [], []
    for lp in params["layers"]:
        layer_w += [bf(lp["wq"]), bf(lp["wk"]), bf(lp["wv"]),
                    bf(lp["wo"]), bf(lp["w1"]), bf(lp["w2"])]
        bias_d += [lp["bq"], lp["bk"], lp["bv"], lp["bo"], lp["b2"],
                   lp["g1"], lp["be1"], lp["g2"], lp["be2"]]
        bias_ff.append(lp["b1"])
    return {
        "w_in": bf(params["w_in"]),
        "pe_b": (params["pe"] + params["b_in"]).astype(jnp.float32),
        "layer_w": layer_w,
        "bias_d": jnp.concatenate(bias_d, axis=0).astype(jnp.float32),
        "bias_ff": jnp.concatenate(bias_ff, axis=0).astype(jnp.float32),
        "w_out": jnp.concatenate([params["w_out"], params["b_out"]],
                                 axis=0).astype(jnp.float32),
    }


# ----------------------------------- main -----------------------------------

if __name__ == "__main__":
    BATCH, SEQ, FEATURES = 2, 8, 24   # [batch, time_steps, order_book_features]

    key = jax.random.PRNGKey(0)
    k_x, k_p = jax.random.split(key)
    x = jax.random.normal(k_x, (BATCH, SEQ, FEATURES), jnp.float32)
    params = init_params(k_p, FEATURES, max_len=SEQ)
    packed = pack_params(params)

    fwd = jax.jit(functools.partial(basic_transformer_forward, use_softmax=False))
    out = jax.block_until_ready(fwd(x, packed))
    assert out.shape == (BATCH, OUTPUT_DIM) and out.dtype == jnp.float32
    assert bool(jnp.all(jnp.isfinite(out)))

    # Also exercise the multi-step, double-buffered batch grid (tile_b=64,
    # grid=2; megacore-parallel on v7x) that the tiny demo batch never reaches.
    x_big = jax.random.normal(k_x, (128, SEQ, FEATURES), jnp.float32)
    out_big = jax.block_until_ready(fwd(x_big, packed))
    assert out_big.shape == (128, OUTPUT_DIM)
    assert bool(jnp.all(jnp.isfinite(out_big)))

    print("KERNEL_OK")
</pallas_src>

<mosaic_0001>
module attributes {stable_mosaic.version = 11 : i64} {
  func.func @fused_transformer_kernel(%arg0: i32, %arg1: memref<16x24xf32, #tpu.memory_space<vmem>>, %arg2: memref<8x64xf32, #tpu.memory_space<vmem>>, %arg3: memref<24x64xbf16, #tpu.memory_space<vmem>>, %arg4: memref<64x64xbf16, #tpu.memory_space<vmem>>, %arg5: memref<64x64xbf16, #tpu.memory_space<vmem>>, %arg6: memref<64x64xbf16, #tpu.memory_space<vmem>>, %arg7: memref<64x64xbf16, #tpu.memory_space<vmem>>, %arg8: memref<64x256xbf16, #tpu.memory_space<vmem>>, %arg9: memref<256x64xbf16, #tpu.memory_space<vmem>>, %arg10: memref<64x64xbf16, #tpu.memory_space<vmem>>, %arg11: memref<64x64xbf16, #tpu.memory_space<vmem>>, %arg12: memref<64x64xbf16, #tpu.memory_space<vmem>>, %arg13: memref<64x64xbf16, #tpu.memory_space<vmem>>, %arg14: memref<64x256xbf16, #tpu.memory_space<vmem>>, %arg15: memref<256x64xbf16, #tpu.memory_space<vmem>>, %arg16: memref<18x64xf32, #tpu.memory_space<vmem>>, %arg17: memref<2x256xf32, #tpu.memory_space<vmem>>, %arg18: memref<65x1xf32, #tpu.memory_space<vmem>>, %arg19: memref<2x1xf32, #tpu.memory_space<vmem>>) attributes {dimension_semantics = [#tpu.dimension_semantics<parallel>], iteration_bounds = array<i64: 1>, scalar_prefetch = 0 : i64, scratch_operands = 0 : i64, tpu.core_type = #tpu.core_type<tc>, window_params = [{transform_indices = @transform_0, window_bounds = array<i64: 16, 24>}, {pipeline_mode = #tpu.pipeline_mode<synchronous>, transform_indices = @transform_1, window_bounds = array<i64: 8, 64>}, {pipeline_mode = #tpu.pipeline_mode<synchronous>, transform_indices = @transform_2, window_bounds = array<i64: 24, 64>}, {pipeline_mode = #tpu.pipeline_mode<synchronous>, transform_indices = @transform_3, window_bounds = array<i64: 64, 64>}, {pipeline_mode = #tpu.pipeline_mode<synchronous>, transform_indices = @transform_4, window_bounds = array<i64: 64, 64>}, {pipeline_mode = #tpu.pipeline_mode<synchronous>, transform_indices = @transform_5, window_bounds = array<i64: 64, 64>}, {pipeline_mode = #tpu.pipeline_mode<synchronous>, transform_indices = @transform_6, window_bounds = array<i64: 64, 64>}, {pipeline_mode = #tpu.pipeline_mode<synchronous>, transform_indices = @transform_7, window_bounds = array<i64: 64, 256>}, {pipeline_mode = #tpu.pipeline_mode<synchronous>, transform_indices = @transform_8, window_bounds = array<i64: 256, 64>}, {pipeline_mode = #tpu.pipeline_mode<synchronous>, transform_indices = @transform_9, window_bounds = array<i64: 64, 64>}, {pipeline_mode = #tpu.pipeline_mode<synchronous>, transform_indices = @transform_10, window_bounds = array<i64: 64, 64>}, {pipeline_mode = #tpu.pipeline_mode<synchronous>, transform_indices = @transform_11, window_bounds = array<i64: 64, 64>}, {pipeline_mode = #tpu.pipeline_mode<synchronous>, transform_indices = @transform_12, window_bounds = array<i64: 64, 64>}, {pipeline_mode = #tpu.pipeline_mode<synchronous>, transform_indices = @transform_13, window_bounds = array<i64: 64, 256>}, {pipeline_mode = #tpu.pipeline_mode<synchronous>, transform_indices = @transform_14, window_bounds = array<i64: 256, 64>}, {pipeline_mode = #tpu.pipeline_mode<synchronous>, transform_indices = @transform_15, window_bounds = array<i64: 18, 64>}, {pipeline_mode = #tpu.pipeline_mode<synchronous>, transform_indices = @transform_16, window_bounds = array<i64: 2, 256>}, {pipeline_mode = #tpu.pipeline_mode<synchronous>, transform_indices = @transform_17, window_bounds = array<i64: 65, 1>}, {transform_indices = @transform_18, window_bounds = array<i64: 2, 1>}]} {
    %c0 = arith.constant 0 : index
    %c0_0 = arith.constant 0 : index
    %0 = vector.load %arg16[%c0, %c0_0] : memref<18x64xf32, #tpu.memory_space<vmem>>, vector<18x64xf32>
    %c0_1 = arith.constant 0 : index
    %c0_2 = arith.constant 0 : index
    %1 = vector.load %arg17[%c0_1, %c0_2] : memref<2x256xf32, #tpu.memory_space<vmem>>, vector<2x256xf32>
    %c0_3 = arith.constant 0 : index
    %c0_4 = arith.constant 0 : index
    %2 = vector.load %arg1[%c0_3, %c0_4] : memref<16x24xf32, #tpu.memory_space<vmem>>, vector<16x24xf32>
    %3 = arith.truncf %2 : vector<16x24xf32> to vector<16x24xbf16>
    %c0_5 = arith.constant 0 : index
    %c0_6 = arith.constant 0 : index
    %4 = vector.load %arg3[%c0_5, %c0_6] : memref<24x64xbf16, #tpu.memory_space<vmem>>, vector<24x64xbf16>
    %cst = arith.constant dense<0.000000e+00> : vector<16x64xf32>
    %5 = tpu.matmul %3, %4, %cst {dimension_numbers = #tpu.dot_dimension_numbers<[1], [0], [0], [1], [0, 0, 1, 1], [], []>} : vector<16x24xbf16>, vector<24x64xbf16>, vector<16x64xf32> -> vector<16x64xf32>
    %6 = vector.shape_cast %5 : vector<16x64xf32> to vector<2x8x64xf32>
    %c0_7 = arith.constant 0 : index
    %c0_8 = arith.constant 0 : index
    %7 = vector.load %arg2[%c0_7, %c0_8] : memref<8x64xf32, #tpu.memory_space<vmem>>, vector<8x64xf32>
    %8 = vector.shape_cast %7 : vector<8x64xf32> to vector<1x8x64xf32>
    %9 = vector.broadcast %8 : vector<1x8x64xf32> to vector<2x8x64xf32>
    %10 = arith.addf %6, %9 : vector<2x8x64xf32>
    %11 = vector.shape_cast %10 : vector<2x8x64xf32> to vector<16x64xf32>
    %12 = vector.extract_strided_slice %0 {offsets = [0, 0], sizes = [1, 64], strides = [1, 1]} : vector<18x64xf32> to vector<1x64xf32>
    %13 = arith.truncf %11 : vector<16x64xf32> to vector<16x64xbf16>
    %c0_9 = arith.constant 0 : index
    %c0_10 = arith.constant 0 : index
    %14 = vector.load %arg4[%c0_9, %c0_10] : memref<64x64xbf16, #tpu.memory_space<vmem>>, vector<64x64xbf16>
    %cst_11 = arith.constant dense<0.000000e+00> : vector<16x64xf32>
    %15 = tpu.matmul %13, %14, %cst_11 {dimension_numbers = #tpu.dot_dimension_numbers<[1], [0], [0], [1], [0, 0, 1, 1], [], []>} : vector<16x64xbf16>, vector<64x64xbf16>, vector<16x64xf32> -> vector<16x64xf32>
    %16 = vector.broadcast %12 : vector<1x64xf32> to vector<16x64xf32>
    %17 = arith.addf %15, %16 : vector<16x64xf32>
    %18 = vector.extract_strided_slice %0 {offsets = [1, 0], sizes = [1, 64], strides = [1, 1]} : vector<18x64xf32> to vector<1x64xf32>
    %19 = arith.truncf %11 : vector<16x64xf32> to vector<16x64xbf16>
    %c0_12 = arith.constant 0 : index
    %c0_13 = arith.constant 0 : index
    %20 = vector.load %arg5[%c0_12, %c0_13] : memref<64x64xbf16, #tpu.memory_space<vmem>>, vector<64x64xbf16>
    %cst_14 = arith.constant dense<0.000000e+00> : vector<16x64xf32>
    %21 = tpu.matmul %19, %20, %cst_14 {dimension_numbers = #tpu.dot_dimension_numbers<[1], [0], [0], [1], [0, 0, 1, 1], [], []>} : vector<16x64xbf16>, vector<64x64xbf16>, vector<16x64xf32> -> vector<16x64xf32>
    %22 = vector.broadcast %18 : vector<1x64xf32> to vector<16x64xf32>
    %23 = arith.addf %21, %22 : vector<16x64xf32>
    %24 = vector.extract_strided_slice %0 {offsets = [2, 0], sizes = [1, 64], strides = [1, 1]} : vector<18x64xf32> to vector<1x64xf32>
    %25 = arith.truncf %11 : vector<16x64xf32> to vector<16x64xbf16>
    %c0_15 = arith.constant 0 : index
    %c0_16 = arith.constant 0 : index
    %26 = vector.load %arg6[%c0_15, %c0_16] : memref<64x64xbf16, #tpu.memory_space<vmem>>, vector<64x64xbf16>
    %cst_17 = arith.constant dense<0.000000e+00> : vector<16x64xf32>
    %27 = tpu.matmul %25, %26, %cst_17 {dimension_numbers = #tpu.dot_dimension_numbers<[1], [0], [0], [1], [0, 0, 1, 1], [], []>} : vector<16x64xbf16>, vector<64x64xbf16>, vector<16x64xf32> -> vector<16x64xf32>
    %28 = vector.broadcast %24 : vector<1x64xf32> to vector<16x64xf32>
    %29 = arith.addf %27, %28 : vector<16x64xf32>
    %30 = vector.extract_strided_slice %17 {offsets = [0, 0], sizes = [16, 16], strides = [1, 1]} : vector<16x64xf32> to vector<16x16xf32>
    %31 = vector.shape_cast %30 : vector<16x16xf32> to vector<2x8x16xf32>
    %32 = vector.extract_strided_slice %23 {offsets = [0, 0], sizes = [16, 16], strides = [1, 1]} : vector<16x64xf32> to vector<16x16xf32>
    %33 = vector.shape_cast %32 : vector<16x16xf32> to vector<2x8x16xf32>
    %34 = vector.extract_strided_slice %29 {offsets = [0, 0], sizes = [16, 16], strides = [1, 1]} : vector<16x64xf32> to vector<16x16xf32>
    %35 = vector.shape_cast %34 : vector<16x16xf32> to vector<2x8x16xf32>
    %36 = arith.truncf %31 : vector<2x8x16xf32> to vector<2x8x16xbf16>
    %37 = arith.truncf %33 : vector<2x8x16xf32> to vector<2x8x16xbf16>
    "tpu.trace_start"() <{level = 10 : i32, message = "bqd,bkd->bqk"}> : () -> ()
    %cst_18 = arith.constant dense<0.000000e+00> : vector<2x8x8xf32>
    %38 = tpu.matmul %36, %37, %cst_18 {dimension_numbers = #tpu.dot_dimension_numbers<[2], [2], [1], [1], [0, 0, 0, 1, 1, 1], [0], [0]>} : vector<2x8x16xbf16>, vector<2x8x16xbf16>, vector<2x8x8xf32> -> vector<2x8x8xf32>
    "tpu.trace_stop"() : () -> ()
    %cst_19 = arith.constant 2.500000e-01 : f32
    %39 = vector.broadcast %cst_19 : f32 to vector<2x8x8xf32>
    %40 = arith.mulf %38, %39 : vector<2x8x8xf32>
    %cst_20 = arith.constant dense<0xFF800000> : vector<2x8xf32>
    %41 = vector.multi_reduction <maximumf>, %40, %cst_20 [2] : vector<2x8x8xf32> to vector<2x8xf32>
    %42 = vector.shape_cast %41 : vector<2x8xf32> to vector<2x8x1xf32>
    %43 = vector.broadcast %42 : vector<2x8x1xf32> to vector<2x8x8xf32>
    %44 = arith.subf %40, %43 : vector<2x8x8xf32>
    %45 = math.exp %44 : vector<2x8x8xf32>
    %cst_21 = arith.constant dense<0.000000e+00> : vector<2x8xf32>
    %46 = vector.multi_reduction <add>, %45, %cst_21 [2] : vector<2x8x8xf32> to vector<2x8xf32>
    %47 = vector.shape_cast %46 : vector<2x8xf32> to vector<2x8x1xf32>
    %48 = tpu.reciprocal %47 {approx = true} : vector<2x8x1xf32> -> vector<2x8x1xf32>
    %49 = vector.broadcast %48 : vector<2x8x1xf32> to vector<2x8x8xf32>
    %50 = arith.mulf %45, %49 : vector<2x8x8xf32>
    %51 = arith.truncf %50 : vector<2x8x8xf32> to vector<2x8x8xbf16>
    %52 = arith.truncf %35 : vector<2x8x16xf32> to vector<2x8x16xbf16>
    "tpu.trace_start"() <{level = 10 : i32, message = "bqk,bkd->bqd"}> : () -> ()
    %cst_22 = arith.constant dense<0.000000e+00> : vector<2x8x16xf32>
    %53 = tpu.matmul %51, %52, %cst_22 {dimension_numbers = #tpu.dot_dimension_numbers<[2], [1], [1], [2], [0, 0, 0, 1, 1, 2], [0], [0]>} : vector<2x8x8xbf16>, vector<2x8x16xbf16>, vector<2x8x16xf32> -> vector<2x8x16xf32>
    "tpu.trace_stop"() : () -> ()
    %54 = vector.shape_cast %53 : vector<2x8x16xf32> to vector<16x16xf32>
    %55 = vector.extract_strided_slice %17 {offsets = [0, 16], sizes = [16, 16], strides = [1, 1]} : vector<16x64xf32> to vector<16x16xf32>
    %56 = vector.shape_cast %55 : vector<16x16xf32> to vector<2x8x16xf32>
    %57 = vector.extract_strided_slice %23 {offsets = [0, 16], sizes = [16, 16], strides = [1, 1]} : vector<16x64xf32> to vector<16x16xf32>
    %58 = vector.shape_cast %57 : vector<16x16xf32> to vector<2x8x16xf32>
    %59 = vector.extract_strided_slice %29 {offsets = [0, 16], sizes = [16, 16], strides = [1, 1]} : vector<16x64xf32> to vector<16x16xf32>
    %60 = vector.shape_cast %59 : vector<16x16xf32> to vector<2x8x16xf32>
    %61 = arith.truncf %56 : vector<2x8x16xf32> to vector<2x8x16xbf16>
    %62 = arith.truncf %58 : vector<2x8x16xf32> to vector<2x8x16xbf16>
    "tpu.trace_start"() <{level = 10 : i32, message = "bqd,bkd->bqk"}> : () -> ()
    %cst_23 = arith.constant dense<0.000000e+00> : vector<2x8x8xf32>
    %63 = tpu.matmul %61, %62, %cst_23 {dimension_numbers = #tpu.dot_dimension_numbers<[2], [2], [1], [1], [0, 0, 0, 1, 1, 1], [0], [0]>} : vector<2x8x16xbf16>, vector<2x8x16xbf16>, vector<2x8x8xf32> -> vector<2x8x8xf32>
    "tpu.trace_stop"() : () -> ()
    %cst_24 = arith.constant 2.500000e-01 : f32
    %64 = vector.broadcast %cst_24 : f32 to vector<2x8x8xf32>
    %65 = arith.mulf %63, %64 : vector<2x8x8xf32>
    %cst_25 = arith.constant dense<0xFF800000> : vector<2x8xf32>
    %66 = vector.multi_reduction <maximumf>, %65, %cst_25 [2] : vector<2x8x8xf32> to vector<2x8xf32>
    %67 = vector.shape_cast %66 : vector<2x8xf32> to vector<2x8x1xf32>
    %68 = vector.broadcast %67 : vector<2x8x1xf32> to vector<2x8x8xf32>
    %69 = arith.subf %65, %68 : vector<2x8x8xf32>
    %70 = math.exp %69 : vector<2x8x8xf32>
    %cst_26 = arith.constant dense<0.000000e+00> : vector<2x8xf32>
    %71 = vector.multi_reduction <add>, %70, %cst_26 [2] : vector<2x8x8xf32> to vector<2x8xf32>
    %72 = vector.shape_cast %71 : vector<2x8xf32> to vector<2x8x1xf32>
    %73 = tpu.reciprocal %72 {approx = true} : vector<2x8x1xf32> -> vector<2x8x1xf32>
    %74 = vector.broadcast %73 : vector<2x8x1xf32> to vector<2x8x8xf32>
    %75 = arith.mulf %70, %74 : vector<2x8x8xf32>
    %76 = arith.truncf %75 : vector<2x8x8xf32> to vector<2x8x8xbf16>
    %77 = arith.truncf %60 : vector<2x8x16xf32> to vector<2x8x16xbf16>
    "tpu.trace_start"() <{level = 10 : i32, message = "bqk,bkd->bqd"}> : () -> ()
    %cst_27 = arith.constant dense<0.000000e+00> : vector<2x8x16xf32>
    %78 = tpu.matmul %76, %77, %cst_27 {dimension_numbers = #tpu.dot_dimension_numbers<[2], [1], [1], [2], [0, 0, 0, 1, 1, 2], [0], [0]>} : vector<2x8x8xbf16>, vector<2x8x16xbf16>, vector<2x8x16xf32> -> vector<2x8x16xf32>
    "tpu.trace_stop"() : () -> ()
    %79 = vector.shape_cast %78 : vector<2x8x16xf32> to vector<16x16xf32>
    %80 = vector.extract_strided_slice %17 {offsets = [0, 32], sizes = [16, 16], strides = [1, 1]} : vector<16x64xf32> to vector<16x16xf32>
    %81 = vector.shape_cast %80 : vector<16x16xf32> to vector<2x8x16xf32>
    %82 = vector.extract_strided_slice %23 {offsets = [0, 32], sizes = [16, 16], strides = [1, 1]} : vector<16x64xf32> to vector<16x16xf32>
    %83 = vector.shape_cast %82 : vector<16x16xf32> to vector<2x8x16xf32>
    %84 = vector.extract_strided_slice %29 {offsets = [0, 32], sizes = [16, 16], strides = [1, 1]} : vector<16x64xf32> to vector<16x16xf32>
    %85 = vector.shape_cast %84 : vector<16x16xf32> to vector<2x8x16xf32>
    %86 = arith.truncf %81 : vector<2x8x16xf32> to vector<2x8x16xbf16>
    %87 = arith.truncf %83 : vector<2x8x16xf32> to vector<2x8x16xbf16>
    "tpu.trace_start"() <{level = 10 : i32, message = "bqd,bkd->bqk"}> : () -> ()
    %cst_28 = arith.constant dense<0.000000e+00> : vector<2x8x8xf32>
    %88 = tpu.matmul %86, %87, %cst_28 {dimension_numbers = #tpu.dot_dimension_numbers<[2], [2], [1], [1], [0, 0, 0, 1, 1, 1], [0], [0]>} : vector<2x8x16xbf16>, vector<2x8x16xbf16>, vector<2x8x8xf32> -> vector<2x8x8xf32>
    "tpu.trace_stop"() : () -> ()
    %cst_29 = arith.constant 2.500000e-01 : f32
    %89 = vector.broadcast %cst_29 : f32 to vector<2x8x8xf32>
    %90 = arith.mulf %88, %89 : vector<2x8x8xf32>
    %cst_30 = arith.constant dense<0xFF800000> : vector<2x8xf32>
    %91 = vector.multi_reduction <maximumf>, %90, %cst_30 [2] : vector<2x8x8xf32> to vector<2x8xf32>
    %92 = vector.shape_cast %91 : vector<2x8xf32> to vector<2x8x1xf32>
    %93 = vector.broadcast %92 : vector<2x8x1xf32> to vector<2x8x8xf32>
    %94 = arith.subf %90, %93 : vector<2x8x8xf32>
    %95 = math.exp %94 : vector<2x8x8xf32>
    %cst_31 = arith.constant dense<0.000000e+00> : vector<2x8xf32>
    %96 = vector.multi_reduction <add>, %95, %cst_31 [2] : vector<2x8x8xf32> to vector<2x8xf32>
    %97 = vector.shape_cast %96 : vector<2x8xf32> to vector<2x8x1xf32>
    %98 = tpu.reciprocal %97 {approx = true} : vector<2x8x1xf32> -> vector<2x8x1xf32>
    %99 = vector.broadcast %98 : vector<2x8x1xf32> to vector<2x8x8xf32>
    %100 = arith.mulf %95, %99 : vector<2x8x8xf32>
    %101 = arith.truncf %100 : vector<2x8x8xf32> to vector<2x8x8xbf16>
    %102 = arith.truncf %85 : vector<2x8x16xf32> to vector<2x8x16xbf16>
    "tpu.trace_start"() <{level = 10 : i32, message = "bqk,bkd->bqd"}> : () -> ()
    %cst_32 = arith.constant dense<0.000000e+00> : vector<2x8x16xf32>
    %103 = tpu.matmul %101, %102, %cst_32 {dimension_numbers = #tpu.dot_dimension_numbers<[2], [1], [1], [2], [0, 0, 0, 1, 1, 2], [0], [0]>} : vector<2x8x8xbf16>, vector<2x8x16xbf16>, vector<2x8x16xf32> -> vector<2x8x16xf32>
    "tpu.trace_stop"() : () -> ()
    %104 = vector.shape_cast %103 : vector<2x8x16xf32> to vector<16x16xf32>
    %105 = vector.extract_strided_slice %17 {offsets = [0, 48], sizes = [16, 16], strides = [1, 1]} : vector<16x64xf32> to vector<16x16xf32>
    %106 = vector.shape_cast %105 : vector<16x16xf32> to vector<2x8x16xf32>
    %107 = vector.extract_strided_slice %23 {offsets = [0, 48], sizes = [16, 16], strides = [1, 1]} : vector<16x64xf32> to vector<16x16xf32>
    %108 = vector.shape_cast %107 : vector<16x16xf32> to vector<2x8x16xf32>
    %109 = vector.extract_strided_slice %29 {offsets = [0, 48], sizes = [16, 16], strides = [1, 1]} : vector<16x64xf32> to vector<16x16xf32>
    %110 = vector.shape_cast %109 : vector<16x16xf32> to vector<2x8x16xf32>
    %111 = arith.truncf %106 : vector<2x8x16xf32> to vector<2x8x16xbf16>
    %112 = arith.truncf %108 : vector<2x8x16xf32> to vector<2x8x16xbf16>
    "tpu.trace_start"() <{level = 10 : i32, message = "bqd,bkd->bqk"}> : () -> ()
    %cst_33 = arith.constant dense<0.000000e+00> : vector<2x8x8xf32>
    %113 = tpu.matmul %111, %112, %cst_33 {dimension_numbers = #tpu.dot_dimension_numbers<[2], [2], [1], [1], [0, 0, 0, 1, 1, 1], [0], [0]>} : vector<2x8x16xbf16>, vector<2x8x16xbf16>, vector<2x8x8xf32> -> vector<2x8x8xf32>
    "tpu.trace_stop"() : () -> ()
    %cst_34 = arith.constant 2.500000e-01 : f32
    %114 = vector.broadcast %cst_34 : f32 to vector<2x8x8xf32>
    %115 = arith.mulf %113, %114 : vector<2x8x8xf32>
    %cst_35 = arith.constant dense<0xFF800000> : vector<2x8xf32>
    %116 = vector.multi_reduction <maximumf>, %115, %cst_35 [2] : vector<2x8x8xf32> to vector<2x8xf32>
    %117 = vector.shape_cast %116 : vector<2x8xf32> to vector<2x8x1xf32>
    %118 = vector.broadcast %117 : vector<2x8x1xf32> to vector<2x8x8xf32>
    %119 = arith.subf %115, %118 : vector<2x8x8xf32>
    %120 = math.exp %119 : vector<2x8x8xf32>
    %cst_36 = arith.constant dense<0.000000e+00> : vector<2x8xf32>
    %121 = vector.multi_reduction <add>, %120, %cst_36 [2] : vector<2x8x8xf32> to vector<2x8xf32>
    %122 = vector.shape_cast %121 : vector<2x8xf32> to vector<2x8x1xf32>
    %123 = tpu.reciprocal %122 {approx = true} : vector<2x8x1xf32> -> vector<2x8x1xf32>
    %124 = vector.broadcast %123 : vector<2x8x1xf32> to vector<2x8x8xf32>
    %125 = arith.mulf %120, %124 : vector<2x8x8xf32>
    %126 = arith.truncf %125 : vector<2x8x8xf32> to vector<2x8x8xbf16>
    %127 = arith.truncf %110 : vector<2x8x16xf32> to vector<2x8x16xbf16>
    "tpu.trace_start"() <{level = 10 : i32, message = "bqk,bkd->bqd"}> : () -> ()
    %cst_37 = arith.constant dense<0.000000e+00> : vector<2x8x16xf32>
    %128 = tpu.matmul %126, %127, %cst_37 {dimension_numbers = #tpu.dot_dimension_numbers<[2], [1], [1], [2], [0, 0, 0, 1, 1, 2], [0], [0]>} : vector<2x8x8xbf16>, vector<2x8x16xbf16>, vector<2x8x16xf32> -> vector<2x8x16xf32>
    "tpu.trace_stop"() : () -> ()
    %129 = vector.shape_cast %128 : vector<2x8x16xf32> to vector<16x16xf32>
    %130 = tpu.concatenate %54, %79, %104, %129 in 1 : vector<16x16xf32>, vector<16x16xf32>, vector<16x16xf32>, vector<16x16xf32> -> vector<16x64xf32>
    %131 = vector.extract_strided_slice %0 {offsets = [3, 0], sizes = [1, 64], strides = [1, 1]} : vector<18x64xf32> to vector<1x64xf32>
    %132 = arith.truncf %130 : vector<16x64xf32> to vector<16x64xbf16>
    %c0_38 = arith.constant 0 : index
    %c0_39 = arith.constant 0 : index
    %133 = vector.load %arg7[%c0_38, %c0_39] : memref<64x64xbf16, #tpu.memory_space<vmem>>, vector<64x64xbf16>
    %cst_40 = arith.constant dense<0.000000e+00> : vector<16x64xf32>
    %134 = tpu.matmul %132, %133, %cst_40 {dimension_numbers = #tpu.dot_dimension_numbers<[1], [0], [0], [1], [0, 0, 1, 1], [], []>} : vector<16x64xbf16>, vector<64x64xbf16>, vector<16x64xf32> -> vector<16x64xf32>
    %135 = vector.broadcast %131 : vector<1x64xf32> to vector<16x64xf32>
    %136 = arith.addf %134, %135 : vector<16x64xf32>
    %137 = arith.addf %11, %136 : vector<16x64xf32>
    %138 = vector.extract_strided_slice %0 {offsets = [5, 0], sizes = [1, 64], strides = [1, 1]} : vector<18x64xf32> to vector<1x64xf32>
    %139 = vector.extract_strided_slice %0 {offsets = [6, 0], sizes = [1, 64], strides = [1, 1]} : vector<18x64xf32> to vector<1x64xf32>
    %cst_41 = arith.constant dense<0.000000e+00> : vector<16xf32>
    %140 = vector.multi_reduction <add>, %137, %cst_41 [1] : vector<16x64xf32> to vector<16xf32>
    %141 = vector.shape_cast %140 : vector<16xf32> to vector<16x1xf32>
    %cst_42 = arith.constant 6.400000e+01 : f32
    %142 = vector.broadcast %cst_42 : f32 to vector<16x1xf32>
    %143 = arith.divf %141, %142 : vector<16x1xf32>
    %144 = vector.broadcast %143 : vector<16x1xf32> to vector<16x64xf32>
    %145 = arith.subf %137, %144 : vector<16x64xf32>
    %146 = arith.mulf %145, %145 : vector<16x64xf32>
    %cst_43 = arith.constant dense<0.000000e+00> : vector<16xf32>
    %147 = vector.multi_reduction <add>, %146, %cst_43 [1] : vector<16x64xf32> to vector<16xf32>
    %148 = vector.shape_cast %147 : vector<16xf32> to vector<16x1xf32>
    %cst_44 = arith.constant 6.400000e+01 : f32
    %149 = vector.broadcast %cst_44 : f32 to vector<16x1xf32>
    %150 = arith.divf %148, %149 : vector<16x1xf32>
    %cst_45 = arith.constant 9.99999974E-6 : f32
    %151 = vector.broadcast %cst_45 : f32 to vector<16x1xf32>
    %152 = arith.addf %150, %151 : vector<16x1xf32>
    %153 = math.rsqrt %152 : vector<16x1xf32>
    %154 = vector.broadcast %153 : vector<16x1xf32> to vector<16x64xf32>
    %155 = arith.mulf %145, %154 : vector<16x64xf32>
    %156 = vector.broadcast %138 : vector<1x64xf32> to vector<16x64xf32>
    %157 = arith.mulf %155, %156 : vector<16x64xf32>
    %158 = vector.broadcast %139 : vector<1x64xf32> to vector<16x64xf32>
    %159 = arith.addf %157, %158 : vector<16x64xf32>
    %160 = vector.extract_strided_slice %1 {offsets = [0, 0], sizes = [1, 256], strides = [1, 1]} : vector<2x256xf32> to vector<1x256xf32>
    %161 = arith.truncf %159 : vector<16x64xf32> to vector<16x64xbf16>
    %c0_46 = arith.constant 0 : index
    %c0_47 = arith.constant 0 : index
    %162 = vector.load %arg8[%c0_46, %c0_47] : memref<64x256xbf16, #tpu.memory_space<vmem>>, vector<64x256xbf16>
    %cst_48 = arith.constant dense<0.000000e+00> : vector<16x256xf32>
    %163 = tpu.matmul %161, %162, %cst_48 {dimension_numbers = #tpu.dot_dimension_numbers<[1], [0], [0], [1], [0, 0, 1, 1], [], []>} : vector<16x64xbf16>, vector<64x256xbf16>, vector<16x256xf32> -> vector<16x256xf32>
    %164 = vector.broadcast %160 : vector<1x256xf32> to vector<16x256xf32>
    %165 = arith.addf %163, %164 : vector<16x256xf32>
    %cst_49 = arith.constant 0.000000e+00 : f32
    %166 = vector.broadcast %cst_49 : f32 to vector<16x256xf32>
    %167 = arith.maximumf %165, %166 : vector<16x256xf32>
    %168 = vector.extract_strided_slice %0 {offsets = [4, 0], sizes = [1, 64], strides = [1, 1]} : vector<18x64xf32> to vector<1x64xf32>
    %169 = arith.truncf %167 : vector<16x256xf32> to vector<16x256xbf16>
    %c0_50 = arith.constant 0 : index
    %c0_51 = arith.constant 0 : index
    %170 = vector.load %arg9[%c0_50, %c0_51] : memref<256x64xbf16, #tpu.memory_space<vmem>>, vector<256x64xbf16>
    %cst_52 = arith.constant dense<0.000000e+00> : vector<16x64xf32>
    %171 = tpu.matmul %169, %170, %cst_52 {dimension_numbers = #tpu.dot_dimension_numbers<[1], [0], [0], [1], [0, 0, 1, 1], [], []>} : vector<16x256xbf16>, vector<256x64xbf16>, vector<16x64xf32> -> vector<16x64xf32>
    %172 = vector.broadcast %168 : vector<1x64xf32> to vector<16x64xf32>
    %173 = arith.addf %171, %172 : vector<16x64xf32>
    %174 = arith.addf %159, %173 : vector<16x64xf32>
    %175 = vector.extract_strided_slice %0 {offsets = [7, 0], sizes = [1, 64], strides = [1, 1]} : vector<18x64xf32> to vector<1x64xf32>
    %176 = vector.extract_strided_slice %0 {offsets = [8, 0], sizes = [1, 64], strides = [1, 1]} : vector<18x64xf32> to vector<1x64xf32>
    %cst_53 = arith.constant dense<0.000000e+00> : vector<16xf32>
    %177 = vector.multi_reduction <add>, %174, %cst_53 [1] : vector<16x64xf32> to vector<16xf32>
    %178 = vector.shape_cast %177 : vector<16xf32> to vector<16x1xf32>
    %cst_54 = arith.constant 6.400000e+01 : f32
    %179 = vector.broadcast %cst_54 : f32 to vector<16x1xf32>
    %180 = arith.divf %178, %179 : vector<16x1xf32>
    %181 = vector.broadcast %180 : vector<16x1xf32> to vector<16x64xf32>
    %182 = arith.subf %174, %181 : vector<16x64xf32>
    %183 = arith.mulf %182, %182 : vector<16x64xf32>
    %cst_55 = arith.constant dense<0.000000e+00> : vector<16xf32>
    %184 = vector.multi_reduction <add>, %183, %cst_55 [1] : vector<16x64xf32> to vector<16xf32>
    %185 = vector.shape_cast %184 : vector<16xf32> to vector<16x1xf32>
    %cst_56 = arith.constant 6.400000e+01 : f32
    %186 = vector.broadcast %cst_56 : f32 to vector<16x1xf32>
    %187 = arith.divf %185, %186 : vector<16x1xf32>
    %cst_57 = arith.constant 9.99999974E-6 : f32
    %188 = vector.broadcast %cst_57 : f32 to vector<16x1xf32>
    %189 = arith.addf %187, %188 : vector<16x1xf32>
    %190 = math.rsqrt %189 : vector<16x1xf32>
    %191 = vector.broadcast %190 : vector<16x1xf32> to vector<16x64xf32>
    %192 = arith.mulf %182, %191 : vector<16x64xf32>
    %193 = vector.broadcast %175 : vector<1x64xf32> to vector<16x64xf32>
    %194 = arith.mulf %192, %193 : vector<16x64xf32>
    %195 = vector.broadcast %176 : vector<1x64xf32> to vector<16x64xf32>
    %196 = arith.addf %194, %195 : vector<16x64xf32>
    %197 = vector.shape_cast %196 : vector<16x64xf32> to vector<2x8x64xf32>
    %198 = vector.extract_strided_slice %197 {offsets = [0, 7, 0], sizes = [2, 1, 64], strides = [1, 1, 1]} : vector<2x8x64xf32> to vector<2x1x64xf32>
    %199 = vector.shape_cast %198 : vector<2x1x64xf32> to vector<2x64xf32>
    %200 = vector.extract_strided_slice %0 {offsets = [9, 0], sizes = [1, 64], strides = [1, 1]} : vector<18x64xf32> to vector<1x64xf32>
    %201 = arith.truncf %199 : vector<2x64xf32> to vector<2x64xbf16>
    %c0_58 = arith.constant 0 : index
    %c0_59 = arith.constant 0 : index
    %202 = vector.load %arg10[%c0_58, %c0_59] : memref<64x64xbf16, #tpu.memory_space<vmem>>, vector<64x64xbf16>
    %cst_60 = arith.constant dense<0.000000e+00> : vector<2x64xf32>
    %203 = tpu.matmul %201, %202, %cst_60 {dimension_numbers = #tpu.dot_dimension_numbers<[1], [0], [0], [1], [0, 0, 1, 1], [], []>} : vector<2x64xbf16>, vector<64x64xbf16>, vector<2x64xf32> -> vector<2x64xf32>
    %204 = vector.broadcast %200 : vector<1x64xf32> to vector<2x64xf32>
    %205 = arith.addf %203, %204 : vector<2x64xf32>
    %206 = vector.extract_strided_slice %0 {offsets = [10, 0], sizes = [1, 64], strides = [1, 1]} : vector<18x64xf32> to vector<1x64xf32>
    %207 = arith.truncf %196 : vector<16x64xf32> to vector<16x64xbf16>
    %c0_61 = arith.constant 0 : index
    %c0_62 = arith.constant 0 : index
    %208 = vector.load %arg11[%c0_61, %c0_62] : memref<64x64xbf16, #tpu.memory_space<vmem>>, vector<64x64xbf16>
    %cst_63 = arith.constant dense<0.000000e+00> : vector<16x64xf32>
    %209 = tpu.matmul %207, %208, %cst_63 {dimension_numbers = #tpu.dot_dimension_numbers<[1], [0], [0], [1], [0, 0, 1, 1], [], []>} : vector<16x64xbf16>, vector<64x64xbf16>, vector<16x64xf32> -> vector<16x64xf32>
    %210 = vector.broadcast %206 : vector<1x64xf32> to vector<16x64xf32>
    %211 = arith.addf %209, %210 : vector<16x64xf32>
    %212 = vector.extract_strided_slice %0 {offsets = [11, 0], sizes = [1, 64], strides = [1, 1]} : vector<18x64xf32> to vector<1x64xf32>
    %213 = arith.truncf %196 : vector<16x64xf32> to vector<16x64xbf16>
    %c0_64 = arith.constant 0 : index
    %c0_65 = arith.constant 0 : index
    %214 = vector.load %arg12[%c0_64, %c0_65] : memref<64x64xbf16, #tpu.memory_space<vmem>>, vector<64x64xbf16>
    %cst_66 = arith.constant dense<0.000000e+00> : vector<16x64xf32>
    %215 = tpu.matmul %213, %214, %cst_66 {dimension_numbers = #tpu.dot_dimension_numbers<[1], [0], [0], [1], [0, 0, 1, 1], [], []>} : vector<16x64xbf16>, vector<64x64xbf16>, vector<16x64xf32> -> vector<16x64xf32>
    %216 = vector.broadcast %212 : vector<1x64xf32> to vector<16x64xf32>
    %217 = arith.addf %215, %216 : vector<16x64xf32>
    %218 = vector.extract_strided_slice %205 {offsets = [0, 0], sizes = [2, 16], strides = [1, 1]} : vector<2x64xf32> to vector<2x16xf32>
    %219 = vector.shape_cast %218 : vector<2x16xf32> to vector<2x1x16xf32>
    %220 = vector.extract_strided_slice %211 {offsets = [0, 0], sizes = [16, 16], strides = [1, 1]} : vector<16x64xf32> to vector<16x16xf32>
    %221 = vector.shape_cast %220 : vector<16x16xf32> to vector<2x8x16xf32>
    %222 = vector.extract_strided_slice %217 {offsets = [0, 0], sizes = [16, 16], strides = [1, 1]} : vector<16x64xf32> to vector<16x16xf32>
    %223 = vector.shape_cast %222 : vector<16x16xf32> to vector<2x8x16xf32>
    %224 = arith.truncf %219 : vector<2x1x16xf32> to vector<2x1x16xbf16>
    %225 = arith.truncf %221 : vector<2x8x16xf32> to vector<2x8x16xbf16>
    "tpu.trace_start"() <{level = 10 : i32, message = "bqd,bkd->bqk"}> : () -> ()
    %cst_67 = arith.constant dense<0.000000e+00> : vector<2x1x8xf32>
    %226 = tpu.matmul %224, %225, %cst_67 {dimension_numbers = #tpu.dot_dimension_numbers<[2], [2], [1], [1], [0, 0, 0, 1, 1, 1], [0], [0]>} : vector<2x1x16xbf16>, vector<2x8x16xbf16>, vector<2x1x8xf32> -> vector<2x1x8xf32>
    "tpu.trace_stop"() : () -> ()
    %cst_68 = arith.constant 2.500000e-01 : f32
    %227 = vector.broadcast %cst_68 : f32 to vector<2x1x8xf32>
    %228 = arith.mulf %226, %227 : vector<2x1x8xf32>
    %cst_69 = arith.constant dense<0xFF800000> : vector<2x1xf32>
    %229 = vector.multi_reduction <maximumf>, %228, %cst_69 [2] : vector<2x1x8xf32> to vector<2x1xf32>
    %230 = vector.shape_cast %229 : vector<2x1xf32> to vector<2x1x1xf32>
    %231 = vector.broadcast %230 : vector<2x1x1xf32> to vector<2x1x8xf32>
    %232 = arith.subf %228, %231 : vector<2x1x8xf32>
    %233 = math.exp %232 : vector<2x1x8xf32>
    %cst_70 = arith.constant dense<0.000000e+00> : vector<2x1xf32>
    %234 = vector.multi_reduction <add>, %233, %cst_70 [2] : vector<2x1x8xf32> to vector<2x1xf32>
    %235 = vector.shape_cast %234 : vector<2x1xf32> to vector<2x1x1xf32>
    %236 = tpu.reciprocal %235 {approx = true} : vector<2x1x1xf32> -> vector<2x1x1xf32>
    %237 = vector.broadcast %236 : vector<2x1x1xf32> to vector<2x1x8xf32>
    %238 = arith.mulf %233, %237 : vector<2x1x8xf32>
    %239 = arith.truncf %238 : vector<2x1x8xf32> to vector<2x1x8xbf16>
    %240 = arith.truncf %223 : vector<2x8x16xf32> to vector<2x8x16xbf16>
    "tpu.trace_start"() <{level = 10 : i32, message = "bqk,bkd->bqd"}> : () -> ()
    %cst_71 = arith.constant dense<0.000000e+00> : vector<2x1x16xf32>
    %241 = tpu.matmul %239, %240, %cst_71 {dimension_numbers = #tpu.dot_dimension_numbers<[2], [1], [1], [2], [0, 0, 0, 1, 1, 2], [0], [0]>} : vector<2x1x8xbf16>, vector<2x8x16xbf16>, vector<2x1x16xf32> -> vector<2x1x16xf32>
    "tpu.trace_stop"() : () -> ()
    %242 = vector.shape_cast %241 : vector<2x1x16xf32> to vector<2x16xf32>
    %243 = vector.extract_strided_slice %205 {offsets = [0, 16], sizes = [2, 16], strides = [1, 1]} : vector<2x64xf32> to vector<2x16xf32>
    %244 = vector.shape_cast %243 : vector<2x16xf32> to vector<2x1x16xf32>
    %245 = vector.extract_strided_slice %211 {offsets = [0, 16], sizes = [16, 16], strides = [1, 1]} : vector<16x64xf32> to vector<16x16xf32>
    %246 = vector.shape_cast %245 : vector<16x16xf32> to vector<2x8x16xf32>
    %247 = vector.extract_strided_slice %217 {offsets = [0, 16], sizes = [16, 16], strides = [1, 1]} : vector<16x64xf32> to vector<16x16xf32>
    %248 = vector.shape_cast %247 : vector<16x16xf32> to vector<2x8x16xf32>
    %249 = arith.truncf %244 : vector<2x1x16xf32> to vector<2x1x16xbf16>
    %250 = arith.truncf %246 : vector<2x8x16xf32> to vector<2x8x16xbf16>
    "tpu.trace_start"() <{level = 10 : i32, message = "bqd,bkd->bqk"}> : () -> ()
    %cst_72 = arith.constant dense<0.000000e+00> : vector<2x1x8xf32>
    %251 = tpu.matmul %249, %250, %cst_72 {dimension_numbers = #tpu.dot_dimension_numbers<[2], [2], [1], [1], [0, 0, 0, 1, 1, 1], [0], [0]>} : vector<2x1x16xbf16>, vector<2x8x16xbf16>, vector<2x1x8xf32> -> vector<2x1x8xf32>
    "tpu.trace_stop"() : () -> ()
    %cst_73 = arith.constant 2.500000e-01 : f32
    %252 = vector.broadcast %cst_73 : f32 to vector<2x1x8xf32>
    %253 = arith.mulf %251, %252 : vector<2x1x8xf32>
    %cst_74 = arith.constant dense<0xFF800000> : vector<2x1xf32>
    %254 = vector.multi_reduction <maximumf>, %253, %cst_74 [2] : vector<2x1x8xf32> to vector<2x1xf32>
    %255 = vector.shape_cast %254 : vector<2x1xf32> to vector<2x1x1xf32>
    %256 = vector.broadcast %255 : vector<2x1x1xf32> to vector<2x1x8xf32>
    %257 = arith.subf %253, %256 : vector<2x1x8xf32>
    %258 = math.exp %257 : vector<2x1x8xf32>
    %cst_75 = arith.constant dense<0.000000e+00> : vector<2x1xf32>
    %259 = vector.multi_reduction <add>, %258, %cst_75 [2] : vector<2x1x8xf32> to vector<2x1xf32>
    %260 = vector.shape_cast %259 : vector<2x1xf32> to vector<2x1x1xf32>
    %261 = tpu.reciprocal %260 {approx = true} : vector<2x1x1xf32> -> vector<2x1x1xf32>
    %262 = vector.broadcast %261 : vector<2x1x1xf32> to vector<2x1x8xf32>
    %263 = arith.mulf %258, %262 : vector<2x1x8xf32>
    %264 = arith.truncf %263 : vector<2x1x8xf32> to vector<2x1x8xbf16>
    %265 = arith.truncf %248 : vector<2x8x16xf32> to vector<2x8x16xbf16>
    "tpu.trace_start"() <{level = 10 : i32, message = "bqk,bkd->bqd"}> : () -> ()
    %cst_76 = arith.constant dense<0.000000e+00> : vector<2x1x16xf32>
    %266 = tpu.matmul %264, %265, %cst_76 {dimension_numbers = #tpu.dot_dimension_numbers<[2], [1], [1], [2], [0, 0, 0, 1, 1, 2], [0], [0]>} : vector<2x1x8xbf16>, vector<2x8x16xbf16>, vector<2x1x16xf32> -> vector<2x1x16xf32>
    "tpu.trace_stop"() : () -> ()
    %267 = vector.shape_cast %266 : vector<2x1x16xf32> to vector<2x16xf32>
    %268 = vector.extract_strided_slice %205 {offsets = [0, 32], sizes = [2, 16], strides = [1, 1]} : vector<2x64xf32> to vector<2x16xf32>
    %269 = vector.shape_cast %268 : vector<2x16xf32> to vector<2x1x16xf32>
    %270 = vector.extract_strided_slice %211 {offsets = [0, 32], sizes = [16, 16], strides = [1, 1]} : vector<16x64xf32> to vector<16x16xf32>
    %271 = vector.shape_cast %270 : vector<16x16xf32> to vector<2x8x16xf32>
    %272 = vector.extract_strided_slice %217 {offsets = [0, 32], sizes = [16, 16], strides = [1, 1]} : vector<16x64xf32> to vector<16x16xf32>
    %273 = vector.shape_cast %272 : vector<16x16xf32> to vector<2x8x16xf32>
    %274 = arith.truncf %269 : vector<2x1x16xf32> to vector<2x1x16xbf16>
    %275 = arith.truncf %271 : vector<2x8x16xf32> to vector<2x8x16xbf16>
    "tpu.trace_start"() <{level = 10 : i32, message = "bqd,bkd->bqk"}> : () -> ()
    %cst_77 = arith.constant dense<0.000000e+00> : vector<2x1x8xf32>
    %276 = tpu.matmul %274, %275, %cst_77 {dimension_numbers = #tpu.dot_dimension_numbers<[2], [2], [1], [1], [0, 0, 0, 1, 1, 1], [0], [0]>} : vector<2x1x16xbf16>, vector<2x8x16xbf16>, vector<2x1x8xf32> -> vector<2x1x8xf32>
    "tpu.trace_stop"() : () -> ()
    %cst_78 = arith.constant 2.500000e-01 : f32
    %277 = vector.broadcast %cst_78 : f32 to vector<2x1x8xf32>
    %278 = arith.mulf %276, %277 : vector<2x1x8xf32>
    %cst_79 = arith.constant dense<0xFF800000> : vector<2x1xf32>
    %279 = vector.multi_reduction <maximumf>, %278, %cst_79 [2] : vector<2x1x8xf32> to vector<2x1xf32>
    %280 = vector.shape_cast %279 : vector<2x1xf32> to vector<2x1x1xf32>
    %281 = vector.broadcast %280 : vector<2x1x1xf32> to vector<2x1x8xf32>
    %282 = arith.subf %278, %281 : vector<2x1x8xf32>
    %283 = math.exp %282 : vector<2x1x8xf32>
    %cst_80 = arith.constant dense<0.000000e+00> : vector<2x1xf32>
    %284 = vector.multi_reduction <add>, %283, %cst_80 [2] : vector<2x1x8xf32> to vector<2x1xf32>
    %285 = vector.shape_cast %284 : vector<2x1xf32> to vector<2x1x1xf32>
    %286 = tpu.reciprocal %285 {approx = true} : vector<2x1x1xf32> -> vector<2x1x1xf32>
    %287 = vector.broadcast %286 : vector<2x1x1xf32> to vector<2x1x8xf32>
    %288 = arith.mulf %283, %287 : vector<2x1x8xf32>
    %289 = arith.truncf %288 : vector<2x1x8xf32> to vector<2x1x8xbf16>
    %290 = arith.truncf %273 : vector<2x8x16xf32> to vector<2x8x16xbf16>
    "tpu.trace_start"() <{level = 10 : i32, message = "bqk,bkd->bqd"}> : () -> ()
    %cst_81 = arith.constant dense<0.000000e+00> : vector<2x1x16xf32>
    %291 = tpu.matmul %289, %290, %cst_81 {dimension_numbers = #tpu.dot_dimension_numbers<[2], [1], [1], [2], [0, 0, 0, 1, 1, 2], [0], [0]>} : vector<2x1x8xbf16>, vector<2x8x16xbf16>, vector<2x1x16xf32> -> vector<2x1x16xf32>
    "tpu.trace_stop"() : () -> ()
    %292 = vector.shape_cast %291 : vector<2x1x16xf32> to vector<2x16xf32>
    %293 = vector.extract_strided_slice %205 {offsets = [0, 48], sizes = [2, 16], strides = [1, 1]} : vector<2x64xf32> to vector<2x16xf32>
    %294 = vector.shape_cast %293 : vector<2x16xf32> to vector<2x1x16xf32>
    %295 = vector.extract_strided_slice %211 {offsets = [0, 48], sizes = [16, 16], strides = [1, 1]} : vector<16x64xf32> to vector<16x16xf32>
    %296 = vector.shape_cast %295 : vector<16x16xf32> to vector<2x8x16xf32>
    %297 = vector.extract_strided_slice %217 {offsets = [0, 48], sizes = [16, 16], strides = [1, 1]} : vector<16x64xf32> to vector<16x16xf32>
    %298 = vector.shape_cast %297 : vector<16x16xf32> to vector<2x8x16xf32>
    %299 = arith.truncf %294 : vector<2x1x16xf32> to vector<2x1x16xbf16>
    %300 = arith.truncf %296 : vector<2x8x16xf32> to vector<2x8x16xbf16>
    "tpu.trace_start"() <{level = 10 : i32, message = "bqd,bkd->bqk"}> : () -> ()
    %cst_82 = arith.constant dense<0.000000e+00> : vector<2x1x8xf32>
    %301 = tpu.matmul %299, %300, %cst_82 {dimension_numbers = #tpu.dot_dimension_numbers<[2], [2], [1], [1], [0, 0, 0, 1, 1, 1], [0], [0]>} : vector<2x1x16xbf16>, vector<2x8x16xbf16>, vector<2x1x8xf32> -> vector<2x1x8xf32>
    "tpu.trace_stop"() : () -> ()
    %cst_83 = arith.constant 2.500000e-01 : f32
    %302 = vector.broadcast %cst_83 : f32 to vector<2x1x8xf32>
    %303 = arith.mulf %301, %302 : vector<2x1x8xf32>
    %cst_84 = arith.constant dense<0xFF800000> : vector<2x1xf32>
    %304 = vector.multi_reduction <maximumf>, %303, %cst_84 [2] : vector<2x1x8xf32> to vector<2x1xf32>
    %305 = vector.shape_cast %304 : vector<2x1xf32> to vector<2x1x1xf32>
    %306 = vector.broadcast %305 : vector<2x1x1xf32> to vector<2x1x8xf32>
    %307 = arith.subf %303, %306 : vector<2x1x8xf32>
    %308 = math.exp %307 : vector<2x1x8xf32>
    %cst_85 = arith.constant dense<0.000000e+00> : vector<2x1xf32>
    %309 = vector.multi_reduction <add>, %308, %cst_85 [2] : vector<2x1x8xf32> to vector<2x1xf32>
    %310 = vector.shape_cast %309 : vector<2x1xf32> to vector<2x1x1xf32>
    %311 = tpu.reciprocal %310 {approx = true} : vector<2x1x1xf32> -> vector<2x1x1xf32>
    %312 = vector.broadcast %311 : vector<2x1x1xf32> to vector<2x1x8xf32>
    %313 = arith.mulf %308, %312 : vector<2x1x8xf32>
    %314 = arith.truncf %313 : vector<2x1x8xf32> to vector<2x1x8xbf16>
    %315 = arith.truncf %298 : vector<2x8x16xf32> to vector<2x8x16xbf16>
    "tpu.trace_start"() <{level = 10 : i32, message = "bqk,bkd->bqd"}> : () -> ()
    %cst_86 = arith.constant dense<0.000000e+00> : vector<2x1x16xf32>
    %316 = tpu.matmul %314, %315, %cst_86 {dimension_numbers = #tpu.dot_dimension_numbers<[2], [1], [1], [2], [0, 0, 0, 1, 1, 2], [0], [0]>} : vector<2x1x8xbf16>, vector<2x8x16xbf16>, vector<2x1x16xf32> -> vector<2x1x16xf32>
    "tpu.trace_stop"() : () -> ()
    %317 = vector.shape_cast %316 : vector<2x1x16xf32> to vector<2x16xf32>
    %318 = tpu.concatenate %242, %267, %292, %317 in 1 : vector<2x16xf32>, vector<2x16xf32>, vector<2x16xf32>, vector<2x16xf32> -> vector<2x64xf32>
    %319 = vector.extract_strided_slice %0 {offsets = [12, 0], sizes = [1, 64], strides = [1, 1]} : vector<18x64xf32> to vector<1x64xf32>
    %320 = arith.truncf %318 : vector<2x64xf32> to vector<2x64xbf16>
    %c0_87 = arith.constant 0 : index
    %c0_88 = arith.constant 0 : index
    %321 = vector.load %arg13[%c0_87, %c0_88] : memref<64x64xbf16, #tpu.memory_space<vmem>>, vector<64x64xbf16>
    %cst_89 = arith.constant dense<0.000000e+00> : vector<2x64xf32>
    %322 = tpu.matmul %320, %321, %cst_89 {dimension_numbers = #tpu.dot_dimension_numbers<[1], [0], [0], [1], [0, 0, 1, 1], [], []>} : vector<2x64xbf16>, vector<64x64xbf16>, vector<2x64xf32> -> vector<2x64xf32>
    %323 = vector.broadcast %319 : vector<1x64xf32> to vector<2x64xf32>
    %324 = arith.addf %322, %323 : vector<2x64xf32>
    %325 = arith.addf %199, %324 : vector<2x64xf32>
    %326 = vector.extract_strided_slice %0 {offsets = [14, 0], sizes = [1, 64], strides = [1, 1]} : vector<18x64xf32> to vector<1x64xf32>
    %327 = vector.extract_strided_slice %0 {offsets = [15, 0], sizes = [1, 64], strides = [1, 1]} : vector<18x64xf32> to vector<1x64xf32>
    %cst_90 = arith.constant dense<0.000000e+00> : vector<2xf32>
    %328 = vector.multi_reduction <add>, %325, %cst_90 [1] : vector<2x64xf32> to vector<2xf32>
    %329 = vector.shape_cast %328 : vector<2xf32> to vector<2x1xf32>
    %cst_91 = arith.constant 6.400000e+01 : f32
    %330 = vector.broadcast %cst_91 : f32 to vector<2x1xf32>
    %331 = arith.divf %329, %330 : vector<2x1xf32>
    %332 = vector.broadcast %331 : vector<2x1xf32> to vector<2x64xf32>
    %333 = arith.subf %325, %332 : vector<2x64xf32>
    %334 = arith.mulf %333, %333 : vector<2x64xf32>
    %cst_92 = arith.constant dense<0.000000e+00> : vector<2xf32>
    %335 = vector.multi_reduction <add>, %334, %cst_92 [1] : vector<2x64xf32> to vector<2xf32>
    %336 = vector.shape_cast %335 : vector<2xf32> to vector<2x1xf32>
    %cst_93 = arith.constant 6.400000e+01 : f32
    %337 = vector.broadcast %cst_93 : f32 to vector<2x1xf32>
    %338 = arith.divf %336, %337 : vector<2x1xf32>
    %cst_94 = arith.constant 9.99999974E-6 : f32
    %339 = vector.broadcast %cst_94 : f32 to vector<2x1xf32>
    %340 = arith.addf %338, %339 : vector<2x1xf32>
    %341 = math.rsqrt %340 : vector<2x1xf32>
    %342 = vector.broadcast %341 : vector<2x1xf32> to vector<2x64xf32>
    %343 = arith.mulf %333, %342 : vector<2x64xf32>
    %344 = vector.broadcast %326 : vector<1x64xf32> to vector<2x64xf32>
    %345 = arith.mulf %343, %344 : vector<2x64xf32>
    %346 = vector.broadcast %327 : vector<1x64xf32> to vector<2x64xf32>
    %347 = arith.addf %345, %346 : vector<2x64xf32>
    %348 = vector.extract_strided_slice %1 {offsets = [1, 0], sizes = [1, 256], strides = [1, 1]} : vector<2x256xf32> to vector<1x256xf32>
    %349 = arith.truncf %347 : vector<2x64xf32> to vector<2x64xbf16>
    %c0_95 = arith.constant 0 : index
    %c0_96 = arith.constant 0 : index
    %350 = vector.load %arg14[%c0_95, %c0_96] : memref<64x256xbf16, #tpu.memory_space<vmem>>, vector<64x256xbf16>
    %cst_97 = arith.constant dense<0.000000e+00> : vector<2x256xf32>
    %351 = tpu.matmul %349, %350, %cst_97 {dimension_numbers = #tpu.dot_dimension_numbers<[1], [0], [0], [1], [0, 0, 1, 1], [], []>} : vector<2x64xbf16>, vector<64x256xbf16>, vector<2x256xf32> -> vector<2x256xf32>
    %352 = vector.broadcast %348 : vector<1x256xf32> to vector<2x256xf32>
    %353 = arith.addf %351, %352 : vector<2x256xf32>
    %cst_98 = arith.constant 0.000000e+00 : f32
    %354 = vector.broadcast %cst_98 : f32 to vector<2x256xf32>
    %355 = arith.maximumf %353, %354 : vector<2x256xf32>
    %356 = vector.extract_strided_slice %0 {offsets = [13, 0], sizes = [1, 64], strides = [1, 1]} : vector<18x64xf32> to vector<1x64xf32>
    %357 = arith.truncf %355 : vector<2x256xf32> to vector<2x256xbf16>
    %c0_99 = arith.constant 0 : index
    %c0_100 = arith.constant 0 : index
    %358 = vector.load %arg15[%c0_99, %c0_100] : memref<256x64xbf16, #tpu.memory_space<vmem>>, vector<256x64xbf16>
    %cst_101 = arith.constant dense<0.000000e+00> : vector<2x64xf32>
    %359 = tpu.matmul %357, %358, %cst_101 {dimension_numbers = #tpu.dot_dimension_numbers<[1], [0], [0], [1], [0, 0, 1, 1], [], []>} : vector<2x256xbf16>, vector<256x64xbf16>, vector<2x64xf32> -> vector<2x64xf32>
    %360 = vector.broadcast %356 : vector<1x64xf32> to vector<2x64xf32>
    %361 = arith.addf %359, %360 : vector<2x64xf32>
    %362 = arith.addf %347, %361 : vector<2x64xf32>
    %363 = vector.extract_strided_slice %0 {offsets = [16, 0], sizes = [1, 64], strides = [1, 1]} : vector<18x64xf32> to vector<1x64xf32>
    %364 = vector.extract_strided_slice %0 {offsets = [17, 0], sizes = [1, 64], strides = [1, 1]} : vector<18x64xf32> to vector<1x64xf32>
    %cst_102 = arith.constant dense<0.000000e+00> : vector<2xf32>
    %365 = vector.multi_reduction <add>, %362, %cst_102 [1] : vector<2x64xf32> to vector<2xf32>
    %366 = vector.shape_cast %365 : vector<2xf32> to vector<2x1xf32>
    %cst_103 = arith.constant 6.400000e+01 : f32
    %367 = vector.broadcast %cst_103 : f32 to vector<2x1xf32>
    %368 = arith.divf %366, %367 : vector<2x1xf32>
    %369 = vector.broadcast %368 : vector<2x1xf32> to vector<2x64xf32>
    %370 = arith.subf %362, %369 : vector<2x64xf32>
    %371 = arith.mulf %370, %370 : vector<2x64xf32>
    %cst_104 = arith.constant dense<0.000000e+00> : vector<2xf32>
    %372 = vector.multi_reduction <add>, %371, %cst_104 [1] : vector<2x64xf32> to vector<2xf32>
    %373 = vector.shape_cast %372 : vector<2xf32> to vector<2x1xf32>
    %cst_105 = arith.constant 6.400000e+01 : f32
    %374 = vector.broadcast %cst_105 : f32 to vector<2x1xf32>
    %375 = arith.divf %373, %374 : vector<2x1xf32>
    %cst_106 = arith.constant 9.99999974E-6 : f32
    %376 = vector.broadcast %cst_106 : f32 to vector<2x1xf32>
    %377 = arith.addf %375, %376 : vector<2x1xf32>
    %378 = math.rsqrt %377 : vector<2x1xf32>
    %379 = vector.broadcast %378 : vector<2x1xf32> to vector<2x64xf32>
    %380 = arith.mulf %370, %379 : vector<2x64xf32>
    %381 = vector.broadcast %363 : vector<1x64xf32> to vector<2x64xf32>
    %382 = arith.mulf %380, %381 : vector<2x64xf32>
    %383 = vector.broadcast %364 : vector<1x64xf32> to vector<2x64xf32>
    %384 = arith.addf %382, %383 : vector<2x64xf32>
    %c0_107 = arith.constant 0 : index
    %c0_108 = arith.constant 0 : index
    %385 = vector.load %arg18[%c0_107, %c0_108] : memref<65x1xf32, #tpu.memory_space<vmem>>, vector<65x1xf32>
    %386 = vector.extract_strided_slice %385 {offsets = [0, 0], sizes = [64, 1], strides = [1, 1]} : vector<65x1xf32> to vector<64x1xf32>
    %cst_109 = arith.constant dense<0.000000e+00> : vector<2x1xf32>
    %387 = tpu.matmul %384, %386, %cst_109 {dimension_numbers = #tpu.dot_dimension_numbers<[1], [0], [0], [1], [0, 0, 1, 1], [], []>} : vector<2x64xf32>, vector<64x1xf32>, vector<2x1xf32> -> vector<2x1xf32>
    %388 = vector.extract_strided_slice %385 {offsets = [64, 0], sizes = [1, 1], strides = [1, 1]} : vector<65x1xf32> to vector<1x1xf32>
    %389 = vector.broadcast %388 : vector<1x1xf32> to vector<2x1xf32>
    %390 = arith.addf %387, %389 : vector<2x1xf32>
    %c0_110 = arith.constant 0 : index
    %c0_111 = arith.constant 0 : index
    %391 = vector.load %arg19[%c0_110, %c0_111] : memref<2x1xf32, #tpu.memory_space<vmem>>, vector<2x1xf32>
    tpu.vector_store %arg19[%c0_110, %c0_111], %390 {strides = array<i32>} : memref<2x1xf32, #tpu.memory_space<vmem>>, vector<2x1xf32>,
    return
  }
  func.func @transform_0(%arg0: i32) -> (i32, i32) {
    %c0_i32 = arith.constant 0 : i32
    %c0_i32_0 = arith.constant 0 : i32
    return %arg0, %c0_i32 : i32, i32
  }
  func.func @transform_1(%arg0: i32) -> (i32, i32) {
    %c0_i32 = arith.constant 0 : i32
    %c0_i32_0 = arith.constant 0 : i32
    %c0_i32_1 = arith.constant 0 : i32
    return %c0_i32, %c0_i32_0 : i32, i32
  }
  func.func @transform_2(%arg0: i32) -> (i32, i32) {
    %c0_i32 = arith.constant 0 : i32
    %c0_i32_0 = arith.constant 0 : i32
    %c0_i32_1 = arith.constant 0 : i32
    return %c0_i32, %c0_i32_0 : i32, i32
  }
  func.func @transform_3(%arg0: i32) -> (i32, i32) {
    %c0_i32 = arith.constant 0 : i32
    %c0_i32_0 = arith.constant 0 : i32
    %c0_i32_1 = arith.constant 0 : i32
    return %c0_i32, %c0_i32_0 : i32, i32
  }
  func.func @transform_4(%arg0: i32) -> (i32, i32) {
    %c0_i32 = arith.constant 0 : i32
    %c0_i32_0 = arith.constant 0 : i32
    %c0_i32_1 = arith.constant 0 : i32
    return %c0_i32, %c0_i32_0 : i32, i32
  }
  func.func @transform_5(%arg0: i32) -> (i32, i32) {
    %c0_i32 = arith.constant 0 : i32
    %c0_i32_0 = arith.constant 0 : i32
    %c0_i32_1 = arith.constant 0 : i32
    return %c0_i32, %c0_i32_0 : i32, i32
  }
  func.func @transform_6(%arg0: i32) -> (i32, i32) {
    %c0_i32 = arith.constant 0 : i32
    %c0_i32_0 = arith.constant 0 : i32
    %c0_i32_1 = arith.constant 0 : i32
    return %c0_i32, %c0_i32_0 : i32, i32
  }
  func.func @transform_7(%arg0: i32) -> (i32, i32) {
    %c0_i32 = arith.constant 0 : i32
    %c0_i32_0 = arith.constant 0 : i32
    %c0_i32_1 = arith.constant 0 : i32
    return %c0_i32, %c0_i32_0 : i32, i32
  }
  func.func @transform_8(%arg0: i32) -> (i32, i32) {
    %c0_i32 = arith.constant 0 : i32
    %c0_i32_0 = arith.constant 0 : i32
    %c0_i32_1 = arith.constant 0 : i32
    return %c0_i32, %c0_i32_0 : i32, i32
  }
  func.func @transform_9(%arg0: i32) -> (i32, i32) {
    %c0_i32 = arith.constant 0 : i32
    %c0_i32_0 = arith.constant 0 : i32
    %c0_i32_1 = arith.constant 0 : i32
    return %c0_i32, %c0_i32_0 : i32, i32
  }
  func.func @transform_10(%arg0: i32) -> (i32, i32) {
    %c0_i32 = arith.constant 0 : i32
    %c0_i32_0 = arith.constant 0 : i32
    %c0_i32_1 = arith.constant 0 : i32
    return %c0_i32, %c0_i32_0 : i32, i32
  }
  func.func @transform_11(%arg0: i32) -> (i32, i32) {
    %c0_i32 = arith.constant 0 : i32
    %c0_i32_0 = arith.constant 0 : i32
    %c0_i32_1 = arith.constant 0 : i32
    return %c0_i32, %c0_i32_0 : i32, i32
  }
  func.func @transform_12(%arg0: i32) -> (i32, i32) {
    %c0_i32 = arith.constant 0 : i32
    %c0_i32_0 = arith.constant 0 : i32
    %c0_i32_1 = arith.constant 0 : i32
    return %c0_i32, %c0_i32_0 : i32, i32
  }
  func.func @transform_13(%arg0: i32) -> (i32, i32) {
    %c0_i32 = arith.constant 0 : i32
    %c0_i32_0 = arith.constant 0 : i32
    %c0_i32_1 = arith.constant 0 : i32
    return %c0_i32, %c0_i32_0 : i32, i32
  }
  func.func @transform_14(%arg0: i32) -> (i32, i32) {
    %c0_i32 = arith.constant 0 : i32
    %c0_i32_0 = arith.constant 0 : i32
    %c0_i32_1 = arith.constant 0 : i32
    return %c0_i32, %c0_i32_0 : i32, i32
  }
  func.func @transform_15(%arg0: i32) -> (i32, i32) {
    %c0_i32 = arith.constant 0 : i32
    %c0_i32_0 = arith.constant 0 : i32
    %c0_i32_1 = arith.constant 0 : i32
    return %c0_i32, %c0_i32_0 : i32, i32
  }
  func.func @transform_16(%arg0: i32) -> (i32, i32) {
    %c0_i32 = arith.constant 0 : i32
    %c0_i32_0 = arith.constant 0 : i32
    %c0_i32_1 = arith.constant 0 : i32
    return %c0_i32, %c0_i32_0 : i32, i32
  }
  func.func @transform_17(%arg0: i32) -> (i32, i32) {
    %c0_i32 = arith.constant 0 : i32
    %c0_i32_0 = arith.constant 0 : i32
    %c0_i32_1 = arith.constant 0 : i32
    return %c0_i32, %c0_i32_0 : i32, i32
  }
  func.func @transform_18(%arg0: i32) -> (i32, i32) {
    %c0_i32 = arith.constant 0 : i32
    %c0_i32_0 = arith.constant 0 : i32
    return %arg0, %c0_i32 : i32, i32
  }
}

</mosaic_0001>

<llo_original>
// kernel: basic_transformer_forward.1
$region0: #{basic_transformer_forward.1}
  #allocation0 [shape = 'u32[]', space=smem, size = 0x4, offset = 0x4, fixed_abs, tag = 'smem constant byte address 0x4 - core index']
  #allocation1 [shape = 'u32[144,128]{1,0:T(1,128)}', space=vmem, size = 0x12000, scoped, tag = 'internal scratch']
  %s0 = inlined_call_operand.hbm [shape: f32[16,24], index: 0, kind: input, shape index: {}]
  %s1 = inlined_call_operand.vmem [shape: f32[8,64], index: 1, kind: input, shape index: {}]
  %s2 = inlined_call_operand.vmem [shape: bf16[24,64], index: 2, kind: input, shape index: {}]
  %s3 = inlined_call_operand.vmem [shape: bf16[64,64], index: 3, kind: input, shape index: {}]
  %s4 = inlined_call_operand.vmem [shape: bf16[64,64], index: 4, kind: input, shape index: {}]
  %s5 = inlined_call_operand.vmem [shape: bf16[64,64], index: 5, kind: input, shape index: {}]
  %s6 = inlined_call_operand.vmem [shape: bf16[64,64], index: 6, kind: input, shape index: {}]
  %s7 = inlined_call_operand.vmem [shape: bf16[64,256], index: 7, kind: input, shape index: {}]
  %s8 = inlined_call_operand.vmem [shape: bf16[256,64], index: 8, kind: input, shape index: {}]
  %s9 = inlined_call_operand.vmem [shape: bf16[64,64], index: 9, kind: input, shape index: {}]
  %s10 = inlined_call_operand.vmem [shape: bf16[64,64], index: 10, kind: input, shape index: {}]
  %s11 = inlined_call_operand.vmem [shape: bf16[64,64], index: 11, kind: input, shape index: {}]
  %s12 = inlined_call_operand.hbm [shape: bf16[64,64], index: 12, kind: input, shape index: {}]
  %s13 = inlined_call_operand.vmem [shape: bf16[64,256], index: 13, kind: input, shape index: {}]
  %s14 = inlined_call_operand.vmem [shape: bf16[256,64], index: 14, kind: input, shape index: {}]
  %s15 = inlined_call_operand.hbm [shape: f32[18,64], index: 15, kind: input, shape index: {}]
  %s16 = inlined_call_operand.hbm [shape: f32[2,256], index: 16, kind: input, shape index: {}]
  %s17 = inlined_call_operand.vmem [shape: f32[65,1], index: 17, kind: input, shape index: {}]
  %s18 = inlined_call_operand.vmem [shape: f32[2,1], index: 18, kind: output, shape index: {}]
  %s19 = sld [smem:[#allocation0]]
  $region98: #{basic_transformer_forward.1} parent=0
    _
  %s21 = ssub.s32 1, %s19
  %s22 = scalar_select 0, %s21, %s19
  $region1: #{basic_transformer_forward.1} parent=0
    #allocation2 [shape = 'u8[8192]{0}', space=vmem, size = 0x2000, scoped, tag = 'input window, operand 0, single buffered']
    #allocation3 [shape = 's32[1]{0}', space=sflag, size = 0x4, scoped, tag = 'scoped memory for basic_transformer_forward.1']
    #allocation4 [shape = 'u8[16384]{0}', space=vmem, size = 0x4000, scoped, tag = 'input window, operand 12, single buffered']
    #allocation5 [shape = 's32[1]{0}', space=sflag, size = 0x4, scoped, tag = 'scoped memory for basic_transformer_forward.1']
    #allocation6 [shape = 'u8[12288]{0}', space=vmem, size = 0x3000, scoped, tag = 'input window, operand 15, single buffered']
    #allocation7 [shape = 'u8[2048]{0}', space=vmem, size = 0x800, scoped, tag = 'input window, operand 16, single buffered']
    #allocation8 [shape = 's32[1]{0}', space=sflag, size = 0x4, scoped, tag = 'scoped memory for basic_transformer_forward.1']
    %23 = vsyncpa [#allocation3], 0
    %24 = vsyncpa [#allocation5], 0
    %25 = vsyncpa [#allocation8], 0
    // Predicated region
    $region2: #{basic_transformer_forward.1} parent=1 // pred_check
      _
    $region3: #{basic_transformer_forward.1} parent=1 // pred_check_branch
      %27 = sbr.rel (0) target = $region5
    $region4: #{basic_transformer_forward.1} parent=1 // pred_region
      %s29 = ssub.s32 256, 256
      %30 = vsyncadd [#allocation3], %s29
      %s31 = sshll.u32 [#allocation2], 4
      %s32 = int_to_ptr.vmem [resolvable:$true] %s31
      %37 = dma.hbm_to_vmem [thread:$0]  %s0, 256, %s32, [#allocation3], 128, 128, 8
    $region5: #{basic_transformer_forward.1} parent=1 // pred_fallthru
      _
    // Predicated region
    $region6: #{basic_transformer_forward.1} parent=1 // pred_check
      _
    $region7: #{basic_transformer_forward.1} parent=1 // pred_check_branch
      %39 = sbr.rel (0) target = $region9
    $region8: #{basic_transformer_forward.1} parent=1 // pred_region
      _
    $region9: #{basic_transformer_forward.1} parent=1 // pred_fallthru
      _
    // Predicated region
    $region10: #{basic_transformer_forward.1} parent=1 // pred_check
      _
    $region11: #{basic_transformer_forward.1} parent=1 // pred_check_branch
      %41 = sbr.rel (0) target = $region13
    $region12: #{basic_transformer_forward.1} parent=1 // pred_region
      _
    $region13: #{basic_transformer_forward.1} parent=1 // pred_fallthru
      _
    // Predicated region
    $region14: #{basic_transformer_forward.1} parent=1 // pred_check
      _
    $region15: #{basic_transformer_forward.1} parent=1 // pred_check_branch
      %43 = sbr.rel (0) target = $region17
    $region16: #{basic_transformer_forward.1} parent=1 // pred_region
      _
    $region17: #{basic_transformer_forward.1} parent=1 // pred_fallthru
      _
    // Predicated region
    $region18: #{basic_transformer_forward.1} parent=1 // pred_check
      _
    $region19: #{basic_transformer_forward.1} parent=1 // pred_check_branch
      %45 = sbr.rel (0) target = $region21
    $region20: #{basic_transformer_forward.1} parent=1 // pred_region
      _
    $region21: #{basic_transformer_forward.1} parent=1 // pred_fallthru
      _
    // Predicated region
    $region22: #{basic_transformer_forward.1} parent=1 // pred_check
      _
    $region23: #{basic_transformer_forward.1} parent=1 // pred_check_branch
      %47 = sbr.rel (0) target = $region25
    $region24: #{basic_transformer_forward.1} parent=1 // pred_region
      _
    $region25: #{basic_transformer_forward.1} parent=1 // pred_fallthru
      _
    // Predicated region
    $region26: #{basic_transformer_forward.1} parent=1 // pred_check
      _
    $region27: #{basic_transformer_forward.1} parent=1 // pred_check_branch
      %49 = sbr.rel (0) target = $region29
    $region28: #{basic_transformer_forward.1} parent=1 // pred_region
      _
    $region29: #{basic_transformer_forward.1} parent=1 // pred_fallthru
      _
    // Predicated region
    $region30: #{basic_transformer_forward.1} parent=1 // pred_check
      _
    $region31: #{basic_transformer_forward.1} parent=1 // pred_check_branch
      %51 = sbr.rel (0) target = $region33
    $region32: #{basic_transformer_forward.1} parent=1 // pred_region
      _
    $region33: #{basic_transformer_forward.1} parent=1 // pred_fallthru
      _
    // Predicated region
    $region34: #{basic_transformer_forward.1} parent=1 // pred_check
      _
    $region35: #{basic_transformer_forward.1} parent=1 // pred_check_branch
      %53 = sbr.rel (0) target = $region37
    $region36: #{basic_transformer_forward.1} parent=1 // pred_region
      _
    $region37: #{basic_transformer_forward.1} parent=1 // pred_fallthru
      _
    // Predicated region
    $region38: #{basic_transformer_forward.1} parent=1 // pred_check
      _
    $region39: #{basic_transformer_forward.1} parent=1 // pred_check_branch
      %55 = sbr.rel (0) target = $region41
    $region40: #{basic_transformer_forward.1} parent=1 // pred_region
      _
    $region41: #{basic_transformer_forward.1} parent=1 // pred_fallthru
      _
    // Predicated region
    $region42: #{basic_transformer_forward.1} parent=1 // pred_check
      _
    $region43: #{basic_transformer_forward.1} parent=1 // pred_check_branch
      %57 = sbr.rel (0) target = $region45
    $region44: #{basic_transformer_forward.1} parent=1 // pred_region
      _
    $region45: #{basic_transformer_forward.1} parent=1 // pred_fallthru
      _
    // Predicated region
    $region46: #{basic_transformer_forward.1} parent=1 // pred_check
      _
    $region47: #{basic_transformer_forward.1} parent=1 // pred_check_branch
      %59 = sbr.rel (0) target = $region49
    $region48: #{basic_transformer_forward.1} parent=1 // pred_region
      _
    $region49: #{basic_transformer_forward.1} parent=1 // pred_fallthru
      _
    // Predicated region
    $region50: #{basic_transformer_forward.1} parent=1 // pred_check
      _
    $region51: #{basic_transformer_forward.1} parent=1 // pred_check_branch
      %61 = sbr.rel (0) target = $region53
    $region52: #{basic_transformer_forward.1} parent=1 // pred_region
      %s63 = ssub.s32 512, 512
      %64 = vsyncadd [#allocation5], %s63
      %s65 = sshll.u32 [#allocation4], 4
      %s66 = int_to_ptr.vmem [resolvable:$true] %s65
      %71 = dma.hbm_to_vmem [thread:$0]  %s12, 512, %s66, [#allocation5], 64, 64, 4
    $region53: #{basic_transformer_forward.1} parent=1 // pred_fallthru
      _
    // Predicated region
    $region54: #{basic_transformer_forward.1} parent=1 // pred_check
      _
    $region55: #{basic_transformer_forward.1} parent=1 // pred_check_branch
      %73 = sbr.rel (0) target = $region57
    $region56: #{basic_transformer_forward.1} parent=1 // pred_region
      _
    $region57: #{basic_transformer_forward.1} parent=1 // pred_fallthru
      _
    // Predicated region
    $region58: #{basic_transformer_forward.1} parent=1 // pred_check
      _
    $region59: #{basic_transformer_forward.1} parent=1 // pred_check_branch
      %75 = sbr.rel (0) target = $region61
    $region60: #{basic_transformer_forward.1} parent=1 // pred_region
      _
    $region61: #{basic_transformer_forward.1} parent=1 // pred_fallthru
      _
    // Predicated region
    $region62: #{basic_transformer_forward.1} parent=1 // pred_check
      _
    $region63: #{basic_transformer_forward.1} parent=1 // pred_check_branch
      %77 = sbr.rel (0) target = $region65
    $region64: #{basic_transformer_forward.1} parent=1 // pred_region
      %s79 = ssub.s32 384, 384
      %80 = vsyncadd [#allocation5], %s79
      %s81 = sshll.u32 [#allocation6], 4
      %s82 = int_to_ptr.vmem [resolvable:$true] %s81
      %87 = dma.hbm_to_vmem [thread:$0]  %s15, 384, %s82, [#allocation5], 128, 128, 8
    $region65: #{basic_transformer_forward.1} parent=1 // pred_fallthru
      _
    // Predicated region
    $region66: #{basic_transformer_forward.1} parent=1 // pred_check
      _
    $region67: #{basic_transformer_forward.1} parent=1 // pred_check_branch
      %89 = sbr.rel (0) target = $region69
    $region68: #{basic_transformer_forward.1} parent=1 // pred_region
      %s91 = ssub.s32 64, 64
      %92 = vsyncadd [#allocation8], %s91
      %s94 = sshll.u32 [#allocation7], 4
      %s95 = int_to_ptr.vmem [resolvable:$true] %s94
      %97 = dma.hbm_to_vmem [thread:$0]  %s16, 64, %s95, [#allocation8]
    $region69: #{basic_transformer_forward.1} parent=1 // pred_fallthru
      _
    // Predicated region
    $region70: #{basic_transformer_forward.1} parent=1 // pred_check
      _
    $region71: #{basic_transformer_forward.1} parent=1 // pred_check_branch
      %99 = sbr.rel (0) target = $region73
    $region72: #{basic_transformer_forward.1} parent=1 // pred_region
      _
    $region73: #{basic_transformer_forward.1} parent=1 // pred_fallthru
      _
    // Predicated region
    $region74: #{basic_transformer_forward.1} parent=1 // pred_check
      _
    $region75: #{basic_transformer_forward.1} parent=1 // pred_check_branch
      %101 = sbr.rel (0) target = $region77
    $region76: #{basic_transformer_forward.1} parent=1 // pred_region
      %102 = dma.done [#allocation3], 256
    $region77: #{basic_transformer_forward.1} parent=1 // pred_fallthru
      _
    // Predicated region
    $region78: #{basic_transformer_forward.1} parent=1 // pred_check
      _
    $region79: #{basic_transformer_forward.1} parent=1 // pred_check_branch
      %104 = sbr.rel (0) target = $region81
    $region80: #{basic_transformer_forward.1} parent=1 // pred_region
      %105 = dma.done [#allocation5], 512
    $region81: #{basic_transformer_forward.1} parent=1 // pred_fallthru
      _
    // Predicated region
    $region82: #{basic_transformer_forward.1} parent=1 // pred_check
      _
    $region83: #{basic_transformer_forward.1} parent=1 // pred_check_branch
      %107 = sbr.rel (0) target = $region85
    $region84: #{basic_transformer_forward.1} parent=1 // pred_region
      %108 = dma.done [#allocation5], 384
    $region85: #{basic_transformer_forward.1} parent=1 // pred_fallthru
      _
    // Predicated region
    $region86: #{basic_transformer_forward.1} parent=1 // pred_check
      _
    $region87: #{basic_transformer_forward.1} parent=1 // pred_check_branch
      %110 = sbr.rel (0) target = $region89
    $region88: #{basic_transformer_forward.1} parent=1 // pred_region
      %111 = dma.done [#allocation8], 64
    $region89: #{basic_transformer_forward.1} parent=1 // pred_fallthru
      _
    %v113 = vld [vmem:[#allocation6] sm:$0xff]
    %v114 = vld [vmem:[#allocation6 + $0x8] sm:$0xff]
    %v115 = vld [vmem:[#allocation6 + $0x10] sm:$0x3]
    %v116 = vld [vmem:[#allocation7] sm:$0xf]
    %v117 = vld [vmem:[#allocation2] sm:$0xff]
    %v118 = vld [vmem:[#allocation2 + $0x8] sm:$0xff]
    %v119 = vpack.c.bf16 %v118, %v117
    %v120 = vld [vmem:[%s2] sm:$0xf]
    %v121 = vld [vmem:[%s2 + $0x4] sm:$0xf]
    %v122 = vld [vmem:[%s2 + $0x8] sm:$0xf]
    %v126 = vunpack.c.l.b16 %v120
    %v127 = vunpack.c.l.b16 %v121
    %v128 = vunpack.c.l.b16 %v122
    %v129 = vpack.c.b16 %v127, %v126
    %v130 = vpack.c.b16 %v128, %v128
    %vm132 = vcmask 195584
    %v134 = vsel %vm132, %v119, 0
    %vm136 = vcmask 1043456
    %v138 = vsel %vm136, %v130, 0
    %140 = vmatprep.subr.bf16.mxu0 0
    %141 = vmatpush1.bf16.msra.mxu0 %v129
    %142 = vmatprep.subr.bf16.mxu0 0
    %143 = vmatpush1.bf16.msra.mxu0 %v138
    %144 = vmatprep.subr.bf16.mxu0 0
    %145 = vmatpush1.bf16.msra.mxu0 0
    %146 = vmatprep.subr.bf16.mxu0 0
    %147 = vmatpush1.bf16.msra.mxu0 0
    %148 = vmatprep.subr.bf16.mxu0 0
    %149 = vmatpush1.bf16.msra.mxu0 0
    %150 = vmatprep.subr.bf16.mxu0 0
    %151 = vmatpush1.bf16.msra.mxu0 0
    %152 = vmatprep.subr.bf16.mxu0 0
    %153 = vmatpush1.bf16.msra.mxu0 0
    %154 = vmatprep.subr.bf16.mxu0 0
    %155 = vmatpush1.bf16.msra.mxu0 0
    %156 = vmatprep.subr.bf16.mxu0 0
    %157 = vmatpush1.bf16.msra.mxu0 0
    %158 = vmatprep.subr.bf16.mxu0 0
    %159 = vmatpush1.bf16.msra.mxu0 0
    %160 = vmatprep.subr.bf16.mxu0 0
    %161 = vmatpush1.bf16.msra.mxu0 0
    %162 = vmatprep.subr.bf16.mxu0 0
    %163 = vmatpush1.bf16.msra.mxu0 0
    %164 = vmatprep.subr.bf16.mxu0 0
    %165 = vmatpush1.bf16.msra.mxu0 0
    %166 = vmatprep.subr.bf16.mxu0 0
    %167 = vmatpush1.bf16.msra.mxu0 0
    %168 = vmatprep.subr.bf16.mxu0 0
    %169 = vmatpush1.bf16.msra.mxu0 0
    %170 = vmatprep.subr.bf16.mxu0 0
    %171 = vmatpush1.bf16.msra.mxu0 0
    %172 = vmatprep.mubr.bf16.mxu0 0
    %173 = vmatmul.mubr.bf16.gmra.mrb[0].mxu0 %v134
    %v174 = vpop.f32.mrb[0].mxu0
    %v175 = vadd.f32 0.0, %v174
    %v176 = vpop.f32.mrb[0].mxu0
    %v177 = vpop.f32.mrb[0].mxu0
    %v178 = vadd.f32 0.0, %v177
    %v179 = vpop.f32.mrb[0].mxu0
    %180 = vdwg.mxu0
    %v181 = vld [vmem:[%s1] sm:$0xff]
    %v182 = vadd.f32 %v175, %v181
    %v183 = vadd.f32 %v178, %v181
    %v184 = vpack.c.bf16 %v183, %v182
    %v185 = vld [vmem:[%s3] sm:$0xf]
    %v186 = vld [vmem:[%s3 + $0x4] sm:$0xf]
    %v187 = vld [vmem:[%s3 + $0x8] sm:$0xf]
    %v188 = vld [vmem:[%s3 + $0xc] sm:$0xf]
    %v189 = vld [vmem:[%s3 + $0x10] sm:$0xf]
    %v190 = vld [vmem:[%s3 + $0x14] sm:$0xf]
    %v191 = vld [vmem:[%s3 + $0x18] sm:$0xf]
    %v192 = vld [vmem:[%s3 + $0x1c] sm:$0xf]
    %v193 = vlaneseq
    %v194 = vshrl.u32 %v193, 7
    %v195 = vsub.s32 0, %v194
    %v196 = vrot.slane %v113, %v195
    %v205 = vunpack.c.l.b16 %v185
    %v206 = vunpack.c.l.b16 %v186
    %v207 = vunpack.c.l.b16 %v187
    %v208 = vunpack.c.l.b16 %v188
    %v209 = vunpack.c.l.b16 %v189
    %v210 = vunpack.c.l.b16 %v190
    %v211 = vunpack.c.l.b16 %v191
    %v212 = vunpack.c.l.b16 %v192
    %v213 = vpack.c.b16 %v206, %v205
    %v214 = vpack.c.b16 %v208, %v207
    %v215 = vpack.c.b16 %v210, %v209
    %v216 = vpack.c.b16 %v212, %v211
    %vm221 = vcmask 523264
    %v223 = vsel %vm221, %v184, 0
    %225 = vmatprep.subr.bf16.mxu0 0
    %226 = vmatpush1.bf16.msra.mxu0 %v213
    %227 = vmatprep.subr.bf16.mxu0 0
    %228 = vmatpush1.bf16.msra.mxu0 %v214
    %229 = vmatprep.subr.bf16.mxu0 0
    %230 = vmatpush1.bf16.msra.mxu0 %v215
    %231 = vmatprep.subr.bf16.mxu0 0
    %232 = vmatpush1.bf16.msra.mxu0 %v216
    %233 = vmatprep.subr.bf16.mxu0 0
    %234 = vmatpush1.bf16.msra.mxu0 0
    %235 = vmatprep.subr.bf16.mxu0 0
    %236 = vmatpush1.bf16.msra.mxu0 0
    %237 = vmatprep.subr.bf16.mxu0 0
    %238 = vmatpush1.bf16.msra.mxu0 0
    %239 = vmatprep.subr.bf16.mxu0 0
    %240 = vmatpush1.bf16.msra.mxu0 0
    %241 = vmatprep.subr.bf16.mxu0 0
    %242 = vmatpush1.bf16.msra.mxu0 0
    %243 = vmatprep.subr.bf16.mxu0 0
    %244 = vmatpush1.bf16.msra.mxu0 0
    %245 = vmatprep.subr.bf16.mxu0 0
    %246 = vmatpush1.bf16.msra.mxu0 0
    %247 = vmatprep.subr.bf16.mxu0 0
    %248 = vmatpush1.bf16.msra.mxu0 0
    %249 = vmatprep.subr.bf16.mxu0 0
    %250 = vmatpush1.bf16.msra.mxu0 0
    %251 = vmatprep.subr.bf16.mxu0 0
    %252 = vmatpush1.bf16.msra.mxu0 0
    %253 = vmatprep.subr.bf16.mxu0 0
    %254 = vmatpush1.bf16.msra.mxu0 0
    %255 = vmatprep.subr.bf16.mxu0 0
    %256 = vmatpush1.bf16.msra.mxu0 0
    %257 = vmatprep.mubr.bf16.mxu0 0
    %258 = vmatmul.mubr.bf16.gmra.mrb[0].mxu0 %v223
    %v259 = vpop.f32.mrb[0].mxu0
    %v260 = vadd.f32 %v196, %v259
    %v261 = vpop.f32.mrb[0].mxu0
    %v262 = vpop.f32.mrb[0].mxu0
    %v263 = vadd.f32 %v196, %v262
    %v264 = vpop.f32.mrb[0].mxu0
    %265 = vdwg.mxu0
    %v266 = vld [vmem:[%s4] sm:$0xf]
    %v267 = vld [vmem:[%s4 + $0x4] sm:$0xf]
    %v268 = vld [vmem:[%s4 + $0x8] sm:$0xf]
    %v269 = vld [vmem:[%s4 + $0xc] sm:$0xf]
    %v270 = vld [vmem:[%s4 + $0x10] sm:$0xf]
    %v271 = vld [vmem:[%s4 + $0x14] sm:$0xf]
    %v272 = vld [vmem:[%s4 + $0x18] sm:$0xf]
    %v273 = vld [vmem:[%s4 + $0x1c] sm:$0xf]
    %v274 = vlaneseq
    %v275 = vshrl.u32 %v274, 7
    %v276 = vsub.s32 1, %v275
    %v277 = vrot.slane %v113, %v276
    %v286 = vunpack.c.l.b16 %v266
    %v287 = vunpack.c.l.b16 %v267
    %v288 = vunpack.c.l.b16 %v268
    %v289 = vunpack.c.l.b16 %v269
    %v290 = vunpack.c.l.b16 %v270
    %v291 = vunpack.c.l.b16 %v271
    %v292 = vunpack.c.l.b16 %v272
    %v293 = vunpack.c.l.b16 %v273
    %v294 = vpack.c.b16 %v287, %v286
    %v295 = vpack.c.b16 %v289, %v288
    %v296 = vpack.c.b16 %v291, %v290
    %v297 = vpack.c.b16 %v293, %v292
    %302 = vmatprep.subr.bf16.mxu0 0
    %303 = vmatpush1.bf16.msra.mxu0 %v294
    %304 = vmatprep.subr.bf16.mxu0 0
    %305 = vmatpush1.bf16.msra.mxu0 %v295
    %306 = vmatprep.subr.bf16.mxu0 0
    %307 = vmatpush1.bf16.msra.mxu0 %v296
    %308 = vmatprep.subr.bf16.mxu0 0
    %309 = vmatpush1.bf16.msra.mxu0 %v297
    %310 = vmatprep.subr.bf16.mxu0 0
    %311 = vmatpush1.bf16.msra.mxu0 0
    %312 = vmatprep.subr.bf16.mxu0 0
    %313 = vmatpush1.bf16.msra.mxu0 0
    %314 = vmatprep.subr.bf16.mxu0 0
    %315 = vmatpush1.bf16.msra.mxu0 0
    %316 = vmatprep.subr.bf16.mxu0 0
    %317 = vmatpush1.bf16.msra.mxu0 0
    %318 = vmatprep.subr.bf16.mxu0 0
    %319 = vmatpush1.bf16.msra.mxu0 0
    %320 = vmatprep.subr.bf16.mxu0 0
    %321 = vmatpush1.bf16.msra.mxu0 0
    %322 = vmatprep.subr.bf16.mxu0 0
    %323 = vmatpush1.bf16.msra.mxu0 0
    %324 = vmatprep.subr.bf16.mxu0 0
    %325 = vmatpush1.bf16.msra.mxu0 0
    %326 = vmatprep.subr.bf16.mxu0 0
    %327 = vmatpush1.bf16.msra.mxu0 0
    %328 = vmatprep.subr.bf16.mxu0 0
    %329 = vmatpush1.bf16.msra.mxu0 0
    %330 = vmatprep.subr.bf16.mxu0 0
    %331 = vmatpush1.bf16.msra.mxu0 0
    %332 = vmatprep.subr.bf16.mxu0 0
    %333 = vmatpush1.bf16.msra.mxu0 0
    %334 = vmatprep.mubr.bf16.mxu0 0
    %335 = vmatmul.mubr.bf16.gmra.mrb[0].mxu0 %v223
    %v336 = vpop.f32.mrb[0].mxu0
    %v337 = vadd.f32 %v277, %v336
    %v338 = vpop.f32.mrb[0].mxu0
    %v339 = vpop.f32.mrb[0].mxu0
    %v340 = vadd.f32 %v277, %v339
    %v341 = vpop.f32.mrb[0].mxu0
    %342 = vdwg.mxu0
    %v343 = vld [vmem:[%s5] sm:$0xf]
    %v344 = vld [vmem:[%s5 + $0x4] sm:$0xf]
    %v345 = vld [vmem:[%s5 + $0x8] sm:$0xf]
    %v346 = vld [vmem:[%s5 + $0xc] sm:$0xf]
    %v347 = vld [vmem:[%s5 + $0x10] sm:$0xf]
    %v348 = vld [vmem:[%s5 + $0x14] sm:$0xf]
    %v349 = vld [vmem:[%s5 + $0x18] sm:$0xf]
    %v350 = vld [vmem:[%s5 + $0x1c] sm:$0xf]
    %v351 = vlaneseq
    %v352 = vshrl.u32 %v351, 7
    %v353 = vsub.s32 2, %v352
    %v354 = vrot.slane %v113, %v353
    %v363 = vunpack.c.l.b16 %v343
    %v364 = vunpack.c.l.b16 %v344
    %v365 = vunpack.c.l.b16 %v345
    %v366 = vunpack.c.l.b16 %v346
    %v367 = vunpack.c.l.b16 %v347
    %v368 = vunpack.c.l.b16 %v348
    %v369 = vunpack.c.l.b16 %v349
    %v370 = vunpack.c.l.b16 %v350
    %v371 = vpack.c.b16 %v364, %v363
    %v372 = vpack.c.b16 %v366, %v365
    %v373 = vpack.c.b16 %v368, %v367
    %v374 = vpack.c.b16 %v370, %v369
    %379 = vmatprep.subr.bf16.mxu0 0
    %380 = vmatpush1.bf16.msra.mxu0 %v371
    %381 = vmatprep.subr.bf16.mxu0 0
    %382 = vmatpush1.bf16.msra.mxu0 %v372
    %383 = vmatprep.subr.bf16.mxu0 0
    %384 = vmatpush1.bf16.msra.mxu0 %v373
    %385 = vmatprep.subr.bf16.mxu0 0
    %386 = vmatpush1.bf16.msra.mxu0 %v374
    %387 = vmatprep.subr.bf16.mxu0 0
    %388 = vmatpush1.bf16.msra.mxu0 0
    %389 = vmatprep.subr.bf16.mxu0 0
    %390 = vmatpush1.bf16.msra.mxu0 0
    %391 = vmatprep.subr.bf16.mxu0 0
    %392 = vmatpush1.bf16.msra.mxu0 0
    %393 = vmatprep.subr.bf16.mxu0 0
    %394 = vmatpush1.bf16.msra.mxu0 0
    %395 = vmatprep.subr.bf16.mxu0 0
    %396 = vmatpush1.bf16.msra.mxu0 0
    %397 = vmatprep.subr.bf16.mxu0 0
    %398 = vmatpush1.bf16.msra.mxu0 0
    %399 = vmatprep.subr.bf16.mxu0 0
    %400 = vmatpush1.bf16.msra.mxu0 0
    %401 = vmatprep.subr.bf16.mxu0 0
    %402 = vmatpush1.bf16.msra.mxu0 0
    %403 = vmatprep.subr.bf16.mxu0 0
    %404 = vmatpush1.bf16.msra.mxu0 0
    %405 = vmatprep.subr.bf16.mxu0 0
    %406 = vmatpush1.bf16.msra.mxu0 0
    %407 = vmatprep.subr.bf16.mxu0 0
    %408 = vmatpush1.bf16.msra.mxu0 0
    %409 = vmatprep.subr.bf16.mxu0 0
    %410 = vmatpush1.bf16.msra.mxu0 0
    %411 = vmatprep.mubr.bf16.mxu0 0
    %412 = vmatmul.mubr.bf16.gmra.mrb[0].mxu0 %v223
    %v413 = vpop.f32.mrb[0].mxu0
    %v414 = vadd.f32 %v354, %v413
    %v415 = vpop.f32.mrb[0].mxu0
    %v416 = vpop.f32.mrb[0].mxu0
    %v417 = vadd.f32 %v354, %v416
    %v418 = vpop.f32.mrb[0].mxu0
    %419 = vdwg.mxu0
    %v420 = vpack.c.bf16 %v260, %v260
    %v421 = vpack.c.bf16 %v263, %v263
    %v422 = vpack.c.bf16 %v337, %v337
    %v423 = vpack.c.bf16 %v340, %v340
    %vm424 = vcmask 130048
    %v426 = vsel %vm424, %v420, 0
    %v429 = vsel %vm424, %v422, 0
    %431 = vmatprep.subr.bf16.mxu0 0
    %432 = vmatpush1.bf16.xpose.msra.mxu0 %v429
    %433 = vmatprep.subr.bf16.mxu0 0
    %434 = vmatpush1.bf16.xpose.msra.mxu0 0
    %435 = vmatprep.subr.bf16.mxu0 0
    %436 = vmatpush1.bf16.xpose.msra.mxu0 0
    %437 = vmatprep.subr.bf16.mxu0 0
    %438 = vmatpush1.bf16.xpose.msra.mxu0 0
    %439 = vmatprep.subr.bf16.mxu0 0
    %440 = vmatpush1.bf16.xpose.msra.mxu0 0
    %441 = vmatprep.subr.bf16.mxu0 0
    %442 = vmatpush1.bf16.xpose.msra.mxu0 0
    %443 = vmatprep.subr.bf16.mxu0 0
    %444 = vmatpush1.bf16.xpose.msra.mxu0 0
    %445 = vmatprep.subr.bf16.mxu0 0
    %446 = vmatpush1.bf16.xpose.msra.mxu0 0
    %447 = vmatprep.subr.bf16.mxu0 0
    %448 = vmatpush1.bf16.xpose.msra.mxu0 0
    %449 = vmatprep.subr.bf16.mxu0 0
    %450 = vmatpush1.bf16.xpose.msra.mxu0 0
    %451 = vmatprep.subr.bf16.mxu0 0
    %452 = vmatpush1.bf16.xpose.msra.mxu0 0
    %453 = vmatprep.subr.bf16.mxu0 0
    %454 = vmatpush1.bf16.xpose.msra.mxu0 0
    %455 = vmatprep.subr.bf16.mxu0 0
    %456 = vmatpush1.bf16.xpose.msra.mxu0 0
    %457 = vmatprep.subr.bf16.mxu0 0
    %458 = vmatpush1.bf16.xpose.msra.mxu0 0
    %459 = vmatprep.subr.bf16.mxu0 0
    %460 = vmatpush1.bf16.xpose.msra.mxu0 0
    %461 = vmatprep.subr.bf16.mxu0 0
    %462 = vmatpush1.bf16.xpose.msra.mxu0 0
    %463 = vmatprep.mubr.bf16.mxu0 0
    %464 = vmatmul.mubr.bf16.gmra.mrb[0].mxu0 %v426
    %v465 = vpop.f32.mrb[0].mxu0
    %v466 = vadd.f32 0.0, %v465
    %v467 = vpop.f32.mrb[0].mxu0
    %v468 = vpop.f32.mrb[0].mxu0
    %v469 = vpop.f32.mrb[0].mxu0
    %470 = vdwg.mxu0
    %v472 = vsel %vm424, %v421, 0
    %v475 = vsel %vm424, %v423, 0
    %477 = vmatprep.subr.bf16.mxu0 0
    %478 = vmatpush1.bf16.xpose.msra.mxu0 %v475
    %479 = vmatprep.subr.bf16.mxu0 0
    %480 = vmatpush1.bf16.xpose.msra.mxu0 0
    %481 = vmatprep.subr.bf16.mxu0 0
    %482 = vmatpush1.bf16.xpose.msra.mxu0 0
    %483 = vmatprep.subr.bf16.mxu0 0
    %484 = vmatpush1.bf16.xpose.msra.mxu0 0
    %485 = vmatprep.subr.bf16.mxu0 0
    %486 = vmatpush1.bf16.xpose.msra.mxu0 0
    %487 = vmatprep.subr.bf16.mxu0 0
    %488 = vmatpush1.bf16.xpose.msra.mxu0 0
    %489 = vmatprep.subr.bf16.mxu0 0
    %490 = vmatpush1.bf16.xpose.msra.mxu0 0
    %491 = vmatprep.subr.bf16.mxu0 0
    %492 = vmatpush1.bf16.xpose.msra.mxu0 0
    %493 = vmatprep.subr.bf16.mxu0 0
    %494 = vmatpush1.bf16.xpose.msra.mxu0 0
    %495 = vmatprep.subr.bf16.mxu0 0
    %496 = vmatpush1.bf16.xpose.msra.mxu0 0
    %497 = vmatprep.subr.bf16.mxu0 0
    %498 = vmatpush1.bf16.xpose.msra.mxu0 0
    %499 = vmatprep.subr.bf16.mxu0 0
    %500 = vmatpush1.bf16.xpose.msra.mxu0 0
    %501 = vmatprep.subr.bf16.mxu0 0
    %502 = vmatpush1.bf16.xpose.msra.mxu0 0
    %503 = vmatprep.subr.bf16.mxu0 0
    %504 = vmatpush1.bf16.xpose.msra.mxu0 0
    %505 = vmatprep.subr.bf16.mxu0 0
    %506 = vmatpush1.bf16.xpose.msra.mxu0 0
    %507 = vmatprep.subr.bf16.mxu0 0
    %508 = vmatpush1.bf16.xpose.msra.mxu0 0
    %509 = vmatprep.mubr.bf16.mxu0 0
    %510 = vmatmul.mubr.bf16.gmra.mrb[0].mxu0 %v472
    %v511 = vpop.f32.mrb[0].mxu0
    %v512 = vadd.f32 0.0, %v511
    %v513 = vpop.f32.mrb[0].mxu0
    %v514 = vpop.f32.mrb[0].mxu0
    %v515 = vpop.f32.mrb[0].mxu0
    %516 = vdwg.mxu0
    %v517 = vmul.f32 %v466, 0.25
    %v518 = vmul.f32 %v512, 0.25
    %vm519 = vcmask 64512
    %v520 = vsel %vm519, %v517, -inf
    %521 = vmax.xlane.f32.xlu0 %v520
    %v522 = vpop.xlane.xlu0 %521
    %v523 = vsel %vm519, %v518, -inf
    %524 = vmax.xlane.f32.xlu0 %v523
    %v525 = vpop.xlane.xlu0 %524
    %v526 = vsub.f32 %v517, %v522
    %v527 = vsub.f32 %v518, %v525
    %v528 = vmul.f32 %v526, 1.442695
    %v529 = vpow.pop %v528
    %v530 = vmul.f32 %v527, 1.442695
    %v531 = vpow.pop %v530
    %v532 = vsel %vm519, %v529, 0.0
    %533 = vadd.xlane.f32.xlu0 %v532
    %v534 = vpop.xlane.xlu0 %533
    %v535 = vsel %vm519, %v531, 0.0
    %536 = vadd.xlane.f32.xlu0 %v535
    %v537 = vpop.xlane.xlu0 %536
    %v538 = vrcp.pop %v534
    %v539 = vrcp.pop %v537
    %v540 = vmul.f32 %v529, %v538
    %v541 = vmul.f32 %v531, %v539
    %v542 = vpack.c.bf16 %v540, %v540
    %v543 = vpack.c.bf16 %v541, %v541
    %v544 = vpack.c.bf16 %v414, %v414
    %v545 = vpack.c.bf16 %v417, %v417
    %v547 = vsel %vm519, %v542, 0
    %v550 = vsel %vm136, %v544, 0
    %552 = vmatprep.subr.bf16.mxu0 0
    %553 = vmatpush1.bf16.msra.mxu0 %v550
    %554 = vmatprep.subr.bf16.mxu0 0
    %555 = vmatpush1.bf16.msra.mxu0 0
    %556 = vmatprep.subr.bf16.mxu0 0
    %557 = vmatpush1.bf16.msra.mxu0 0
    %558 = vmatprep.subr.bf16.mxu0 0
    %559 = vmatpush1.bf16.msra.mxu0 0
    %560 = vmatprep.subr.bf16.mxu0 0
    %561 = vmatpush1.bf16.msra.mxu0 0
    %562 = vmatprep.subr.bf16.mxu0 0
    %563 = vmatpush1.bf16.msra.mxu0 0
    %564 = vmatprep.subr.bf16.mxu0 0
    %565 = vmatpush1.bf16.msra.mxu0 0
    %566 = vmatprep.subr.bf16.mxu0 0
    %567 = vmatpush1.bf16.msra.mxu0 0
    %568 = vmatprep.subr.bf16.mxu0 0
    %569 = vmatpush1.bf16.msra.mxu0 0
    %570 = vmatprep.subr.bf16.mxu0 0
    %571 = vmatpush1.bf16.msra.mxu0 0
    %572 = vmatprep.subr.bf16.mxu0 0
    %573 = vmatpush1.bf16.msra.mxu0 0
    %574 = vmatprep.subr.bf16.mxu0 0
    %575 = vmatpush1.bf16.msra.mxu0 0
    %576 = vmatprep.subr.bf16.mxu0 0
    %577 = vmatpush1.bf16.msra.mxu0 0
    %578 = vmatprep.subr.bf16.mxu0 0
    %579 = vmatpush1.bf16.msra.mxu0 0
    %580 = vmatprep.subr.bf16.mxu0 0
    %581 = vmatpush1.bf16.msra.mxu0 0
    %582 = vmatprep.subr.bf16.mxu0 0
    %583 = vmatpush1.bf16.msra.mxu0 0
    %584 = vmatprep.mubr.bf16.mxu0 0
    %585 = vmatmul.mubr.bf16.gmra.mrb[0].mxu0 %v547
    %v586 = vpop.f32.mrb[0].mxu0
    %v587 = vadd.f32 0.0, %v586
    %v588 = vpop.f32.mrb[0].mxu0
    %v589 = vpop.f32.mrb[0].mxu0
    %v590 = vpop.f32.mrb[0].mxu0
    %591 = vdwg.mxu0
    %v593 = vsel %vm519, %v543, 0
    %v596 = vsel %vm136, %v545, 0
    %598 = vmatprep.subr.bf16.mxu0 0
    %599 = vmatpush1.bf16.msra.mxu0 %v596
    %600 = vmatprep.subr.bf16.mxu0 0
    %601 = vmatpush1.bf16.msra.mxu0 0
    %602 = vmatprep.subr.bf16.mxu0 0
    %603 = vmatpush1.bf16.msra.mxu0 0
    %604 = vmatprep.subr.bf16.mxu0 0
    %605 = vmatpush1.bf16.msra.mxu0 0
    %606 = vmatprep.subr.bf16.mxu0 0
    %607 = vmatpush1.bf16.msra.mxu0 0
    %608 = vmatprep.subr.bf16.mxu0 0
    %609 = vmatpush1.bf16.msra.mxu0 0
    %610 = vmatprep.subr.bf16.mxu0 0
    %611 = vmatpush1.bf16.msra.mxu0 0
    %612 = vmatprep.subr.bf16.mxu0 0
    %613 = vmatpush1.bf16.msra.mxu0 0
    %614 = vmatprep.subr.bf16.mxu0 0
    %615 = vmatpush1.bf16.msra.mxu0 0
    %616 = vmatprep.subr.bf16.mxu0 0
    %617 = vmatpush1.bf16.msra.mxu0 0
    %618 = vmatprep.subr.bf16.mxu0 0
    %619 = vmatpush1.bf16.msra.mxu0 0
    %620 = vmatprep.subr.bf16.mxu0 0
    %621 = vmatpush1.bf16.msra.mxu0 0
    %622 = vmatprep.subr.bf16.mxu0 0
    %623 = vmatpush1.bf16.msra.mxu0 0
    %624 = vmatprep.subr.bf16.mxu0 0
    %625 = vmatpush1.bf16.msra.mxu0 0
    %626 = vmatprep.subr.bf16.mxu0 0
    %627 = vmatpush1.bf16.msra.mxu0 0
    %628 = vmatprep.subr.bf16.mxu0 0
    %629 = vmatpush1.bf16.msra.mxu0 0
    %630 = vmatprep.mubr.bf16.mxu0 0
    %631 = vmatmul.mubr.bf16.gmra.mrb[0].mxu0 %v593
    %v632 = vpop.f32.mrb[0].mxu0
    %v633 = vadd.f32 0.0, %v632
    %v634 = vpop.f32.mrb[0].mxu0
    %v635 = vpop.f32.mrb[0].mxu0
    %v636 = vpop.f32.mrb[0].mxu0
    %637 = vdwg.mxu0
    %639 = vrot.lane.b32.xlu0 %v420, 112
    %v640 = vpop.permute.xlu0 %639
    %642 = vrot.lane.b32.xlu0 %v422, 112
    %v643 = vpop.permute.xlu0 %642
    %v645 = vsel %vm424, %v640, 0
    %v648 = vsel %vm424, %v643, 0
    %650 = vmatprep.subr.bf16.mxu0 0
    %651 = vmatpush1.bf16.xpose.msra.mxu0 %v648
    %652 = vmatprep.subr.bf16.mxu0 0
    %653 = vmatpush1.bf16.xpose.msra.mxu0 0
    %654 = vmatprep.subr.bf16.mxu0 0
    %655 = vmatpush1.bf16.xpose.msra.mxu0 0
    %656 = vmatprep.subr.bf16.mxu0 0
    %657 = vmatpush1.bf16.xpose.msra.mxu0 0
    %658 = vmatprep.subr.bf16.mxu0 0
    %659 = vmatpush1.bf16.xpose.msra.mxu0 0
    %660 = vmatprep.subr.bf16.mxu0 0
    %661 = vmatpush1.bf16.xpose.msra.mxu0 0
    %662 = vmatprep.subr.bf16.mxu0 0
    %663 = vmatpush1.bf16.xpose.msra.mxu0 0
    %664 = vmatprep.subr.bf16.mxu0 0
    %665 = vmatpush1.bf16.xpose.msra.mxu0 0
    %666 = vmatprep.subr.bf16.mxu0 0
    %667 = vmatpush1.bf16.xpose.msra.mxu0 0
    %668 = vmatprep.subr.bf16.mxu0 0
    %669 = vmatpush1.bf16.xpose.msra.mxu0 0
    %670 = vmatprep.subr.bf16.mxu0 0
    %671 = vmatpush1.bf16.xpose.msra.mxu0 0
    %672 = vmatprep.subr.bf16.mxu0 0
    %673 = vmatpush1.bf16.xpose.msra.mxu0 0
    %674 = vmatprep.subr.bf16.mxu0 0
    %675 = vmatpush1.bf16.xpose.msra.mxu0 0
    %676 = vmatprep.subr.bf16.mxu0 0
    %677 = vmatpush1.bf16.xpose.msra.mxu0 0
    %678 = vmatprep.subr.bf16.mxu0 0
    %679 = vmatpush1.bf16.xpose.msra.mxu0 0
    %680 = vmatprep.subr.bf16.mxu0 0
    %681 = vmatpush1.bf16.xpose.msra.mxu0 0
    %682 = vmatprep.mubr.bf16.mxu0 0
    %683 = vmatmul.mubr.bf16.gmra.mrb[0].mxu0 %v645
    %v684 = vpop.f32.mrb[0].mxu0
    %v685 = vadd.f32 0.0, %v684
    %v686 = vpop.f32.mrb[0].mxu0
    %v687 = vpop.f32.mrb[0].mxu0
    %v688 = vpop.f32.mrb[0].mxu0
    %689 = vdwg.mxu0
    %691 = vrot.lane.b32.xlu0 %v421, 112
    %v692 = vpop.permute.xlu0 %691
    %694 = vrot.lane.b32.xlu0 %v423, 112
    %v695 = vpop.permute.xlu0 %694
    %v697 = vsel %vm424, %v692, 0
    %v700 = vsel %vm424, %v695, 0
    %702 = vmatprep.subr.bf16.mxu0 0
    %703 = vmatpush1.bf16.xpose.msra.mxu0 %v700
    %704 = vmatprep.subr.bf16.mxu0 0
    %705 = vmatpush1.bf16.xpose.msra.mxu0 0
    %706 = vmatprep.subr.bf16.mxu0 0
    %707 = vmatpush1.bf16.xpose.msra.mxu0 0
    %708 = vmatprep.subr.bf16.mxu0 0
    %709 = vmatpush1.bf16.xpose.msra.mxu0 0
    %710 = vmatprep.subr.bf16.mxu0 0
    %711 = vmatpush1.bf16.xpose.msra.mxu0 0
    %712 = vmatprep.subr.bf16.mxu0 0
    %713 = vmatpush1.bf16.xpose.msra.mxu0 0
    %714 = vmatprep.subr.bf16.mxu0 0
    %715 = vmatpush1.bf16.xpose.msra.mxu0 0
    %716 = vmatprep.subr.bf16.mxu0 0
    %717 = vmatpush1.bf16.xpose.msra.mxu0 0
    %718 = vmatprep.subr.bf16.mxu0 0
    %719 = vmatpush1.bf16.xpose.msra.mxu0 0
    %720 = vmatprep.subr.bf16.mxu0 0
    %721 = vmatpush1.bf16.xpose.msra.mxu0 0
    %722 = vmatprep.subr.bf16.mxu0 0
    %723 = vmatpush1.bf16.xpose.msra.mxu0 0
    %724 = vmatprep.subr.bf16.mxu0 0
    %725 = vmatpush1.bf16.xpose.msra.mxu0 0
    %726 = vmatprep.subr.bf16.mxu0 0
    %727 = vmatpush1.bf16.xpose.msra.mxu0 0
    %728 = vmatprep.subr.bf16.mxu0 0
    %729 = vmatpush1.bf16.xpose.msra.mxu0 0
    %730 = vmatprep.subr.bf16.mxu0 0
    %731 = vmatpush1.bf16.xpose.msra.mxu0 0
    %732 = vmatprep.subr.bf16.mxu0 0
    %733 = vmatpush1.bf16.xpose.msra.mxu0 0
    %734 = vmatprep.mubr.bf16.mxu0 0
    %735 = vmatmul.mubr.bf16.gmra.mrb[0].mxu0 %v697
    %v736 = vpop.f32.mrb[0].mxu0
    %v737 = vadd.f32 0.0, %v736
    %v738 = vpop.f32.mrb[0].mxu0
    %v739 = vpop.f32.mrb[0].mxu0
    %v740 = vpop.f32.mrb[0].mxu0
    %741 = vdwg.mxu0
    %v742 = vmul.f32 %v685, 0.25
    %v743 = vmul.f32 %v737, 0.25
    %v744 = vsel %vm519, %v742, -inf
    %745 = vmax.xlane.f32.xlu0 %v744
    %v746 = vpop.xlane.xlu0 %745
    %v747 = vsel %vm519, %v743, -inf
    %748 = vmax.xlane.f32.xlu0 %v747
    %v749 = vpop.xlane.xlu0 %748
    %v750 = vsub.f32 %v742, %v746
    %v751 = vsub.f32 %v743, %v749
    %v752 = vmul.f32 %v750, 1.442695
    %v753 = vpow.pop %v752
    %v754 = vmul.f32 %v751, 1.442695
    %v755 = vpow.pop %v754
    %v756 = vsel %vm519, %v753, 0.0
    %757 = vadd.xlane.f32.xlu0 %v756
    %v758 = vpop.xlane.xlu0 %757
    %v759 = vsel %vm519, %v755, 0.0
    %760 = vadd.xlane.f32.xlu0 %v759
    %v761 = vpop.xlane.xlu0 %760
    %v762 = vrcp.pop %v758
    %v763 = vrcp.pop %v761
    %v764 = vmul.f32 %v753, %v762
    %v765 = vmul.f32 %v755, %v763
    %v766 = vpack.c.bf16 %v764, %v764
    %v767 = vpack.c.bf16 %v765, %v765
    %769 = vrot.lane.b32.xlu0 %v544, 112
    %v770 = vpop.permute.xlu0 %769
    %v772 = vsel %vm519, %v766, 0
    %v775 = vsel %vm136, %v770, 0
    %777 = vmatprep.subr.bf16.mxu0 0
    %778 = vmatpush1.bf16.msra.mxu0 %v775
    %779 = vmatprep.subr.bf16.mxu0 0
    %780 = vmatpush1.bf16.msra.mxu0 0
    %781 = vmatprep.subr.bf16.mxu0 0
    %782 = vmatpush1.bf16.msra.mxu0 0
    %783 = vmatprep.subr.bf16.mxu0 0
    %784 = vmatpush1.bf16.msra.mxu0 0
    %785 = vmatprep.subr.bf16.mxu0 0
    %786 = vmatpush1.bf16.msra.mxu0 0
    %787 = vmatprep.subr.bf16.mxu0 0
    %788 = vmatpush1.bf16.msra.mxu0 0
    %789 = vmatprep.subr.bf16.mxu0 0
    %790 = vmatpush1.bf16.msra.mxu0 0
    %791 = vmatprep.subr.bf16.mxu0 0
    %792 = vmatpush1.bf16.msra.mxu0 0
    %793 = vmatprep.subr.bf16.mxu0 0
    %794 = vmatpush1.bf16.msra.mxu0 0
    %795 = vmatprep.subr.bf16.mxu0 0
    %796 = vmatpush1.bf16.msra.mxu0 0
    %797 = vmatprep.subr.bf16.mxu0 0
    %798 = vmatpush1.bf16.msra.mxu0 0
    %799 = vmatprep.subr.bf16.mxu0 0
    %800 = vmatpush1.bf16.msra.mxu0 0
    %801 = vmatprep.subr.bf16.mxu0 0
    %802 = vmatpush1.bf16.msra.mxu0 0
    %803 = vmatprep.subr.bf16.mxu0 0
    %804 = vmatpush1.bf16.msra.mxu0 0
    %805 = vmatprep.subr.bf16.mxu0 0
    %806 = vmatpush1.bf16.msra.mxu0 0
    %807 = vmatprep.subr.bf16.mxu0 0
    %808 = vmatpush1.bf16.msra.mxu0 0
    %809 = vmatprep.mubr.bf16.mxu0 0
    %810 = vmatmul.mubr.bf16.gmra.mrb[0].mxu0 %v772
    %v811 = vpop.f32.mrb[0].mxu0
    %v812 = vadd.f32 0.0, %v811
    %v813 = vpop.f32.mrb[0].mxu0
    %v814 = vpop.f32.mrb[0].mxu0
    %v815 = vpop.f32.mrb[0].mxu0
    %816 = vdwg.mxu0
    %818 = vrot.lane.b32.xlu0 %v545, 112
    %v819 = vpop.permute.xlu0 %818
    %v821 = vsel %vm519, %v767, 0
    %v824 = vsel %vm136, %v819, 0
    %826 = vmatprep.subr.bf16.mxu0 0
    %827 = vmatpush1.bf16.msra.mxu0 %v824
    %828 = vmatprep.subr.bf16.mxu0 0
    %829 = vmatpush1.bf16.msra.mxu0 0
    %830 = vmatprep.subr.bf16.mxu0 0
    %831 = vmatpush1.bf16.msra.mxu0 0
    %832 = vmatprep.subr.bf16.mxu0 0
    %833 = vmatpush1.bf16.msra.mxu0 0
    %834 = vmatprep.subr.bf16.mxu0 0
    %835 = vmatpush1.bf16.msra.mxu0 0
    %836 = vmatprep.subr.bf16.mxu0 0
    %837 = vmatpush1.bf16.msra.mxu0 0
    %838 = vmatprep.subr.bf16.mxu0 0
    %839 = vmatpush1.bf16.msra.mxu0 0
    %840 = vmatprep.subr.bf16.mxu0 0
    %841 = vmatpush1.bf16.msra.mxu0 0
    %842 = vmatprep.subr.bf16.mxu0 0
    %843 = vmatpush1.bf16.msra.mxu0 0
    %844 = vmatprep.subr.bf16.mxu0 0
    %845 = vmatpush1.bf16.msra.mxu0 0
    %846 = vmatprep.subr.bf16.mxu0 0
    %847 = vmatpush1.bf16.msra.mxu0 0
    %848 = vmatprep.subr.bf16.mxu0 0
    %849 = vmatpush1.bf16.msra.mxu0 0
    %850 = vmatprep.subr.bf16.mxu0 0
    %851 = vmatpush1.bf16.msra.mxu0 0
    %852 = vmatprep.subr.bf16.mxu0 0
    %853 = vmatpush1.bf16.msra.mxu0 0
    %854 = vmatprep.subr.bf16.mxu0 0
    %855 = vmatpush1.bf16.msra.mxu0 0
    %856 = vmatprep.subr.bf16.mxu0 0
    %857 = vmatpush1.bf16.msra.mxu0 0
    %858 = vmatprep.mubr.bf16.mxu0 0
    %859 = vmatmul.mubr.bf16.gmra.mrb[0].mxu0 %v821
    %v860 = vpop.f32.mrb[0].mxu0
    %v861 = vadd.f32 0.0, %v860
    %v862 = vpop.f32.mrb[0].mxu0
    %v863 = vpop.f32.mrb[0].mxu0
    %v864 = vpop.f32.mrb[0].mxu0
    %865 = vdwg.mxu0
    %866 = vrot.lane.b32.xlu0 %v420, 96
    %v867 = vpop.permute.xlu0 %866
    %868 = vrot.lane.b32.xlu0 %v422, 96
    %v869 = vpop.permute.xlu0 %868
    %v871 = vsel %vm424, %v867, 0
    %v874 = vsel %vm424, %v869, 0
    %876 = vmatprep.subr.bf16.mxu0 0
    %877 = vmatpush1.bf16.xpose.msra.mxu0 %v874
    %878 = vmatprep.subr.bf16.mxu0 0
    %879 = vmatpush1.bf16.xpose.msra.mxu0 0
    %880 = vmatprep.subr.bf16.mxu0 0
    %881 = vmatpush1.bf16.xpose.msra.mxu0 0
    %882 = vmatprep.subr.bf16.mxu0 0
    %883 = vmatpush1.bf16.xpose.msra.mxu0 0
    %884 = vmatprep.subr.bf16.mxu0 0
    %885 = vmatpush1.bf16.xpose.msra.mxu0 0
    %886 = vmatprep.subr.bf16.mxu0 0
    %887 = vmatpush1.bf16.xpose.msra.mxu0 0
    %888 = vmatprep.subr.bf16.mxu0 0
    %889 = vmatpush1.bf16.xpose.msra.mxu0 0
    %890 = vmatprep.subr.bf16.mxu0 0
    %891 = vmatpush1.bf16.xpose.msra.mxu0 0
    %892 = vmatprep.subr.bf16.mxu0 0
    %893 = vmatpush1.bf16.xpose.msra.mxu0 0
    %894 = vmatprep.subr.bf16.mxu0 0
    %895 = vmatpush1.bf16.xpose.msra.mxu0 0
    %896 = vmatprep.subr.bf16.mxu0 0
    %897 = vmatpush1.bf16.xpose.msra.mxu0 0
    %898 = vmatprep.subr.bf16.mxu0 0
    %899 = vmatpush1.bf16.xpose.msra.mxu0 0
    %900 = vmatprep.subr.bf16.mxu0 0
    %901 = vmatpush1.bf16.xpose.msra.mxu0 0
    %902 = vmatprep.subr.bf16.mxu0 0
    %903 = vmatpush1.bf16.xpose.msra.mxu0 0
    %904 = vmatprep.subr.bf16.mxu0 0
    %905 = vmatpush1.bf16.xpose.msra.mxu0 0
    %906 = vmatprep.subr.bf16.mxu0 0
    %907 = vmatpush1.bf16.xpose.msra.mxu0 0
    %908 = vmatprep.mubr.bf16.mxu0 0
    %909 = vmatmul.mubr.bf16.gmra.mrb[0].mxu0 %v871
    %v910 = vpop.f32.mrb[0].mxu0
    %v911 = vadd.f32 0.0, %v910
    %v912 = vpop.f32.mrb[0].mxu0
    %v913 = vpop.f32.mrb[0].mxu0
    %v914 = vpop.f32.mrb[0].mxu0
    %915 = vdwg.mxu0
    %916 = vrot.lane.b32.xlu0 %v421, 96
    %v917 = vpop.permute.xlu0 %916
    %918 = vrot.lane.b32.xlu0 %v423, 96
    %v919 = vpop.permute.xlu0 %918
    %v921 = vsel %vm424, %v917, 0
    %v924 = vsel %vm424, %v919, 0
    %926 = vmatprep.subr.bf16.mxu0 0
    %927 = vmatpush1.bf16.xpose.msra.mxu0 %v924
    %928 = vmatprep.subr.bf16.mxu0 0
    %929 = vmatpush1.bf16.xpose.msra.mxu0 0
    %930 = vmatprep.subr.bf16.mxu0 0
    %931 = vmatpush1.bf16.xpose.msra.mxu0 0
    %932 = vmatprep.subr.bf16.mxu0 0
    %933 = vmatpush1.bf16.xpose.msra.mxu0 0
    %934 = vmatprep.subr.bf16.mxu0 0
    %935 = vmatpush1.bf16.xpose.msra.mxu0 0
    %936 = vmatprep.subr.bf16.mxu0 0
    %937 = vmatpush1.bf16.xpose.msra.mxu0 0
    %938 = vmatprep.subr.bf16.mxu0 0
    %939 = vmatpush1.bf16.xpose.msra.mxu0 0
    %940 = vmatprep.subr.bf16.mxu0 0
    %941 = vmatpush1.bf16.xpose.msra.mxu0 0
    %942 = vmatprep.subr.bf16.mxu0 0
    %943 = vmatpush1.bf16.xpose.msra.mxu0 0
    %944 = vmatprep.subr.bf16.mxu0 0
    %945 = vmatpush1.bf16.xpose.msra.mxu0 0
    %946 = vmatprep.subr.bf16.mxu0 0
    %947 = vmatpush1.bf16.xpose.msra.mxu0 0
    %948 = vmatprep.subr.bf16.mxu0 0
    %949 = vmatpush1.bf16.xpose.msra.mxu0 0
    %950 = vmatprep.subr.bf16.mxu0 0
    %951 = vmatpush1.bf16.xpose.msra.mxu0 0
    %952 = vmatprep.subr.bf16.mxu0 0
    %953 = vmatpush1.bf16.xpose.msra.mxu0 0
    %954 = vmatprep.subr.bf16.mxu0 0
    %955 = vmatpush1.bf16.xpose.msra.mxu0 0
    %956 = vmatprep.subr.bf16.mxu0 0
    %957 = vmatpush1.bf16.xpose.msra.mxu0 0
    %958 = vmatprep.mubr.bf16.mxu0 0
    %959 = vmatmul.mubr.bf16.gmra.mrb[0].mxu0 %v921
    %v960 = vpop.f32.mrb[0].mxu0
    %v961 = vadd.f32 0.0, %v960
    %v962 = vpop.f32.mrb[0].mxu0
    %v963 = vpop.f32.mrb[0].mxu0
    %v964 = vpop.f32.mrb[0].mxu0
    %965 = vdwg.mxu0
    %v966 = vmul.f32 %v911, 0.25
    %v967 = vmul.f32 %v961, 0.25
    %v968 = vsel %vm519, %v966, -inf
    %969 = vmax.xlane.f32.xlu0 %v968
    %v970 = vpop.xlane.xlu0 %969
    %v971 = vsel %vm519, %v967, -inf
    %972 = vmax.xlane.f32.xlu0 %v971
    %v973 = vpop.xlane.xlu0 %972
    %v974 = vsub.f32 %v966, %v970
    %v975 = vsub.f32 %v967, %v973
    %v976 = vmul.f32 %v974, 1.442695
    %v977 = vpow.pop %v976
    %v978 = vmul.f32 %v975, 1.442695
    %v979 = vpow.pop %v978
    %v980 = vsel %vm519, %v977, 0.0
    %981 = vadd.xlane.f32.xlu0 %v980
    %v982 = vpop.xlane.xlu0 %981
    %v983 = vsel %vm519, %v979, 0.0
    %984 = vadd.xlane.f32.xlu0 %v983
    %v985 = vpop.xlane.xlu0 %984
    %v986 = vrcp.pop %v982
    %v987 = vrcp.pop %v985
    %v988 = vmul.f32 %v977, %v986
    %v989 = vmul.f32 %v979, %v987
    %v990 = vpack.c.bf16 %v988, %v988
    %v991 = vpack.c.bf16 %v989, %v989
    %992 = vrot.lane.b32.xlu0 %v544, 96
    %v993 = vpop.permute.xlu0 %992
    %v995 = vsel %vm519, %v990, 0
    %v998 = vsel %vm136, %v993, 0
    %1000 = vmatprep.subr.bf16.mxu0 0
    %1001 = vmatpush1.bf16.msra.mxu0 %v998
    %1002 = vmatprep.subr.bf16.mxu0 0
    %1003 = vmatpush1.bf16.msra.mxu0 0
    %1004 = vmatprep.subr.bf16.mxu0 0
    %1005 = vmatpush1.bf16.msra.mxu0 0
    %1006 = vmatprep.subr.bf16.mxu0 0
    %1007 = vmatpush1.bf16.msra.mxu0 0
    %1008 = vmatprep.subr.bf16.mxu0 0
    %1009 = vmatpush1.bf16.msra.mxu0 0
    %1010 = vmatprep.subr.bf16.mxu0 0
    %1011 = vmatpush1.bf16.msra.mxu0 0
    %1012 = vmatprep.subr.bf16.mxu0 0
    %1013 = vmatpush1.bf16.msra.mxu0 0
    %1014 = vmatprep.subr.bf16.mxu0 0
    %1015 = vmatpush1.bf16.msra.mxu0 0
    %1016 = vmatprep.subr.bf16.mxu0 0
    %1017 = vmatpush1.bf16.msra.mxu0 0
    %1018 = vmatprep.subr.bf16.mxu0 0
    %1019 = vmatpush1.bf16.msra.mxu0 0
    %1020 = vmatprep.subr.bf16.mxu0 0
    %1021 = vmatpush1.bf16.msra.mxu0 0
    %1022 = vmatprep.subr.bf16.mxu0 0
    %1023 = vmatpush1.bf16.msra.mxu0 0
    %1024 = vmatprep.subr.bf16.mxu0 0
    %1025 = vmatpush1.bf16.msra.mxu0 0
    %1026 = vmatprep.subr.bf16.mxu0 0
    %1027 = vmatpush1.bf16.msra.mxu0 0
    %1028 = vmatprep.subr.bf16.mxu0 0
    %1029 = vmatpush1.bf16.msra.mxu0 0
    %1030 = vmatprep.subr.bf16.mxu0 0
    %1031 = vmatpush1.bf16.msra.mxu0 0
    %1032 = vmatprep.mubr.bf16.mxu0 0
    %1033 = vmatmul.mubr.bf16.gmra.mrb[0].mxu0 %v995
    %v1034 = vpop.f32.mrb[0].mxu0
    %v1035 = vadd.f32 0.0, %v1034
    %v1036 = vpop.f32.mrb[0].mxu0
    %v1037 = vpop.f32.mrb[0].mxu0
    %v1038 = vpop.f32.mrb[0].mxu0
    %1039 = vdwg.mxu0
    %1040 = vrot.lane.b32.xlu0 %v545, 96
    %v1041 = vpop.permute.xlu0 %1040
    %v1043 = vsel %vm519, %v991, 0
    %v1046 = vsel %vm136, %v1041, 0
    %1048 = vmatprep.subr.bf16.mxu0 0
    %1049 = vmatpush1.bf16.msra.mxu0 %v1046
    %1050 = vmatprep.subr.bf16.mxu0 0
    %1051 = vmatpush1.bf16.msra.mxu0 0
    %1052 = vmatprep.subr.bf16.mxu0 0
    %1053 = vmatpush1.bf16.msra.mxu0 0
    %1054 = vmatprep.subr.bf16.mxu0 0
    %1055 = vmatpush1.bf16.msra.mxu0 0
    %1056 = vmatprep.subr.bf16.mxu0 0
    %1057 = vmatpush1.bf16.msra.mxu0 0
    %1058 = vmatprep.subr.bf16.mxu0 0
    %1059 = vmatpush1.bf16.msra.mxu0 0
    %1060 = vmatprep.subr.bf16.mxu0 0
    %1061 = vmatpush1.bf16.msra.mxu0 0
    %1062 = vmatprep.subr.bf16.mxu0 0
    %1063 = vmatpush1.bf16.msra.mxu0 0
    %1064 = vmatprep.subr.bf16.mxu0 0
    %1065 = vmatpush1.bf16.msra.mxu0 0
    %1066 = vmatprep.subr.bf16.mxu0 0
    %1067 = vmatpush1.bf16.msra.mxu0 0
    %1068 = vmatprep.subr.bf16.mxu0 0
    %1069 = vmatpush1.bf16.msra.mxu0 0
    %1070 = vmatprep.subr.bf16.mxu0 0
    %1071 = vmatpush1.bf16.msra.mxu0 0
    %1072 = vmatprep.subr.bf16.mxu0 0
    %1073 = vmatpush1.bf16.msra.mxu0 0
    %1074 = vmatprep.subr.bf16.mxu0 0
    %1075 = vmatpush1.bf16.msra.mxu0 0
    %1076 = vmatprep.subr.bf16.mxu0 0
    %1077 = vmatpush1.bf16.msra.mxu0 0
    %1078 = vmatprep.subr.bf16.mxu0 0
    %1079 = vmatpush1.bf16.msra.mxu0 0
    %1080 = vmatprep.mubr.bf16.mxu0 0
    %1081 = vmatmul.mubr.bf16.gmra.mrb[0].mxu0 %v1043
    %v1082 = vpop.f32.mrb[0].mxu0
    %v1083 = vadd.f32 0.0, %v1082
    %v1084 = vpop.f32.mrb[0].mxu0
    %v1085 = vpop.f32.mrb[0].mxu0
    %v1086 = vpop.f32.mrb[0].mxu0
    %1087 = vdwg.mxu0
    %1088 = vrot.lane.b32.xlu0 %v420, 80
    %v1089 = vpop.permute.xlu0 %1088
    %1090 = vrot.lane.b32.xlu0 %v422, 80
    %v1091 = vpop.permute.xlu0 %1090
    %v1093 = vsel %vm424, %v1089, 0
    %v1096 = vsel %vm424, %v1091, 0
    %1098 = vmatprep.subr.bf16.mxu0 0
    %1099 = vmatpush1.bf16.xpose.msra.mxu0 %v1096
    %1100 = vmatprep.subr.bf16.mxu0 0
    %1101 = vmatpush1.bf16.xpose.msra.mxu0 0
    %1102 = vmatprep.subr.bf16.mxu0 0
    %1103 = vmatpush1.bf16.xpose.msra.mxu0 0
    %1104 = vmatprep.subr.bf16.mxu0 0
    %1105 = vmatpush1.bf16.xpose.msra.mxu0 0
    %1106 = vmatprep.subr.bf16.mxu0 0
    %1107 = vmatpush1.bf16.xpose.msra.mxu0 0
    %1108 = vmatprep.subr.bf16.mxu0 0
    %1109 = vmatpush1.bf16.xpose.msra.mxu0 0
    %1110 = vmatprep.subr.bf16.mxu0 0
    %1111 = vmatpush1.bf16.xpose.msra.mxu0 0
    %1112 = vmatprep.subr.bf16.mxu0 0
    %1113 = vmatpush1.bf16.xpose.msra.mxu0 0
    %1114 = vmatprep.subr.bf16.mxu0 0
    %1115 = vmatpush1.bf16.xpose.msra.mxu0 0
    %1116 = vmatprep.subr.bf16.mxu0 0
    %1117 = vmatpush1.bf16.xpose.msra.mxu0 0
    %1118 = vmatprep.subr.bf16.mxu0 0
    %1119 = vmatpush1.bf16.xpose.msra.mxu0 0
    %1120 = vmatprep.subr.bf16.mxu0 0
    %1121 = vmatpush1.bf16.xpose.msra.mxu0 0
    %1122 = vmatprep.subr.bf16.mxu0 0
    %1123 = vmatpush1.bf16.xpose.msra.mxu0 0
    %1124 = vmatprep.subr.bf16.mxu0 0
    %1125 = vmatpush1.bf16.xpose.msra.mxu0 0
    %1126 = vmatprep.subr.bf16.mxu0 0
    %1127 = vmatpush1.bf16.xpose.msra.mxu0 0
    %1128 = vmatprep.subr.bf16.mxu0 0
    %1129 = vmatpush1.bf16.xpose.msra.mxu0 0
    %1130 = vmatprep.mubr.bf16.mxu0 0
    %1131 = vmatmul.mubr.bf16.gmra.mrb[0].mxu0 %v1093
    %v1132 = vpop.f32.mrb[0].mxu0
    %v1133 = vadd.f32 0.0, %v1132
    %v1134 = vpop.f32.mrb[0].mxu0
    %v1135 = vpop.f32.mrb[0].mxu0
    %v1136 = vpop.f32.mrb[0].mxu0
    %1137 = vdwg.mxu0
    %1138 = vrot.lane.b32.xlu0 %v421, 80
    %v1139 = vpop.permute.xlu0 %1138
    %1140 = vrot.lane.b32.xlu0 %v423, 80
    %v1141 = vpop.permute.xlu0 %1140
    %v1143 = vsel %vm424, %v1139, 0
    %v1146 = vsel %vm424, %v1141, 0
    %1148 = vmatprep.subr.bf16.mxu0 0
    %1149 = vmatpush1.bf16.xpose.msra.mxu0 %v1146
    %1150 = vmatprep.subr.bf16.mxu0 0
    %1151 = vmatpush1.bf16.xpose.msra.mxu0 0
    %1152 = vmatprep.subr.bf16.mxu0 0
    %1153 = vmatpush1.bf16.xpose.msra.mxu0 0
    %1154 = vmatprep.subr.bf16.mxu0 0
    %1155 = vmatpush1.bf16.xpose.msra.mxu0 0
    %1156 = vmatprep.subr.bf16.mxu0 0
    %1157 = vmatpush1.bf16.xpose.msra.mxu0 0
    %1158 = vmatprep.subr.bf16.mxu0 0
    %1159 = vmatpush1.bf16.xpose.msra.mxu0 0
    %1160 = vmatprep.subr.bf16.mxu0 0
    %1161 = vmatpush1.bf16.xpose.msra.mxu0 0
    %1162 = vmatprep.subr.bf16.mxu0 0
    %1163 = vmatpush1.bf16.xpose.msra.mxu0 0
    %1164 = vmatprep.subr.bf16.mxu0 0
    %1165 = vmatpush1.bf16.xpose.msra.mxu0 0
    %1166 = vmatprep.subr.bf16.mxu0 0
    %1167 = vmatpush1.bf16.xpose.msra.mxu0 0
    %1168 = vmatprep.subr.bf16.mxu0 0
    %1169 = vmatpush1.bf16.xpose.msra.mxu0 0
    %1170 = vmatprep.subr.bf16.mxu0 0
    %1171 = vmatpush1.bf16.xpose.msra.mxu0 0
    %1172 = vmatprep.subr.bf16.mxu0 0
    %1173 = vmatpush1.bf16.xpose.msra.mxu0 0
    %1174 = vmatprep.subr.bf16.mxu0 0
    %1175 = vmatpush1.bf16.xpose.msra.mxu0 0
    %1176 = vmatprep.subr.bf16.mxu0 0
    %1177 = vmatpush1.bf16.xpose.msra.mxu0 0
    %1178 = vmatprep.subr.bf16.mxu0 0
    %1179 = vmatpush1.bf16.xpose.msra.mxu0 0
    %1180 = vmatprep.mubr.bf16.mxu0 0
    %1181 = vmatmul.mubr.bf16.gmra.mrb[0].mxu0 %v1143
    %v1182 = vpop.f32.mrb[0].mxu0
    %v1183 = vadd.f32 0.0, %v1182
    %v1184 = vpop.f32.mrb[0].mxu0
    %v1185 = vpop.f32.mrb[0].mxu0
    %v1186 = vpop.f32.mrb[0].mxu0
    %1187 = vdwg.mxu0
    %v1188 = vmul.f32 %v1133, 0.25
    %v1189 = vmul.f32 %v1183, 0.25
    %v1190 = vsel %vm519, %v1188, -inf
    %1191 = vmax.xlane.f32.xlu0 %v1190
    %v1192 = vpop.xlane.xlu0 %1191
    %v1193 = vsel %vm519, %v1189, -inf
    %1194 = vmax.xlane.f32.xlu0 %v1193
    %v1195 = vpop.xlane.xlu0 %1194
    %v1196 = vsub.f32 %v1188, %v1192
    %v1197 = vsub.f32 %v1189, %v1195
    %v1198 = vmul.f32 %v1196, 1.442695
    %v1199 = vpow.pop %v1198
    %v1200 = vmul.f32 %v1197, 1.442695
    %v1201 = vpow.pop %v1200
    %v1202 = vsel %vm519, %v1199, 0.0
    %1203 = vadd.xlane.f32.xlu0 %v1202
    %v1204 = vpop.xlane.xlu0 %1203
    %v1205 = vsel %vm519, %v1201, 0.0
    %1206 = vadd.xlane.f32.xlu0 %v1205
    %v1207 = vpop.xlane.xlu0 %1206
    %v1208 = vrcp.pop %v1204
    %v1209 = vrcp.pop %v1207
    %v1210 = vmul.f32 %v1199, %v1208
    %v1211 = vmul.f32 %v1201, %v1209
    %v1212 = vpack.c.bf16 %v1210, %v1210
    %v1213 = vpack.c.bf16 %v1211, %v1211
    %1214 = vrot.lane.b32.xlu0 %v544, 80
    %v1215 = vpop.permute.xlu0 %1214
    %v1217 = vsel %vm519, %v1212, 0
    %v1220 = vsel %vm136, %v1215, 0
    %1222 = vmatprep.subr.bf16.mxu0 0
    %1223 = vmatpush1.bf16.msra.mxu0 %v1220
    %1224 = vmatprep.subr.bf16.mxu0 0
    %1225 = vmatpush1.bf16.msra.mxu0 0
    %1226 = vmatprep.subr.bf16.mxu0 0
    %1227 = vmatpush1.bf16.msra.mxu0 0
    %1228 = vmatprep.subr.bf16.mxu0 0
    %1229 = vmatpush1.bf16.msra.mxu0 0
    %1230 = vmatprep.subr.bf16.mxu0 0
    %1231 = vmatpush1.bf16.msra.mxu0 0
    %1232 = vmatprep.subr.bf16.mxu0 0
    %1233 = vmatpush1.bf16.msra.mxu0 0
    %1234 = vmatprep.subr.bf16.mxu0 0
    %1235 = vmatpush1.bf16.msra.mxu0 0
    %1236 = vmatprep.subr.bf16.mxu0 0
    %1237 = vmatpush1.bf16.msra.mxu0 0
    %1238 = vmatprep.subr.bf16.mxu0 0
    %1239 = vmatpush1.bf16.msra.mxu0 0
    %1240 = vmatprep.subr.bf16.mxu0 0
    %1241 = vmatpush1.bf16.msra.mxu0 0
    %1242 = vmatprep.subr.bf16.mxu0 0
    %1243 = vmatpush1.bf16.msra.mxu0 0
    %1244 = vmatprep.subr.bf16.mxu0 0
    %1245 = vmatpush1.bf16.msra.mxu0 0
    %1246 = vmatprep.subr.bf16.mxu0 0
    %1247 = vmatpush1.bf16.msra.mxu0 0
    %1248 = vmatprep.subr.bf16.mxu0 0
    %1249 = vmatpush1.bf16.msra.mxu0 0
    %1250 = vmatprep.subr.bf16.mxu0 0
    %1251 = vmatpush1.bf16.msra.mxu0 0
    %1252 = vmatprep.subr.bf16.mxu0 0
    %1253 = vmatpush1.bf16.msra.mxu0 0
    %1254 = vmatprep.mubr.bf16.mxu0 0
    %1255 = vmatmul.mubr.bf16.gmra.mrb[0].mxu0 %v1217
    %v1256 = vpop.f32.mrb[0].mxu0
    %v1257 = vadd.f32 0.0, %v1256
    %v1258 = vpop.f32.mrb[0].mxu0
    %v1259 = vpop.f32.mrb[0].mxu0
    %v1260 = vpop.f32.mrb[0].mxu0
    %1261 = vdwg.mxu0
    %1262 = vrot.lane.b32.xlu0 %v545, 80
    %v1263 = vpop.permute.xlu0 %1262
    %v1265 = vsel %vm519, %v1213, 0
    %v1268 = vsel %vm136, %v1263, 0
    %1270 = vmatprep.subr.bf16.mxu0 0
    %1271 = vmatpush1.bf16.msra.mxu0 %v1268
    %1272 = vmatprep.subr.bf16.mxu0 0
    %1273 = vmatpush1.bf16.msra.mxu0 0
    %1274 = vmatprep.subr.bf16.mxu0 0
    %1275 = vmatpush1.bf16.msra.mxu0 0
    %1276 = vmatprep.subr.bf16.mxu0 0
    %1277 = vmatpush1.bf16.msra.mxu0 0
    %1278 = vmatprep.subr.bf16.mxu0 0
    %1279 = vmatpush1.bf16.msra.mxu0 0
    %1280 = vmatprep.subr.bf16.mxu0 0
    %1281 = vmatpush1.bf16.msra.mxu0 0
    %1282 = vmatprep.subr.bf16.mxu0 0
    %1283 = vmatpush1.bf16.msra.mxu0 0
    %1284 = vmatprep.subr.bf16.mxu0 0
    %1285 = vmatpush1.bf16.msra.mxu0 0
    %1286 = vmatprep.subr.bf16.mxu0 0
    %1287 = vmatpush1.bf16.msra.mxu0 0
    %1288 = vmatprep.subr.bf16.mxu0 0
    %1289 = vmatpush1.bf16.msra.mxu0 0
    %1290 = vmatprep.subr.bf16.mxu0 0
    %1291 = vmatpush1.bf16.msra.mxu0 0
    %1292 = vmatprep.subr.bf16.mxu0 0
    %1293 = vmatpush1.bf16.msra.mxu0 0
    %1294 = vmatprep.subr.bf16.mxu0 0
    %1295 = vmatpush1.bf16.msra.mxu0 0
    %1296 = vmatprep.subr.bf16.mxu0 0
    %1297 = vmatpush1.bf16.msra.mxu0 0
    %1298 = vmatprep.subr.bf16.mxu0 0
    %1299 = vmatpush1.bf16.msra.mxu0 0
    %1300 = vmatprep.subr.bf16.mxu0 0
    %1301 = vmatpush1.bf16.msra.mxu0 0
    %1302 = vmatprep.mubr.bf16.mxu0 0
    %1303 = vmatmul.mubr.bf16.gmra.mrb[0].mxu0 %v1265
    %v1304 = vpop.f32.mrb[0].mxu0
    %v1305 = vadd.f32 0.0, %v1304
    %v1306 = vpop.f32.mrb[0].mxu0
    %v1307 = vpop.f32.mrb[0].mxu0
    %v1308 = vpop.f32.mrb[0].mxu0
    %1309 = vdwg.mxu0
    %1312 = vrot.lane.b32.xlu0 %v812, 16
    %v1313 = vpop.permute.xlu0 %1312
    %1314 = vrot.lane.b32.xlu0 %v861, 16
    %v1315 = vpop.permute.xlu0 %1314
    %1320 = vrot.lane.b32.xlu0 %v1035, 32
    %v1321 = vpop.permute.xlu0 %1320
    %1322 = vrot.lane.b32.xlu0 %v1083, 32
    %v1323 = vpop.permute.xlu0 %1322
    %1328 = vrot.lane.b32.xlu0 %v1257, 48
    %v1329 = vpop.permute.xlu0 %1328
    %1330 = vrot.lane.b32.xlu0 %v1305, 48
    %v1331 = vpop.permute.xlu0 %1330
    %v1334 = vsel %vm424, %v587, %v1313
    %v1335 = vsel %vm424, %v633, %v1315
    %vm1336 = vcmask 261120
    %v1337 = vsel %vm1336, %v1334, %v1321
    %v1338 = vsel %vm1336, %v1335, %v1323
    %vm1339 = vcmask 392192
    %v1340 = vsel %vm1339, %v1337, %v1329
    %v1341 = vsel %vm1339, %v1338, %v1331
    %v1342 = vpack.c.bf16 %v1341, %v1340
    %v1343 = vld [vmem:[%s6] sm:$0xf]
    %v1344 = vld [vmem:[%s6 + $0x4] sm:$0xf]
    %v1345 = vld [vmem:[%s6 + $0x8] sm:$0xf]
    %v1346 = vld [vmem:[%s6 + $0xc] sm:$0xf]
    %v1347 = vld [vmem:[%s6 + $0x10] sm:$0xf]
    %v1348 = vld [vmem:[%s6 + $0x14] sm:$0xf]
    %v1349 = vld [vmem:[%s6 + $0x18] sm:$0xf]
    %v1350 = vld [vmem:[%s6 + $0x1c] sm:$0xf]
    %v1351 = vlaneseq
    %v1352 = vshrl.u32 %v1351, 7
    %v1353 = vsub.s32 3, %v1352
    %v1354 = vrot.slane %v113, %v1353
    %v1363 = vunpack.c.l.b16 %v1343
    %v1364 = vunpack.c.l.b16 %v1344
    %v1365 = vunpack.c.l.b16 %v1345
    %v1366 = vunpack.c.l.b16 %v1346
    %v1367 = vunpack.c.l.b16 %v1347
    %v1368 = vunpack.c.l.b16 %v1348
    %v1369 = vunpack.c.l.b16 %v1349
    %v1370 = vunpack.c.l.b16 %v1350
    %v1371 = vpack.c.b16 %v1364, %v1363
    %v1372 = vpack.c.b16 %v1366, %v1365
    %v1373 = vpack.c.b16 %v1368, %v1367
    %v1374 = vpack.c.b16 %v1370, %v1369
    %v1380 = vsel %vm221, %v1342, 0
    %1382 = vmatprep.subr.bf16.mxu0 0
    %1383 = vmatpush1.bf16.msra.mxu0 %v1371
    %1384 = vmatprep.subr.bf16.mxu0 0
    %1385 = vmatpush1.bf16.msra.mxu0 %v1372
    %1386 = vmatprep.subr.bf16.mxu0 0
    %1387 = vmatpush1.bf16.msra.mxu0 %v1373
    %1388 = vmatprep.subr.bf16.mxu0 0
    %1389 = vmatpush1.bf16.msra.mxu0 %v1374
    %1390 = vmatprep.subr.bf16.mxu0 0
    %1391 = vmatpush1.bf16.msra.mxu0 0
    %1392 = vmatprep.subr.bf16.mxu0 0
    %1393 = vmatpush1.bf16.msra.mxu0 0
    %1394 = vmatprep.subr.bf16.mxu0 0
    %1395 = vmatpush1.bf16.msra.mxu0 0
    %1396 = vmatprep.subr.bf16.mxu0 0
    %1397 = vmatpush1.bf16.msra.mxu0 0
    %1398 = vmatprep.subr.bf16.mxu0 0
    %1399 = vmatpush1.bf16.msra.mxu0 0
    %1400 = vmatprep.subr.bf16.mxu0 0
    %1401 = vmatpush1.bf16.msra.mxu0 0
    %1402 = vmatprep.subr.bf16.mxu0 0
    %1403 = vmatpush1.bf16.msra.mxu0 0
    %1404 = vmatprep.subr.bf16.mxu0 0
    %1405 = vmatpush1.bf16.msra.mxu0 0
    %1406 = vmatprep.subr.bf16.mxu0 0
    %1407 = vmatpush1.bf16.msra.mxu0 0
    %1408 = vmatprep.subr.bf16.mxu0 0
    %1409 = vmatpush1.bf16.msra.mxu0 0
    %1410 = vmatprep.subr.bf16.mxu0 0
    %1411 = vmatpush1.bf16.msra.mxu0 0
    %1412 = vmatprep.subr.bf16.mxu0 0
    %1413 = vmatpush1.bf16.msra.mxu0 0
    %1414 = vmatprep.mubr.bf16.mxu0 0
    %1415 = vmatmul.mubr.bf16.gmra.mrb[0].mxu0 %v1380
    %v1416 = vpop.f32.mrb[0].mxu0
    %v1417 = vadd.f32 %v1354, %v1416
    %v1418 = vpop.f32.mrb[0].mxu0
    %v1419 = vpop.f32.mrb[0].mxu0
    %v1420 = vadd.f32 %v1354, %v1419
    %v1421 = vpop.f32.mrb[0].mxu0
    %1422 = vdwg.mxu0
    %v1423 = vadd.f32 %v182, %v1417
    %v1424 = vadd.f32 %v183, %v1420
    %v1425 = vsel %vm221, %v1423, 0.0
    %1426 = vadd.xlane.f32.xlu0 %v1425
    %v1427 = vpop.xlane.xlu0 %1426
    %v1428 = vsel %vm221, %v1424, 0.0
    %1429 = vadd.xlane.f32.xlu0 %v1428
    %v1430 = vpop.xlane.xlu0 %1429
    %v1431 = vrcp.pop 64.0
    %v1432 = vmul.f32 %v1427, %v1431
    %v1433 = vmul.f32 %v1430, %v1431
    %v1434 = vsub.f32 %v1423, %v1432
    %v1435 = vsub.f32 %v1424, %v1433
    %v1436 = vmul.f32 %v1434, %v1434
    %v1437 = vmul.f32 %v1435, %v1435
    %v1438 = vsel %vm221, %v1436, 0.0
    %1439 = vadd.xlane.f32.xlu0 %v1438
    %v1440 = vpop.xlane.xlu0 %1439
    %v1441 = vsel %vm221, %v1437, 0.0
    %1442 = vadd.xlane.f32.xlu0 %v1441
    %v1443 = vpop.xlane.xlu0 %1442
    %v1444 = vmul.f32 %v1440, %v1431
    %v1445 = vmul.f32 %v1443, %v1431
    %v1446 = vadd.f32 %v1444, 1e-05
    %v1447 = vadd.f32 %v1445, 1e-05
    %v1448 = vrsqrt.pop %v1446
    %v1449 = vrsqrt.pop %v1447
    %v1450 = vmul.f32 %v1434, %v1448
    %v1451 = vmul.f32 %v1435, %v1449
    %v1452 = vlaneseq
    %v1453 = vshrl.u32 %v1452, 7
    %v1454 = vsub.s32 5, %v1453
    %v1455 = vrot.slane %v113, %v1454
    %v1456 = vmul.f32 %v1450, %v1455
    %v1457 = vmul.f32 %v1451, %v1455
    %v1458 = vlaneseq
    %v1459 = vshrl.u32 %v1458, 7
    %v1460 = vsub.s32 6, %v1459
    %v1461 = vrot.slane %v113, %v1460
    %v1462 = vadd.f32 %v1456, %v1461
    %v1463 = vadd.f32 %v1457, %v1461
    %v1464 = vpack.c.bf16 %v1463, %v1462
    %v1465 = vld [vmem:[%s7] sm:$0xff]
    %v1466 = vld [vmem:[%s7 + $0x8] sm:$0xff]
    %v1467 = vld [vmem:[%s7 + $0x10] sm:$0xff]
    %v1468 = vld [vmem:[%s7 + $0x18] sm:$0xff]
    %v1469 = vld [vmem:[%s7 + $0x20] sm:$0xff]
    %v1470 = vld [vmem:[%s7 + $0x28] sm:$0xff]
    %v1471 = vld [vmem:[%s7 + $0x30] sm:$0xff]
    %v1472 = vld [vmem:[%s7 + $0x38] sm:$0xff]
    %v1474 = vlaneseq
    %v1475 = vshrl.u32 %v1474, 7
    %v1476 = vsub.s32 0, %v1475
    %v1477 = vrot.slane %v116, %v1476
    %v1478 = vlaneseq
    %v1479 = vshrl.u32 %v1478, 7
    %v1480 = vsub.s32 2, %v1479
    %v1481 = vrot.slane %v116, %v1480
    %v1484 = vlaneseq
    %v1485 = vshrl.u32 %v1484, 7
    %v1486 = vsub.s32 0, %v1485
    %v1487 = vrot.slane %v1477, %v1486
    %v1488 = vlaneseq
    %v1489 = vshrl.u32 %v1488, 7
    %v1490 = vsub.s32 0, %v1489
    %v1491 = vrot.slane %v1481, %v1490
    %v1500 = vunpack.c.l.b16 %v1465
    %v1501 = vunpack.c.h.b16 %v1465
    %v1502 = vunpack.c.l.b16 %v1466
    %v1503 = vunpack.c.h.b16 %v1466
    %v1504 = vunpack.c.l.b16 %v1467
    %v1505 = vunpack.c.h.b16 %v1467
    %v1506 = vunpack.c.l.b16 %v1468
    %v1507 = vunpack.c.h.b16 %v1468
    %v1508 = vunpack.c.l.b16 %v1469
    %v1509 = vunpack.c.h.b16 %v1469
    %v1510 = vunpack.c.l.b16 %v1470
    %v1511 = vunpack.c.h.b16 %v1470
    %v1512 = vunpack.c.l.b16 %v1471
    %v1513 = vunpack.c.h.b16 %v1471
    %v1514 = vunpack.c.l.b16 %v1472
    %v1515 = vunpack.c.h.b16 %v1472
    %v1516 = vpack.c.b16 %v1502, %v1500
    %v1517 = vpack.c.b16 %v1503, %v1501
    %v1518 = vpack.c.b16 %v1506, %v1504
    %v1519 = vpack.c.b16 %v1507, %v1505
    %v1520 = vpack.c.b16 %v1510, %v1508
    %v1521 = vpack.c.b16 %v1511, %v1509
    %v1522 = vpack.c.b16 %v1514, %v1512
    %v1523 = vpack.c.b16 %v1515, %v1513
    %v1533 = vsel %vm221, %v1464, 0
    %1535 = vmatprep.subr.bf16.mxu0 %v1517
    %1536 = vmatpush1.bf16.msra.mxu0 %v1516
    %1537 = vmatprep.subr.bf16.mxu0 %v1519
    %1538 = vmatpush1.bf16.msra.mxu0 %v1518
    %1539 = vmatprep.subr.bf16.mxu0 %v1521
    %1540 = vmatpush1.bf16.msra.mxu0 %v1520
    %1541 = vmatprep.subr.bf16.mxu0 %v1523
    %1542 = vmatpush1.bf16.msra.mxu0 %v1522
    %1543 = vmatprep.subr.bf16.mxu0 0
    %1544 = vmatpush1.bf16.msra.mxu0 0
    %1545 = vmatprep.subr.bf16.mxu0 0
    %1546 = vmatpush1.bf16.msra.mxu0 0
    %1547 = vmatprep.subr.bf16.mxu0 0
    %1548 = vmatpush1.bf16.msra.mxu0 0
    %1549 = vmatprep.subr.bf16.mxu0 0
    %1550 = vmatpush1.bf16.msra.mxu0 0
    %1551 = vmatprep.subr.bf16.mxu0 0
    %1552 = vmatpush1.bf16.msra.mxu0 0
    %1553 = vmatprep.subr.bf16.mxu0 0
    %1554 = vmatpush1.bf16.msra.mxu0 0
    %1555 = vmatprep.subr.bf16.mxu0 0
    %1556 = vmatpush1.bf16.msra.mxu0 0
    %1557 = vmatprep.subr.bf16.mxu0 0
    %1558 = vmatpush1.bf16.msra.mxu0 0
    %1559 = vmatprep.subr.bf16.mxu0 0
    %1560 = vmatpush1.bf16.msra.mxu0 0
    %1561 = vmatprep.subr.bf16.mxu0 0
    %1562 = vmatpush1.bf16.msra.mxu0 0
    %1563 = vmatprep.subr.bf16.mxu0 0
    %1564 = vmatpush1.bf16.msra.mxu0 0
    %1565 = vmatprep.subr.bf16.mxu0 0
    %1566 = vmatpush1.bf16.msra.mxu0 0
    %1567 = vmatprep.mubr.bf16.mxu0 0
    %1568 = vmatmul.mubr.bf16.gmra.mrb[0].mxu0 %v1533
    %v1569 = vpop.f32.mrb[0].mxu0
    %v1570 = vadd.f32 %v1487, %v1569
    %v1571 = vpop.f32.mrb[0].mxu0
    %v1572 = vadd.f32 %v1491, %v1571
    %v1573 = vpop.f32.mrb[0].mxu0
    %v1574 = vadd.f32 %v1487, %v1573
    %v1575 = vpop.f32.mrb[0].mxu0
    %v1576 = vadd.f32 %v1491, %v1575
    %1577 = vdwg.mxu0
    %v1578 = vmax.f32 %v1570, 0.0
    %v1579 = vmax.f32 %v1572, 0.0
    %v1580 = vmax.f32 %v1574, 0.0
    %v1581 = vmax.f32 %v1576, 0.0
    %v1582 = vpack.c.bf16 %v1580, %v1578
    %v1583 = vpack.c.bf16 %v1581, %v1579
    %v1584 = vld [vmem:[%s8] sm:$0xf]
    %v1585 = vld [vmem:[%s8 + $0x4] sm:$0xf]
    %v1586 = vld [vmem:[%s8 + $0x8] sm:$0xf]
    %v1587 = vld [vmem:[%s8 + $0xc] sm:$0xf]
    %v1588 = vld [vmem:[%s8 + $0x10] sm:$0xf]
    %v1589 = vld [vmem:[%s8 + $0x14] sm:$0xf]
    %v1590 = vld [vmem:[%s8 + $0x18] sm:$0xf]
    %v1591 = vld [vmem:[%s8 + $0x1c] sm:$0xf]
    %v1592 = vld [vmem:[%s8 + $0x20] sm:$0xf]
    %v1593 = vld [vmem:[%s8 + $0x24] sm:$0xf]
    %v1594 = vld [vmem:[%s8 + $0x28] sm:$0xf]
    %v1595 = vld [vmem:[%s8 + $0x2c] sm:$0xf]
    %v1596 = vld [vmem:[%s8 + $0x30] sm:$0xf]
    %v1597 = vld [vmem:[%s8 + $0x34] sm:$0xf]
    %v1598 = vld [vmem:[%s8 + $0x38] sm:$0xf]
    %v1599 = vld [vmem:[%s8 + $0x3c] sm:$0xf]
    %v1600 = vld [vmem:[%s8 + $0x40] sm:$0xf]
    %v1601 = vld [vmem:[%s8 + $0x44] sm:$0xf]
    %v1602 = vld [vmem:[%s8 + $0x48] sm:$0xf]
    %v1603 = vld [vmem:[%s8 + $0x4c] sm:$0xf]
    %v1604 = vld [vmem:[%s8 + $0x50] sm:$0xf]
    %v1605 = vld [vmem:[%s8 + $0x54] sm:$0xf]
    %v1606 = vld [vmem:[%s8 + $0x58] sm:$0xf]
    %v1607 = vld [vmem:[%s8 + $0x5c] sm:$0xf]
    %v1608 = vld [vmem:[%s8 + $0x60] sm:$0xf]
    %v1609 = vld [vmem:[%s8 + $0x64] sm:$0xf]
    %v1610 = vld [vmem:[%s8 + $0x68] sm:$0xf]
    %v1611 = vld [vmem:[%s8 + $0x6c] sm:$0xf]
    %v1612 = vld [vmem:[%s8 + $0x70] sm:$0xf]
    %v1613 = vld [vmem:[%s8 + $0x74] sm:$0xf]
    %v1614 = vld [vmem:[%s8 + $0x78] sm:$0xf]
    %v1615 = vld [vmem:[%s8 + $0x7c] sm:$0xf]
    %v1616 = vlaneseq
    %v1617 = vshrl.u32 %v1616, 7
    %v1618 = vsub.s32 4, %v1617
    %v1619 = vrot.slane %v113, %v1618
    %v1652 = vunpack.c.l.b16 %v1584
    %v1653 = vunpack.c.l.b16 %v1585
    %v1654 = vunpack.c.l.b16 %v1586
    %v1655 = vunpack.c.l.b16 %v1587
    %v1656 = vunpack.c.l.b16 %v1588
    %v1657 = vunpack.c.l.b16 %v1589
    %v1658 = vunpack.c.l.b16 %v1590
    %v1659 = vunpack.c.l.b16 %v1591
    %v1660 = vunpack.c.l.b16 %v1592
    %v1661 = vunpack.c.l.b16 %v1593
    %v1662 = vunpack.c.l.b16 %v1594
    %v1663 = vunpack.c.l.b16 %v1595
    %v1664 = vunpack.c.l.b16 %v1596
    %v1665 = vunpack.c.l.b16 %v1597
    %v1666 = vunpack.c.l.b16 %v1598
    %v1667 = vunpack.c.l.b16 %v1599
    %v1668 = vunpack.c.l.b16 %v1600
    %v1669 = vunpack.c.l.b16 %v1601
    %v1670 = vunpack.c.l.b16 %v1602
    %v1671 = vunpack.c.l.b16 %v1603
    %v1672 = vunpack.c.l.b16 %v1604
    %v1673 = vunpack.c.l.b16 %v1605
    %v1674 = vunpack.c.l.b16 %v1606
    %v1675 = vunpack.c.l.b16 %v1607
    %v1676 = vunpack.c.l.b16 %v1608
    %v1677 = vunpack.c.l.b16 %v1609
    %v1678 = vunpack.c.l.b16 %v1610
    %v1679 = vunpack.c.l.b16 %v1611
    %v1680 = vunpack.c.l.b16 %v1612
    %v1681 = vunpack.c.l.b16 %v1613
    %v1682 = vunpack.c.l.b16 %v1614
    %v1683 = vunpack.c.l.b16 %v1615
    %v1684 = vpack.c.b16 %v1653, %v1652
    %v1685 = vpack.c.b16 %v1655, %v1654
    %v1686 = vpack.c.b16 %v1657, %v1656
    %v1687 = vpack.c.b16 %v1659, %v1658
    %v1688 = vpack.c.b16 %v1661, %v1660
    %v1689 = vpack.c.b16 %v1663, %v1662
    %v1690 = vpack.c.b16 %v1665, %v1664
    %v1691 = vpack.c.b16 %v1667, %v1666
    %v1692 = vpack.c.b16 %v1669, %v1668
    %v1693 = vpack.c.b16 %v1671, %v1670
    %v1694 = vpack.c.b16 %v1673, %v1672
    %v1695 = vpack.c.b16 %v1675, %v1674
    %v1696 = vpack.c.b16 %v1677, %v1676
    %v1697 = vpack.c.b16 %v1679, %v1678
    %v1698 = vpack.c.b16 %v1681, %v1680
    %v1699 = vpack.c.b16 %v1683, %v1682
    %1716 = vmatprep.subr.bf16.mxu0 0
    %1717 = vmatpush1.bf16.msra.mxu0 %v1684
    %1718 = vmatprep.subr.bf16.mxu0 0
    %1719 = vmatpush1.bf16.msra.mxu0 %v1685
    %1720 = vmatprep.subr.bf16.mxu0 0
    %1721 = vmatpush1.bf16.msra.mxu0 %v1686
    %1722 = vmatprep.subr.bf16.mxu0 0
    %1723 = vmatpush1.bf16.msra.mxu0 %v1687
    %1724 = vmatprep.subr.bf16.mxu0 0
    %1725 = vmatpush1.bf16.msra.mxu0 %v1688
    %1726 = vmatprep.subr.bf16.mxu0 0
    %1727 = vmatpush1.bf16.msra.mxu0 %v1689
    %1728 = vmatprep.subr.bf16.mxu0 0
    %1729 = vmatpush1.bf16.msra.mxu0 %v1690
    %1730 = vmatprep.subr.bf16.mxu0 0
    %1731 = vmatpush1.bf16.msra.mxu0 %v1691
    %1732 = vmatprep.subr.bf16.mxu0 0
    %1733 = vmatpush1.bf16.msra.mxu0 %v1692
    %1734 = vmatprep.subr.bf16.mxu0 0
    %1735 = vmatpush1.bf16.msra.mxu0 %v1693
    %1736 = vmatprep.subr.bf16.mxu0 0
    %1737 = vmatpush1.bf16.msra.mxu0 %v1694
    %1738 = vmatprep.subr.bf16.mxu0 0
    %1739 = vmatpush1.bf16.msra.mxu0 %v1695
    %1740 = vmatprep.subr.bf16.mxu0 0
    %1741 = vmatpush1.bf16.msra.mxu0 %v1696
    %1742 = vmatprep.subr.bf16.mxu0 0
    %1743 = vmatpush1.bf16.msra.mxu0 %v1697
    %1744 = vmatprep.subr.bf16.mxu0 0
    %1745 = vmatpush1.bf16.msra.mxu0 %v1698
    %1746 = vmatprep.subr.bf16.mxu0 0
    %1747 = vmatpush1.bf16.msra.mxu0 %v1699
    %1748 = vmatprep.mubr.bf16.mxu0 %v1583
    %1749 = vmatmul.mubr.bf16.gmra.mrb[0].mxu0 %v1582
    %v1750 = vpop.f32.mrb[0].mxu0
    %v1751 = vadd.f32 %v1619, %v1750
    %v1752 = vpop.f32.mrb[0].mxu0
    %v1753 = vpop.f32.mrb[0].mxu0
    %v1754 = vadd.f32 %v1619, %v1753
    %v1755 = vpop.f32.mrb[0].mxu0
    %1756 = vdwg.mxu0
    %v1757 = vadd.f32 %v1462, %v1751
    %v1758 = vadd.f32 %v1463, %v1754
    %v1759 = vsel %vm221, %v1757, 0.0
    %1760 = vadd.xlane.f32.xlu0 %v1759
    %v1761 = vpop.xlane.xlu0 %1760
    %v1762 = vsel %vm221, %v1758, 0.0
    %1763 = vadd.xlane.f32.xlu0 %v1762
    %v1764 = vpop.xlane.xlu0 %1763
    %v1765 = vmul.f32 %v1761, %v1431
    %v1766 = vmul.f32 %v1764, %v1431
    %v1767 = vsub.f32 %v1757, %v1765
    %v1768 = vsub.f32 %v1758, %v1766
    %v1769 = vmul.f32 %v1767, %v1767
    %v1770 = vmul.f32 %v1768, %v1768
    %v1771 = vsel %vm221, %v1769, 0.0
    %1772 = vadd.xlane.f32.xlu0 %v1771
    %v1773 = vpop.xlane.xlu0 %1772
    %v1774 = vsel %vm221, %v1770, 0.0
    %1775 = vadd.xlane.f32.xlu0 %v1774
    %v1776 = vpop.xlane.xlu0 %1775
    %v1777 = vmul.f32 %v1773, %v1431
    %v1778 = vmul.f32 %v1776, %v1431
    %v1779 = vadd.f32 %v1777, 1e-05
    %v1780 = vadd.f32 %v1778, 1e-05
    %v1781 = vrsqrt.pop %v1779
    %v1782 = vrsqrt.pop %v1780
    %v1783 = vmul.f32 %v1767, %v1781
    %v1784 = vmul.f32 %v1768, %v1782
    %v1785 = vlaneseq
    %v1786 = vshrl.u32 %v1785, 7
    %v1787 = vsub.s32 7, %v1786
    %v1788 = vrot.slane %v113, %v1787
    %v1789 = vmul.f32 %v1783, %v1788
    %v1790 = vmul.f32 %v1784, %v1788
    %v1791 = vlaneseq
    %v1792 = vshrl.u32 %v1791, 7
    %v1793 = vsub.s32 0, %v1792
    %v1794 = vrot.slane %v114, %v1793
    %v1795 = vadd.f32 %v1789, %v1794
    %v1796 = vadd.f32 %v1790, %v1794
    %v1797 = vpack.c.bf16 %v1795, %v1795
    %v1798 = vpack.c.bf16 %v1796, %v1796
    %v1799 = vld [vmem:[%s9] sm:$0xf]
    %v1800 = vld [vmem:[%s9 + $0x4] sm:$0xf]
    %v1801 = vld [vmem:[%s9 + $0x8] sm:$0xf]
    %v1802 = vld [vmem:[%s9 + $0xc] sm:$0xf]
    %v1803 = vld [vmem:[%s9 + $0x10] sm:$0xf]
    %v1804 = vld [vmem:[%s9 + $0x14] sm:$0xf]
    %v1805 = vld [vmem:[%s9 + $0x18] sm:$0xf]
    %v1806 = vld [vmem:[%s9 + $0x1c] sm:$0xf]
    %v1807 = vlaneseq
    %v1808 = vshrl.u32 %v1807, 7
    %v1809 = vsub.s32 1, %v1808
    %v1810 = vrot.slane %v114, %v1809
    %v1813 = vunpack.c.l.b16 %v1797
    %v1814 = vunpack.c.l.b16 %v1798
    %v1815 = vrot.slane %v1813, 7
    %v1816 = vrot.slane %v1814, 6
    %vm1817 = vcmask 1041409
    %v1818 = vsel %vm1817, %v1816, %v1815
    %v1819 = vpack.c.b16 %v1818, %v1818
    %v1828 = vunpack.c.l.b16 %v1799
    %v1829 = vunpack.c.l.b16 %v1800
    %v1830 = vunpack.c.l.b16 %v1801
    %v1831 = vunpack.c.l.b16 %v1802
    %v1832 = vunpack.c.l.b16 %v1803
    %v1833 = vunpack.c.l.b16 %v1804
    %v1834 = vunpack.c.l.b16 %v1805
    %v1835 = vunpack.c.l.b16 %v1806
    %v1836 = vpack.c.b16 %v1829, %v1828
    %v1837 = vpack.c.b16 %v1831, %v1830
    %v1838 = vpack.c.b16 %v1833, %v1832
    %v1839 = vpack.c.b16 %v1835, %v1834
    %v1845 = vsel %vm221, %v1819, 0
    %1847 = vmatprep.subr.bf16.mxu0 0
    %1848 = vmatpush1.bf16.msra.mxu0 %v1836
    %1849 = vmatprep.subr.bf16.mxu0 0
    %1850 = vmatpush1.bf16.msra.mxu0 %v1837
    %1851 = vmatprep.subr.bf16.mxu0 0
    %1852 = vmatpush1.bf16.msra.mxu0 %v1838
    %1853 = vmatprep.subr.bf16.mxu0 0
    %1854 = vmatpush1.bf16.msra.mxu0 %v1839
    %1855 = vmatprep.subr.bf16.mxu0 0
    %1856 = vmatpush1.bf16.msra.mxu0 0
    %1857 = vmatprep.subr.bf16.mxu0 0
    %1858 = vmatpush1.bf16.msra.mxu0 0
    %1859 = vmatprep.subr.bf16.mxu0 0
    %1860 = vmatpush1.bf16.msra.mxu0 0
    %1861 = vmatprep.subr.bf16.mxu0 0
    %1862 = vmatpush1.bf16.msra.mxu0 0
    %1863 = vmatprep.subr.bf16.mxu0 0
    %1864 = vmatpush1.bf16.msra.mxu0 0
    %1865 = vmatprep.subr.bf16.mxu0 0
    %1866 = vmatpush1.bf16.msra.mxu0 0
    %1867 = vmatprep.subr.bf16.mxu0 0
    %1868 = vmatpush1.bf16.msra.mxu0 0
    %1869 = vmatprep.subr.bf16.mxu0 0
    %1870 = vmatpush1.bf16.msra.mxu0 0
    %1871 = vmatprep.subr.bf16.mxu0 0
    %1872 = vmatpush1.bf16.msra.mxu0 0
    %1873 = vmatprep.subr.bf16.mxu0 0
    %1874 = vmatpush1.bf16.msra.mxu0 0
    %1875 = vmatprep.subr.bf16.mxu0 0
    %1876 = vmatpush1.bf16.msra.mxu0 0
    %1877 = vmatprep.subr.bf16.mxu0 0
    %1878 = vmatpush1.bf16.msra.mxu0 0
    %1879 = vmatprep.mubr.bf16.mxu0 0
    %1880 = vmatmul.mubr.bf16.gmra.mrb[0].mxu0 %v1845
    %v1881 = vpop.f32.mrb[0].mxu0
    %v1882 = vadd.f32 %v1810, %v1881
    %v1883 = vpop.f32.mrb[0].mxu0
    %v1884 = vpop.f32.mrb[0].mxu0
    %v1885 = vpop.f32.mrb[0].mxu0
    %1886 = vdwg.mxu0
    %v1887 = vpack.c.bf16 %v1796, %v1795
    %v1888 = vld [vmem:[%s10] sm:$0xf]
    %v1889 = vld [vmem:[%s10 + $0x4] sm:$0xf]
    %v1890 = vld [vmem:[%s10 + $0x8] sm:$0xf]
    %v1891 = vld [vmem:[%s10 + $0xc] sm:$0xf]
    %v1892 = vld [vmem:[%s10 + $0x10] sm:$0xf]
    %v1893 = vld [vmem:[%s10 + $0x14] sm:$0xf]
    %v1894 = vld [vmem:[%s10 + $0x18] sm:$0xf]
    %v1895 = vld [vmem:[%s10 + $0x1c] sm:$0xf]
    %v1896 = vlaneseq
    %v1897 = vshrl.u32 %v1896, 7
    %v1898 = vsub.s32 2, %v1897
    %v1899 = vrot.slane %v114, %v1898
    %v1908 = vunpack.c.l.b16 %v1888
    %v1909 = vunpack.c.l.b16 %v1889
    %v1910 = vunpack.c.l.b16 %v1890
    %v1911 = vunpack.c.l.b16 %v1891
    %v1912 = vunpack.c.l.b16 %v1892
    %v1913 = vunpack.c.l.b16 %v1893
    %v1914 = vunpack.c.l.b16 %v1894
    %v1915 = vunpack.c.l.b16 %v1895
    %v1916 = vpack.c.b16 %v1909, %v1908
    %v1917 = vpack.c.b16 %v1911, %v1910
    %v1918 = vpack.c.b16 %v1913, %v1912
    %v1919 = vpack.c.b16 %v1915, %v1914
    %v1925 = vsel %vm221, %v1887, 0
    %1927 = vmatprep.subr.bf16.mxu0 0
    %1928 = vmatpush1.bf16.msra.mxu0 %v1916
    %1929 = vmatprep.subr.bf16.mxu0 0
    %1930 = vmatpush1.bf16.msra.mxu0 %v1917
    %1931 = vmatprep.subr.bf16.mxu0 0
    %1932 = vmatpush1.bf16.msra.mxu0 %v1918
    %1933 = vmatprep.subr.bf16.mxu0 0
    %1934 = vmatpush1.bf16.msra.mxu0 %v1919
    %1935 = vmatprep.subr.bf16.mxu0 0
    %1936 = vmatpush1.bf16.msra.mxu0 0
    %1937 = vmatprep.subr.bf16.mxu0 0
    %1938 = vmatpush1.bf16.msra.mxu0 0
    %1939 = vmatprep.subr.bf16.mxu0 0
    %1940 = vmatpush1.bf16.msra.mxu0 0
    %1941 = vmatprep.subr.bf16.mxu0 0
    %1942 = vmatpush1.bf16.msra.mxu0 0
    %1943 = vmatprep.subr.bf16.mxu0 0
    %1944 = vmatpush1.bf16.msra.mxu0 0
    %1945 = vmatprep.subr.bf16.mxu0 0
    %1946 = vmatpush1.bf16.msra.mxu0 0
    %1947 = vmatprep.subr.bf16.mxu0 0
    %1948 = vmatpush1.bf16.msra.mxu0 0
    %1949 = vmatprep.subr.bf16.mxu0 0
    %1950 = vmatpush1.bf16.msra.mxu0 0
    %1951 = vmatprep.subr.bf16.mxu0 0
    %1952 = vmatpush1.bf16.msra.mxu0 0
    %1953 = vmatprep.subr.bf16.mxu0 0
    %1954 = vmatpush1.bf16.msra.mxu0 0
    %1955 = vmatprep.subr.bf16.mxu0 0
    %1956 = vmatpush1.bf16.msra.mxu0 0
    %1957 = vmatprep.subr.bf16.mxu0 0
    %1958 = vmatpush1.bf16.msra.mxu0 0
    %1959 = vmatprep.mubr.bf16.mxu0 0
    %1960 = vmatmul.mubr.bf16.gmra.mrb[0].mxu0 %v1925
    %v1961 = vpop.f32.mrb[0].mxu0
    %v1962 = vadd.f32 %v1899, %v1961
    %v1963 = vpop.f32.mrb[0].mxu0
    %v1964 = vpop.f32.mrb[0].mxu0
    %v1965 = vadd.f32 %v1899, %v1964
    %v1966 = vpop.f32.mrb[0].mxu0
    %1967 = vdwg.mxu0
    %v1968 = vld [vmem:[%s11] sm:$0xf]
    %v1969 = vld [vmem:[%s11 + $0x4] sm:$0xf]
    %v1970 = vld [vmem:[%s11 + $0x8] sm:$0xf]
    %v1971 = vld [vmem:[%s11 + $0xc] sm:$0xf]
    %v1972 = vld [vmem:[%s11 + $0x10] sm:$0xf]
    %v1973 = vld [vmem:[%s11 + $0x14] sm:$0xf]
    %v1974 = vld [vmem:[%s11 + $0x18] sm:$0xf]
    %v1975 = vld [vmem:[%s11 + $0x1c] sm:$0xf]
    %v1976 = vlaneseq
    %v1977 = vshrl.u32 %v1976, 7
    %v1978 = vsub.s32 3, %v1977
    %v1979 = vrot.slane %v114, %v1978
    %v1988 = vunpack.c.l.b16 %v1968
    %v1989 = vunpack.c.l.b16 %v1969
    %v1990 = vunpack.c.l.b16 %v1970
    %v1991 = vunpack.c.l.b16 %v1971
    %v1992 = vunpack.c.l.b16 %v1972
    %v1993 = vunpack.c.l.b16 %v1973
    %v1994 = vunpack.c.l.b16 %v1974
    %v1995 = vunpack.c.l.b16 %v1975
    %v1996 = vpack.c.b16 %v1989, %v1988
    %v1997 = vpack.c.b16 %v1991, %v1990
    %v1998 = vpack.c.b16 %v1993, %v1992
    %v1999 = vpack.c.b16 %v1995, %v1994
    %2004 = vmatprep.subr.bf16.mxu0 0
    %2005 = vmatpush1.bf16.msra.mxu0 %v1996
    %2006 = vmatprep.subr.bf16.mxu0 0
    %2007 = vmatpush1.bf16.msra.mxu0 %v1997
    %2008 = vmatprep.subr.bf16.mxu0 0
    %2009 = vmatpush1.bf16.msra.mxu0 %v1998
    %2010 = vmatprep.subr.bf16.mxu0 0
    %2011 = vmatpush1.bf16.msra.mxu0 %v1999
    %2012 = vmatprep.subr.bf16.mxu0 0
    %2013 = vmatpush1.bf16.msra.mxu0 0
    %2014 = vmatprep.subr.bf16.mxu0 0
    %2015 = vmatpush1.bf16.msra.mxu0 0
    %2016 = vmatprep.subr.bf16.mxu0 0
    %2017 = vmatpush1.bf16.msra.mxu0 0
    %2018 = vmatprep.subr.bf16.mxu0 0
    %2019 = vmatpush1.bf16.msra.mxu0 0
    %2020 = vmatprep.subr.bf16.mxu0 0
    %2021 = vmatpush1.bf16.msra.mxu0 0
    %2022 = vmatprep.subr.bf16.mxu0 0
    %2023 = vmatpush1.bf16.msra.mxu0 0
    %2024 = vmatprep.subr.bf16.mxu0 0
    %2025 = vmatpush1.bf16.msra.mxu0 0
    %2026 = vmatprep.subr.bf16.mxu0 0
    %2027 = vmatpush1.bf16.msra.mxu0 0
    %2028 = vmatprep.subr.bf16.mxu0 0
    %2029 = vmatpush1.bf16.msra.mxu0 0
    %2030 = vmatprep.subr.bf16.mxu0 0
    %2031 = vmatpush1.bf16.msra.mxu0 0
    %2032 = vmatprep.subr.bf16.mxu0 0
    %2033 = vmatpush1.bf16.msra.mxu0 0
    %2034 = vmatprep.subr.bf16.mxu0 0
    %2035 = vmatpush1.bf16.msra.mxu0 0
    %2036 = vmatprep.mubr.bf16.mxu0 0
    %2037 = vmatmul.mubr.bf16.gmra.mrb[0].mxu0 %v1925
    %v2038 = vpop.f32.mrb[0].mxu0
    %v2039 = vadd.f32 %v1979, %v2038
    %v2040 = vpop.f32.mrb[0].mxu0
    %v2041 = vpop.f32.mrb[0].mxu0
    %v2042 = vadd.f32 %v1979, %v2041
    %v2043 = vpop.f32.mrb[0].mxu0
    %2044 = vdwg.mxu0
    %v2047 = vunpack.c.l.s4 1966171168
    %v2048 = vunpack.c.0.s8 %v2047
    %v2049 = vlaneseq
    %v2050 = vshrl.u32 %v2049, 7
    %v2051 = vsub.s32 %v2048, %v2050
    %v2052 = vrot.slane %v1882, %v2051
    %v2053 = vcombine.high %v2052, %v2052
    %v2055 = vunpack.c.l.s4 1966171168
    %v2056 = vunpack.c.0.s8 %v2055
    %v2057 = vlaneseq
    %v2058 = vshrl.u32 %v2057, 7
    %v2059 = vsub.s32 %v2056, %v2058
    %v2060 = vrot.slane %v2052, %v2059
    %v2062 = vunpack.c.l.s4 1966171168
    %v2063 = vunpack.c.0.s8 %v2062
    %v2064 = vlaneseq
    %v2065 = vshrl.u32 %v2064, 7
    %v2066 = vsub.s32 %v2063, %v2065
    %v2067 = vrot.slane %v2053, %v2066
    %v2070 = vpack.c.bf16 %v2060, %v2060
    %v2071 = vpack.c.bf16 %v2067, %v2067
    %v2072 = vpack.c.bf16 %v1962, %v1962
    %v2073 = vpack.c.bf16 %v1965, %v1965
    %v2075 = vsel %vm424, %v2070, 0
    %v2078 = vsel %vm424, %v2072, 0
    %2080 = vmatprep.subr.bf16.mxu0 0
    %2081 = vmatpush1.bf16.xpose.msra.mxu0 %v2078
    %2082 = vmatprep.subr.bf16.mxu0 0
    %2083 = vmatpush1.bf16.xpose.msra.mxu0 0
    %2084 = vmatprep.subr.bf16.mxu0 0
    %2085 = vmatpush1.bf16.xpose.msra.mxu0 0
    %2086 = vmatprep.subr.bf16.mxu0 0
    %2087 = vmatpush1.bf16.xpose.msra.mxu0 0
    %2088 = vmatprep.subr.bf16.mxu0 0
    %2089 = vmatpush1.bf16.xpose.msra.mxu0 0
    %2090 = vmatprep.subr.bf16.mxu0 0
    %2091 = vmatpush1.bf16.xpose.msra.mxu0 0
    %2092 = vmatprep.subr.bf16.mxu0 0
    %2093 = vmatpush1.bf16.xpose.msra.mxu0 0
    %2094 = vmatprep.subr.bf16.mxu0 0
    %2095 = vmatpush1.bf16.xpose.msra.mxu0 0
    %2096 = vmatprep.subr.bf16.mxu0 0
    %2097 = vmatpush1.bf16.xpose.msra.mxu0 0
    %2098 = vmatprep.subr.bf16.mxu0 0
    %2099 = vmatpush1.bf16.xpose.msra.mxu0 0
    %2100 = vmatprep.subr.bf16.mxu0 0
    %2101 = vmatpush1.bf16.xpose.msra.mxu0 0
    %2102 = vmatprep.subr.bf16.mxu0 0
    %2103 = vmatpush1.bf16.xpose.msra.mxu0 0
    %2104 = vmatprep.subr.bf16.mxu0 0
    %2105 = vmatpush1.bf16.xpose.msra.mxu0 0
    %2106 = vmatprep.subr.bf16.mxu0 0
    %2107 = vmatpush1.bf16.xpose.msra.mxu0 0
    %2108 = vmatprep.subr.bf16.mxu0 0
    %2109 = vmatpush1.bf16.xpose.msra.mxu0 0
    %2110 = vmatprep.subr.bf16.mxu0 0
    %2111 = vmatpush1.bf16.xpose.msra.mxu0 0
    %2112 = vmatprep.mubr.bf16.mxu0 0
    %2113 = vmatmul.mubr.bf16.gmra.mrb[0].mxu0 %v2075
    %v2114 = vpop.f32.mrb[0].mxu0
    %v2115 = vadd.f32 0.0, %v2114
    %v2116 = vpop.f32.mrb[0].mxu0
    %v2117 = vpop.f32.mrb[0].mxu0
    %v2118 = vpop.f32.mrb[0].mxu0
    %2119 = vdwg.mxu0
    %v2121 = vsel %vm424, %v2071, 0
    %v2124 = vsel %vm424, %v2073, 0
    %2126 = vmatprep.subr.bf16.mxu0 0
    %2127 = vmatpush1.bf16.xpose.msra.mxu0 %v2124
    %2128 = vmatprep.subr.bf16.mxu0 0
    %2129 = vmatpush1.bf16.xpose.msra.mxu0 0
    %2130 = vmatprep.subr.bf16.mxu0 0
    %2131 = vmatpush1.bf16.xpose.msra.mxu0 0
    %2132 = vmatprep.subr.bf16.mxu0 0
    %2133 = vmatpush1.bf16.xpose.msra.mxu0 0
    %2134 = vmatprep.subr.bf16.mxu0 0
    %2135 = vmatpush1.bf16.xpose.msra.mxu0 0
    %2136 = vmatprep.subr.bf16.mxu0 0
    %2137 = vmatpush1.bf16.xpose.msra.mxu0 0
    %2138 = vmatprep.subr.bf16.mxu0 0
    %2139 = vmatpush1.bf16.xpose.msra.mxu0 0
    %2140 = vmatprep.subr.bf16.mxu0 0
    %2141 = vmatpush1.bf16.xpose.msra.mxu0 0
    %2142 = vmatprep.subr.bf16.mxu0 0
    %2143 = vmatpush1.bf16.xpose.msra.mxu0 0
    %2144 = vmatprep.subr.bf16.mxu0 0
    %2145 = vmatpush1.bf16.xpose.msra.mxu0 0
    %2146 = vmatprep.subr.bf16.mxu0 0
    %2147 = vmatpush1.bf16.xpose.msra.mxu0 0
    %2148 = vmatprep.subr.bf16.mxu0 0
    %2149 = vmatpush1.bf16.xpose.msra.mxu0 0
    %2150 = vmatprep.subr.bf16.mxu0 0
    %2151 = vmatpush1.bf16.xpose.msra.mxu0 0
    %2152 = vmatprep.subr.bf16.mxu0 0
    %2153 = vmatpush1.bf16.xpose.msra.mxu0 0
    %2154 = vmatprep.subr.bf16.mxu0 0
    %2155 = vmatpush1.bf16.xpose.msra.mxu0 0
    %2156 = vmatprep.subr.bf16.mxu0 0
    %2157 = vmatpush1.bf16.xpose.msra.mxu0 0
    %2158 = vmatprep.mubr.bf16.mxu0 0
    %2159 = vmatmul.mubr.bf16.gmra.mrb[0].mxu0 %v2121
    %v2160 = vpop.f32.mrb[0].mxu0
    %v2161 = vadd.f32 0.0, %v2160
    %v2162 = vpop.f32.mrb[0].mxu0
    %v2163 = vpop.f32.mrb[0].mxu0
    %v2164 = vpop.f32.mrb[0].mxu0
    %2165 = vdwg.mxu0
    %v2166 = vmul.f32 %v2115, 0.25
    %v2167 = vmul.f32 %v2161, 0.25
    %vm2168 = vcmask 57344
    %v2169 = vsel %vm2168, %v2166, -inf
    %2170 = vmax.xlane.f32.xlu0 %v2169
    %v2171 = vpop.xlane.xlu0 %2170
    %v2172 = vsel %vm2168, %v2167, -inf
    %2173 = vmax.xlane.f32.xlu0 %v2172
    %v2174 = vpop.xlane.xlu0 %2173
    %v2175 = vsub.f32 %v2166, %v2171
    %v2176 = vsub.f32 %v2167, %v2174
    %v2177 = vmul.f32 %v2175, 1.442695
    %v2178 = vpow.pop %v2177
    %v2179 = vmul.f32 %v2176, 1.442695
    %v2180 = vpow.pop %v2179
    %v2181 = vsel %vm2168, %v2178, 0.0
    %2182 = vadd.xlane.f32.xlu0 %v2181
    %v2183 = vpop.xlane.xlu0 %2182
    %v2184 = vsel %vm2168, %v2180, 0.0
    %2185 = vadd.xlane.f32.xlu0 %v2184
    %v2186 = vpop.xlane.xlu0 %2185
    %v2187 = vrcp.pop %v2183
    %v2188 = vrcp.pop %v2186
    %v2189 = vmul.f32 %v2178, %v2187
    %v2190 = vmul.f32 %v2180, %v2188
    %v2191 = vpack.c.bf16 %v2189, %v2189
    %v2192 = vpack.c.bf16 %v2190, %v2190
    %v2193 = vpack.c.bf16 %v2039, %v2039
    %v2194 = vpack.c.bf16 %v2042, %v2042
    %v2196 = vsel %vm519, %v2191, 0
    %v2199 = vsel %vm136, %v2193, 0
    %2201 = vmatprep.subr.bf16.mxu0 0
    %2202 = vmatpush1.bf16.msra.mxu0 %v2199
    %2203 = vmatprep.subr.bf16.mxu0 0
    %2204 = vmatpush1.bf16.msra.mxu0 0
    %2205 = vmatprep.subr.bf16.mxu0 0
    %2206 = vmatpush1.bf16.msra.mxu0 0
    %2207 = vmatprep.subr.bf16.mxu0 0
    %2208 = vmatpush1.bf16.msra.mxu0 0
    %2209 = vmatprep.subr.bf16.mxu0 0
    %2210 = vmatpush1.bf16.msra.mxu0 0
    %2211 = vmatprep.subr.bf16.mxu0 0
    %2212 = vmatpush1.bf16.msra.mxu0 0
    %2213 = vmatprep.subr.bf16.mxu0 0
    %2214 = vmatpush1.bf16.msra.mxu0 0
    %2215 = vmatprep.subr.bf16.mxu0 0
    %2216 = vmatpush1.bf16.msra.mxu0 0
    %2217 = vmatprep.subr.bf16.mxu0 0
    %2218 = vmatpush1.bf16.msra.mxu0 0
    %2219 = vmatprep.subr.bf16.mxu0 0
    %2220 = vmatpush1.bf16.msra.mxu0 0
    %2221 = vmatprep.subr.bf16.mxu0 0
    %2222 = vmatpush1.bf16.msra.mxu0 0
    %2223 = vmatprep.subr.bf16.mxu0 0
    %2224 = vmatpush1.bf16.msra.mxu0 0
    %2225 = vmatprep.subr.bf16.mxu0 0
    %2226 = vmatpush1.bf16.msra.mxu0 0
    %2227 = vmatprep.subr.bf16.mxu0 0
    %2228 = vmatpush1.bf16.msra.mxu0 0
    %2229 = vmatprep.subr.bf16.mxu0 0
    %2230 = vmatpush1.bf16.msra.mxu0 0
    %2231 = vmatprep.subr.bf16.mxu0 0
    %2232 = vmatpush1.bf16.msra.mxu0 0
    %2233 = vmatprep.mubr.bf16.mxu0 0
    %2234 = vmatmul.mubr.bf16.gmra.mrb[0].mxu0 %v2196
    %v2235 = vpop.f32.mrb[0].mxu0
    %v2236 = vadd.f32 0.0, %v2235
    %v2237 = vpop.f32.mrb[0].mxu0
    %v2238 = vpop.f32.mrb[0].mxu0
    %v2239 = vpop.f32.mrb[0].mxu0
    %2240 = vdwg.mxu0
    %v2242 = vsel %vm519, %v2192, 0
    %v2245 = vsel %vm136, %v2194, 0
    %2247 = vmatprep.subr.bf16.mxu0 0
    %2248 = vmatpush1.bf16.msra.mxu0 %v2245
    %2249 = vmatprep.subr.bf16.mxu0 0
    %2250 = vmatpush1.bf16.msra.mxu0 0
    %2251 = vmatprep.subr.bf16.mxu0 0
    %2252 = vmatpush1.bf16.msra.mxu0 0
    %2253 = vmatprep.subr.bf16.mxu0 0
    %2254 = vmatpush1.bf16.msra.mxu0 0
    %2255 = vmatprep.subr.bf16.mxu0 0
    %2256 = vmatpush1.bf16.msra.mxu0 0
    %2257 = vmatprep.subr.bf16.mxu0 0
    %2258 = vmatpush1.bf16.msra.mxu0 0
    %2259 = vmatprep.subr.bf16.mxu0 0
    %2260 = vmatpush1.bf16.msra.mxu0 0
    %2261 = vmatprep.subr.bf16.mxu0 0
    %2262 = vmatpush1.bf16.msra.mxu0 0
    %2263 = vmatprep.subr.bf16.mxu0 0
    %2264 = vmatpush1.bf16.msra.mxu0 0
    %2265 = vmatprep.subr.bf16.mxu0 0
    %2266 = vmatpush1.bf16.msra.mxu0 0
    %2267 = vmatprep.subr.bf16.mxu0 0
    %2268 = vmatpush1.bf16.msra.mxu0 0
    %2269 = vmatprep.subr.bf16.mxu0 0
    %2270 = vmatpush1.bf16.msra.mxu0 0
    %2271 = vmatprep.subr.bf16.mxu0 0
    %2272 = vmatpush1.bf16.msra.mxu0 0
    %2273 = vmatprep.subr.bf16.mxu0 0
    %2274 = vmatpush1.bf16.msra.mxu0 0
    %2275 = vmatprep.subr.bf16.mxu0 0
    %2276 = vmatpush1.bf16.msra.mxu0 0
    %2277 = vmatprep.subr.bf16.mxu0 0
    %2278 = vmatpush1.bf16.msra.mxu0 0
    %2279 = vmatprep.mubr.bf16.mxu0 0
    %2280 = vmatmul.mubr.bf16.gmra.mrb[0].mxu0 %v2242
    %v2281 = vpop.f32.mrb[0].mxu0
    %v2282 = vadd.f32 0.0, %v2281
    %v2283 = vpop.f32.mrb[0].mxu0
    %v2284 = vpop.f32.mrb[0].mxu0
    %v2285 = vpop.f32.mrb[0].mxu0
    %2286 = vdwg.mxu0
    %2288 = vrot.lane.b32.xlu0 %v2070, 112
    %v2289 = vpop.permute.xlu0 %2288
    %2291 = vrot.lane.b32.xlu0 %v2072, 112
    %v2292 = vpop.permute.xlu0 %2291
    %v2294 = vsel %vm424, %v2289, 0
    %v2297 = vsel %vm424, %v2292, 0
    %2299 = vmatprep.subr.bf16.mxu0 0
    %2300 = vmatpush1.bf16.xpose.msra.mxu0 %v2297
    %2301 = vmatprep.subr.bf16.mxu0 0
    %2302 = vmatpush1.bf16.xpose.msra.mxu0 0
    %2303 = vmatprep.subr.bf16.mxu0 0
    %2304 = vmatpush1.bf16.xpose.msra.mxu0 0
    %2305 = vmatprep.subr.bf16.mxu0 0
    %2306 = vmatpush1.bf16.xpose.msra.mxu0 0
    %2307 = vmatprep.subr.bf16.mxu0 0
    %2308 = vmatpush1.bf16.xpose.msra.mxu0 0
    %2309 = vmatprep.subr.bf16.mxu0 0
    %2310 = vmatpush1.bf16.xpose.msra.mxu0 0
    %2311 = vmatprep.subr.bf16.mxu0 0
    %2312 = vmatpush1.bf16.xpose.msra.mxu0 0
    %2313 = vmatprep.subr.bf16.mxu0 0
    %2314 = vmatpush1.bf16.xpose.msra.mxu0 0
    %2315 = vmatprep.subr.bf16.mxu0 0
    %2316 = vmatpush1.bf16.xpose.msra.mxu0 0
    %2317 = vmatprep.subr.bf16.mxu0 0
    %2318 = vmatpush1.bf16.xpose.msra.mxu0 0
    %2319 = vmatprep.subr.bf16.mxu0 0
    %2320 = vmatpush1.bf16.xpose.msra.mxu0 0
    %2321 = vmatprep.subr.bf16.mxu0 0
    %2322 = vmatpush1.bf16.xpose.msra.mxu0 0
    %2323 = vmatprep.subr.bf16.mxu0 0
    %2324 = vmatpush1.bf16.xpose.msra.mxu0 0
    %2325 = vmatprep.subr.bf16.mxu0 0
    %2326 = vmatpush1.bf16.xpose.msra.mxu0 0
    %2327 = vmatprep.subr.bf16.mxu0 0
    %2328 = vmatpush1.bf16.xpose.msra.mxu0 0
    %2329 = vmatprep.subr.bf16.mxu0 0
    %2330 = vmatpush1.bf16.xpose.msra.mxu0 0
    %2331 = vmatprep.mubr.bf16.mxu0 0
    %2332 = vmatmul.mubr.bf16.gmra.mrb[0].mxu0 %v2294
    %v2333 = vpop.f32.mrb[0].mxu0
    %v2334 = vadd.f32 0.0, %v2333
    %v2335 = vpop.f32.mrb[0].mxu0
    %v2336 = vpop.f32.mrb[0].mxu0
    %v2337 = vpop.f32.mrb[0].mxu0
    %2338 = vdwg.mxu0
    %2340 = vrot.lane.b32.xlu0 %v2071, 112
    %v2341 = vpop.permute.xlu0 %2340
    %2343 = vrot.lane.b32.xlu0 %v2073, 112
    %v2344 = vpop.permute.xlu0 %2343
    %v2346 = vsel %vm424, %v2341, 0
    %v2349 = vsel %vm424, %v2344, 0
    %2351 = vmatprep.subr.bf16.mxu0 0
    %2352 = vmatpush1.bf16.xpose.msra.mxu0 %v2349
    %2353 = vmatprep.subr.bf16.mxu0 0
    %2354 = vmatpush1.bf16.xpose.msra.mxu0 0
    %2355 = vmatprep.subr.bf16.mxu0 0
    %2356 = vmatpush1.bf16.xpose.msra.mxu0 0
    %2357 = vmatprep.subr.bf16.mxu0 0
    %2358 = vmatpush1.bf16.xpose.msra.mxu0 0
    %2359 = vmatprep.subr.bf16.mxu0 0
    %2360 = vmatpush1.bf16.xpose.msra.mxu0 0
    %2361 = vmatprep.subr.bf16.mxu0 0
    %2362 = vmatpush1.bf16.xpose.msra.mxu0 0
    %2363 = vmatprep.subr.bf16.mxu0 0
    %2364 = vmatpush1.bf16.xpose.msra.mxu0 0
    %2365 = vmatprep.subr.bf16.mxu0 0
    %2366 = vmatpush1.bf16.xpose.msra.mxu0 0
    %2367 = vmatprep.subr.bf16.mxu0 0
    %2368 = vmatpush1.bf16.xpose.msra.mxu0 0
    %2369 = vmatprep.subr.bf16.mxu0 0
    %2370 = vmatpush1.bf16.xpose.msra.mxu0 0
    %2371 = vmatprep.subr.bf16.mxu0 0
    %2372 = vmatpush1.bf16.xpose.msra.mxu0 0
    %2373 = vmatprep.subr.bf16.mxu0 0
    %2374 = vmatpush1.bf16.xpose.msra.mxu0 0
    %2375 = vmatprep.subr.bf16.mxu0 0
    %2376 = vmatpush1.bf16.xpose.msra.mxu0 0
    %2377 = vmatprep.subr.bf16.mxu0 0
    %2378 = vmatpush1.bf16.xpose.msra.mxu0 0
    %2379 = vmatprep.subr.bf16.mxu0 0
    %2380 = vmatpush1.bf16.xpose.msra.mxu0 0
    %2381 = vmatprep.subr.bf16.mxu0 0
    %2382 = vmatpush1.bf16.xpose.msra.mxu0 0
    %2383 = vmatprep.mubr.bf16.mxu0 0
    %2384 = vmatmul.mubr.bf16.gmra.mrb[0].mxu0 %v2346
    %v2385 = vpop.f32.mrb[0].mxu0
    %v2386 = vadd.f32 0.0, %v2385
    %v2387 = vpop.f32.mrb[0].mxu0
    %v2388 = vpop.f32.mrb[0].mxu0
    %v2389 = vpop.f32.mrb[0].mxu0
    %2390 = vdwg.mxu0
    %v2391 = vmul.f32 %v2334, 0.25
    %v2392 = vmul.f32 %v2386, 0.25
    %v2393 = vsel %vm2168, %v2391, -inf
    %2394 = vmax.xlane.f32.xlu0 %v2393
    %v2395 = vpop.xlane.xlu0 %2394
    %v2396 = vsel %vm2168, %v2392, -inf
    %2397 = vmax.xlane.f32.xlu0 %v2396
    %v2398 = vpop.xlane.xlu0 %2397
    %v2399 = vsub.f32 %v2391, %v2395
    %v2400 = vsub.f32 %v2392, %v2398
    %v2401 = vmul.f32 %v2399, 1.442695
    %v2402 = vpow.pop %v2401
    %v2403 = vmul.f32 %v2400, 1.442695
    %v2404 = vpow.pop %v2403
    %v2405 = vsel %vm2168, %v2402, 0.0
    %2406 = vadd.xlane.f32.xlu0 %v2405
    %v2407 = vpop.xlane.xlu0 %2406
    %v2408 = vsel %vm2168, %v2404, 0.0
    %2409 = vadd.xlane.f32.xlu0 %v2408
    %v2410 = vpop.xlane.xlu0 %2409
    %v2411 = vrcp.pop %v2407
    %v2412 = vrcp.pop %v2410
    %v2413 = vmul.f32 %v2402, %v2411
    %v2414 = vmul.f32 %v2404, %v2412
    %v2415 = vpack.c.bf16 %v2413, %v2413
    %v2416 = vpack.c.bf16 %v2414, %v2414
    %2418 = vrot.lane.b32.xlu0 %v2193, 112
    %v2419 = vpop.permute.xlu0 %2418
    %v2421 = vsel %vm519, %v2415, 0
    %v2424 = vsel %vm136, %v2419, 0
    %2426 = vmatprep.subr.bf16.mxu0 0
    %2427 = vmatpush1.bf16.msra.mxu0 %v2424
    %2428 = vmatprep.subr.bf16.mxu0 0
    %2429 = vmatpush1.bf16.msra.mxu0 0
    %2430 = vmatprep.subr.bf16.mxu0 0
    %2431 = vmatpush1.bf16.msra.mxu0 0
    %2432 = vmatprep.subr.bf16.mxu0 0
    %2433 = vmatpush1.bf16.msra.mxu0 0
    %2434 = vmatprep.subr.bf16.mxu0 0
    %2435 = vmatpush1.bf16.msra.mxu0 0
    %2436 = vmatprep.subr.bf16.mxu0 0
    %2437 = vmatpush1.bf16.msra.mxu0 0
    %2438 = vmatprep.subr.bf16.mxu0 0
    %2439 = vmatpush1.bf16.msra.mxu0 0
    %2440 = vmatprep.subr.bf16.mxu0 0
    %2441 = vmatpush1.bf16.msra.mxu0 0
    %2442 = vmatprep.subr.bf16.mxu0 0
    %2443 = vmatpush1.bf16.msra.mxu0 0
    %2444 = vmatprep.subr.bf16.mxu0 0
    %2445 = vmatpush1.bf16.msra.mxu0 0
    %2446 = vmatprep.subr.bf16.mxu0 0
    %2447 = vmatpush1.bf16.msra.mxu0 0
    %2448 = vmatprep.subr.bf16.mxu0 0
    %2449 = vmatpush1.bf16.msra.mxu0 0
    %2450 = vmatprep.subr.bf16.mxu0 0
    %2451 = vmatpush1.bf16.msra.mxu0 0
    %2452 = vmatprep.subr.bf16.mxu0 0
    %2453 = vmatpush1.bf16.msra.mxu0 0
    %2454 = vmatprep.subr.bf16.mxu0 0
    %2455 = vmatpush1.bf16.msra.mxu0 0
    %2456 = vmatprep.subr.bf16.mxu0 0
    %2457 = vmatpush1.bf16.msra.mxu0 0
    %2458 = vmatprep.mubr.bf16.mxu0 0
    %2459 = vmatmul.mubr.bf16.gmra.mrb[0].mxu0 %v2421
    %v2460 = vpop.f32.mrb[0].mxu0
    %v2461 = vadd.f32 0.0, %v2460
    %v2462 = vpop.f32.mrb[0].mxu0
    %v2463 = vpop.f32.mrb[0].mxu0
    %v2464 = vpop.f32.mrb[0].mxu0
    %2465 = vdwg.mxu0
    %2467 = vrot.lane.b32.xlu0 %v2194, 112
    %v2468 = vpop.permute.xlu0 %2467
    %v2470 = vsel %vm519, %v2416, 0
    %v2473 = vsel %vm136, %v2468, 0
    %2475 = vmatprep.subr.bf16.mxu0 0
    %2476 = vmatpush1.bf16.msra.mxu0 %v2473
    %2477 = vmatprep.subr.bf16.mxu0 0
    %2478 = vmatpush1.bf16.msra.mxu0 0
    %2479 = vmatprep.subr.bf16.mxu0 0
    %2480 = vmatpush1.bf16.msra.mxu0 0
    %2481 = vmatprep.subr.bf16.mxu0 0
    %2482 = vmatpush1.bf16.msra.mxu0 0
    %2483 = vmatprep.subr.bf16.mxu0 0
    %2484 = vmatpush1.bf16.msra.mxu0 0
    %2485 = vmatprep.subr.bf16.mxu0 0
    %2486 = vmatpush1.bf16.msra.mxu0 0
    %2487 = vmatprep.subr.bf16.mxu0 0
    %2488 = vmatpush1.bf16.msra.mxu0 0
    %2489 = vmatprep.subr.bf16.mxu0 0
    %2490 = vmatpush1.bf16.msra.mxu0 0
    %2491 = vmatprep.subr.bf16.mxu0 0
    %2492 = vmatpush1.bf16.msra.mxu0 0
    %2493 = vmatprep.subr.bf16.mxu0 0
    %2494 = vmatpush1.bf16.msra.mxu0 0
    %2495 = vmatprep.subr.bf16.mxu0 0
    %2496 = vmatpush1.bf16.msra.mxu0 0
    %2497 = vmatprep.subr.bf16.mxu0 0
    %2498 = vmatpush1.bf16.msra.mxu0 0
    %2499 = vmatprep.subr.bf16.mxu0 0
    %2500 = vmatpush1.bf16.msra.mxu0 0
    %2501 = vmatprep.subr.bf16.mxu0 0
    %2502 = vmatpush1.bf16.msra.mxu0 0
    %2503 = vmatprep.subr.bf16.mxu0 0
    %2504 = vmatpush1.bf16.msra.mxu0 0
    %2505 = vmatprep.subr.bf16.mxu0 0
    %2506 = vmatpush1.bf16.msra.mxu0 0
    %2507 = vmatprep.mubr.bf16.mxu0 0
    %2508 = vmatmul.mubr.bf16.gmra.mrb[0].mxu0 %v2470
    %v2509 = vpop.f32.mrb[0].mxu0
    %v2510 = vadd.f32 0.0, %v2509
    %v2511 = vpop.f32.mrb[0].mxu0
    %v2512 = vpop.f32.mrb[0].mxu0
    %v2513 = vpop.f32.mrb[0].mxu0
    %2514 = vdwg.mxu0
    %2515 = vrot.lane.b32.xlu0 %v2070, 96
    %v2516 = vpop.permute.xlu0 %2515
    %2517 = vrot.lane.b32.xlu0 %v2072, 96
    %v2518 = vpop.permute.xlu0 %2517
    %v2520 = vsel %vm424, %v2516, 0
    %v2523 = vsel %vm424, %v2518, 0
    %2525 = vmatprep.subr.bf16.mxu0 0
    %2526 = vmatpush1.bf16.xpose.msra.mxu0 %v2523
    %2527 = vmatprep.subr.bf16.mxu0 0
    %2528 = vmatpush1.bf16.xpose.msra.mxu0 0
    %2529 = vmatprep.subr.bf16.mxu0 0
    %2530 = vmatpush1.bf16.xpose.msra.mxu0 0
    %2531 = vmatprep.subr.bf16.mxu0 0
    %2532 = vmatpush1.bf16.xpose.msra.mxu0 0
    %2533 = vmatprep.subr.bf16.mxu0 0
    %2534 = vmatpush1.bf16.xpose.msra.mxu0 0
    %2535 = vmatprep.subr.bf16.mxu0 0
    %2536 = vmatpush1.bf16.xpose.msra.mxu0 0
    %2537 = vmatprep.subr.bf16.mxu0 0
    %2538 = vmatpush1.bf16.xpose.msra.mxu0 0
    %2539 = vmatprep.subr.bf16.mxu0 0
    %2540 = vmatpush1.bf16.xpose.msra.mxu0 0
    %2541 = vmatprep.subr.bf16.mxu0 0
    %2542 = vmatpush1.bf16.xpose.msra.mxu0 0
    %2543 = vmatprep.subr.bf16.mxu0 0
    %2544 = vmatpush1.bf16.xpose.msra.mxu0 0
    %2545 = vmatprep.subr.bf16.mxu0 0
    %2546 = vmatpush1.bf16.xpose.msra.mxu0 0
    %2547 = vmatprep.subr.bf16.mxu0 0
    %2548 = vmatpush1.bf16.xpose.msra.mxu0 0
    %2549 = vmatprep.subr.bf16.mxu0 0
    %2550 = vmatpush1.bf16.xpose.msra.mxu0 0
    %2551 = vmatprep.subr.bf16.mxu0 0
    %2552 = vmatpush1.bf16.xpose.msra.mxu0 0
    %2553 = vmatprep.subr.bf16.mxu0 0
    %2554 = vmatpush1.bf16.xpose.msra.mxu0 0
    %2555 = vmatprep.subr.bf16.mxu0 0
    %2556 = vmatpush1.bf16.xpose.msra.mxu0 0
    %2557 = vmatprep.mubr.bf16.mxu0 0
    %2558 = vmatmul.mubr.bf16.gmra.mrb[0].mxu0 %v2520
    %v2559 = vpop.f32.mrb[0].mxu0
    %v2560 = vadd.f32 0.0, %v2559
    %v2561 = vpop.f32.mrb[0].mxu0
    %v2562 = vpop.f32.mrb[0].mxu0
    %v2563 = vpop.f32.mrb[0].mxu0
    %2564 = vdwg.mxu0
    %2565 = vrot.lane.b32.xlu0 %v2071, 96
    %v2566 = vpop.permute.xlu0 %2565
    %2567 = vrot.lane.b32.xlu0 %v2073, 96
    %v2568 = vpop.permute.xlu0 %2567
    %v2570 = vsel %vm424, %v2566, 0
    %v2573 = vsel %vm424, %v2568, 0
    %2575 = vmatprep.subr.bf16.mxu0 0
    %2576 = vmatpush1.bf16.xpose.msra.mxu0 %v2573
    %2577 = vmatprep.subr.bf16.mxu0 0
    %2578 = vmatpush1.bf16.xpose.msra.mxu0 0
    %2579 = vmatprep.subr.bf16.mxu0 0
    %2580 = vmatpush1.bf16.xpose.msra.mxu0 0
    %2581 = vmatprep.subr.bf16.mxu0 0
    %2582 = vmatpush1.bf16.xpose.msra.mxu0 0
    %2583 = vmatprep.subr.bf16.mxu0 0
    %2584 = vmatpush1.bf16.xpose.msra.mxu0 0
    %2585 = vmatprep.subr.bf16.mxu0 0
    %2586 = vmatpush1.bf16.xpose.msra.mxu0 0
    %2587 = vmatprep.subr.bf16.mxu0 0
    %2588 = vmatpush1.bf16.xpose.msra.mxu0 0
    %2589 = vmatprep.subr.bf16.mxu0 0
    %2590 = vmatpush1.bf16.xpose.msra.mxu0 0
    %2591 = vmatprep.subr.bf16.mxu0 0
    %2592 = vmatpush1.bf16.xpose.msra.mxu0 0
    %2593 = vmatprep.subr.bf16.mxu0 0
    %2594 = vmatpush1.bf16.xpose.msra.mxu0 0
    %2595 = vmatprep.subr.bf16.mxu0 0
    %2596 = vmatpush1.bf16.xpose.msra.mxu0 0
    %2597 = vmatprep.subr.bf16.mxu0 0
    %2598 = vmatpush1.bf16.xpose.msra.mxu0 0
    %2599 = vmatprep.subr.bf16.mxu0 0
    %2600 = vmatpush1.bf16.xpose.msra.mxu0 0
    %2601 = vmatprep.subr.bf16.mxu0 0
    %2602 = vmatpush1.bf16.xpose.msra.mxu0 0
    %2603 = vmatprep.subr.bf16.mxu0 0
    %2604 = vmatpush1.bf16.xpose.msra.mxu0 0
    %2605 = vmatprep.subr.bf16.mxu0 0
    %2606 = vmatpush1.bf16.xpose.msra.mxu0 0
    %2607 = vmatprep.mubr.bf16.mxu0 0
    %2608 = vmatmul.mubr.bf16.gmra.mrb[0].mxu0 %v2570
    %v2609 = vpop.f32.mrb[0].mxu0
    %v2610 = vadd.f32 0.0, %v2609
    %v2611 = vpop.f32.mrb[0].mxu0
    %v2612 = vpop.f32.mrb[0].mxu0
    %v2613 = vpop.f32.mrb[0].mxu0
    %2614 = vdwg.mxu0
    %v2615 = vmul.f32 %v2560, 0.25
    %v2616 = vmul.f32 %v2610, 0.25
    %v2617 = vsel %vm2168, %v2615, -inf
    %2618 = vmax.xlane.f32.xlu0 %v2617
    %v2619 = vpop.xlane.xlu0 %2618
    %v2620 = vsel %vm2168, %v2616, -inf
    %2621 = vmax.xlane.f32.xlu0 %v2620
    %v2622 = vpop.xlane.xlu0 %2621
    %v2623 = vsub.f32 %v2615, %v2619
    %v2624 = vsub.f32 %v2616, %v2622
    %v2625 = vmul.f32 %v2623, 1.442695
    %v2626 = vpow.pop %v2625
    %v2627 = vmul.f32 %v2624, 1.442695
    %v2628 = vpow.pop %v2627
    %v2629 = vsel %vm2168, %v2626, 0.0
    %2630 = vadd.xlane.f32.xlu0 %v2629
    %v2631 = vpop.xlane.xlu0 %2630
    %v2632 = vsel %vm2168, %v2628, 0.0
    %2633 = vadd.xlane.f32.xlu0 %v2632
    %v2634 = vpop.xlane.xlu0 %2633
    %v2635 = vrcp.pop %v2631
    %v2636 = vrcp.pop %v2634
    %v2637 = vmul.f32 %v2626, %v2635
    %v2638 = vmul.f32 %v2628, %v2636
    %v2639 = vpack.c.bf16 %v2637, %v2637
    %v2640 = vpack.c.bf16 %v2638, %v2638
    %2641 = vrot.lane.b32.xlu0 %v2193, 96
    %v2642 = vpop.permute.xlu0 %2641
    %v2644 = vsel %vm519, %v2639, 0
    %v2647 = vsel %vm136, %v2642, 0
    %2649 = vmatprep.subr.bf16.mxu0 0
    %2650 = vmatpush1.bf16.msra.mxu0 %v2647
    %2651 = vmatprep.subr.bf16.mxu0 0
    %2652 = vmatpush1.bf16.msra.mxu0 0
    %2653 = vmatprep.subr.bf16.mxu0 0
    %2654 = vmatpush1.bf16.msra.mxu0 0
    %2655 = vmatprep.subr.bf16.mxu0 0
    %2656 = vmatpush1.bf16.msra.mxu0 0
    %2657 = vmatprep.subr.bf16.mxu0 0
    %2658 = vmatpush1.bf16.msra.mxu0 0
    %2659 = vmatprep.subr.bf16.mxu0 0
    %2660 = vmatpush1.bf16.msra.mxu0 0
    %2661 = vmatprep.subr.bf16.mxu0 0
    %2662 = vmatpush1.bf16.msra.mxu0 0
    %2663 = vmatprep.subr.bf16.mxu0 0
    %2664 = vmatpush1.bf16.msra.mxu0 0
    %2665 = vmatprep.subr.bf16.mxu0 0
    %2666 = vmatpush1.bf16.msra.mxu0 0
    %2667 = vmatprep.subr.bf16.mxu0 0
    %2668 = vmatpush1.bf16.msra.mxu0 0
    %2669 = vmatprep.subr.bf16.mxu0 0
    %2670 = vmatpush1.bf16.msra.mxu0 0
    %2671 = vmatprep.subr.bf16.mxu0 0
    %2672 = vmatpush1.bf16.msra.mxu0 0
    %2673 = vmatprep.subr.bf16.mxu0 0
    %2674 = vmatpush1.bf16.msra.mxu0 0
    %2675 = vmatprep.subr.bf16.mxu0 0
    %2676 = vmatpush1.bf16.msra.mxu0 0
    %2677 = vmatprep.subr.bf16.mxu0 0
    %2678 = vmatpush1.bf16.msra.mxu0 0
    %2679 = vmatprep.subr.bf16.mxu0 0
    %2680 = vmatpush1.bf16.msra.mxu0 0
    %2681 = vmatprep.mubr.bf16.mxu0 0
    %2682 = vmatmul.mubr.bf16.gmra.mrb[0].mxu0 %v2644
    %v2683 = vpop.f32.mrb[0].mxu0
    %v2684 = vadd.f32 0.0, %v2683
    %v2685 = vpop.f32.mrb[0].mxu0
    %v2686 = vpop.f32.mrb[0].mxu0
    %v2687 = vpop.f32.mrb[0].mxu0
    %2688 = vdwg.mxu0
    %2689 = vrot.lane.b32.xlu0 %v2194, 96
    %v2690 = vpop.permute.xlu0 %2689
    %v2692 = vsel %vm519, %v2640, 0
    %v2695 = vsel %vm136, %v2690, 0
    %2697 = vmatprep.subr.bf16.mxu0 0
    %2698 = vmatpush1.bf16.msra.mxu0 %v2695
    %2699 = vmatprep.subr.bf16.mxu0 0
    %2700 = vmatpush1.bf16.msra.mxu0 0
    %2701 = vmatprep.subr.bf16.mxu0 0
    %2702 = vmatpush1.bf16.msra.mxu0 0
    %2703 = vmatprep.subr.bf16.mxu0 0
    %2704 = vmatpush1.bf16.msra.mxu0 0
    %2705 = vmatprep.subr.bf16.mxu0 0
    %2706 = vmatpush1.bf16.msra.mxu0 0
    %2707 = vmatprep.subr.bf16.mxu0 0
    %2708 = vmatpush1.bf16.msra.mxu0 0
    %2709 = vmatprep.subr.bf16.mxu0 0
    %2710 = vmatpush1.bf16.msra.mxu0 0
    %2711 = vmatprep.subr.bf16.mxu0 0
    %2712 = vmatpush1.bf16.msra.mxu0 0
    %2713 = vmatprep.subr.bf16.mxu0 0
    %2714 = vmatpush1.bf16.msra.mxu0 0
    %2715 = vmatprep.subr.bf16.mxu0 0
    %2716 = vmatpush1.bf16.msra.mxu0 0
    %2717 = vmatprep.subr.bf16.mxu0 0
    %2718 = vmatpush1.bf16.msra.mxu0 0
    %2719 = vmatprep.subr.bf16.mxu0 0
    %2720 = vmatpush1.bf16.msra.mxu0 0
    %2721 = vmatprep.subr.bf16.mxu0 0
    %2722 = vmatpush1.bf16.msra.mxu0 0
    %2723 = vmatprep.subr.bf16.mxu0 0
    %2724 = vmatpush1.bf16.msra.mxu0 0
    %2725 = vmatprep.subr.bf16.mxu0 0
    %2726 = vmatpush1.bf16.msra.mxu0 0
    %2727 = vmatprep.subr.bf16.mxu0 0
    %2728 = vmatpush1.bf16.msra.mxu0 0
    %2729 = vmatprep.mubr.bf16.mxu0 0
    %2730 = vmatmul.mubr.bf16.gmra.mrb[0].mxu0 %v2692
    %v2731 = vpop.f32.mrb[0].mxu0
    %v2732 = vadd.f32 0.0, %v2731
    %v2733 = vpop.f32.mrb[0].mxu0
    %v2734 = vpop.f32.mrb[0].mxu0
    %v2735 = vpop.f32.mrb[0].mxu0
    %2736 = vdwg.mxu0
    %2737 = vrot.lane.b32.xlu0 %v2070, 80
    %v2738 = vpop.permute.xlu0 %2737
    %2739 = vrot.lane.b32.xlu0 %v2072, 80
    %v2740 = vpop.permute.xlu0 %2739
    %v2742 = vsel %vm424, %v2738, 0
    %v2745 = vsel %vm424, %v2740, 0
    %2747 = vmatprep.subr.bf16.mxu0 0
    %2748 = vmatpush1.bf16.xpose.msra.mxu0 %v2745
    %2749 = vmatprep.subr.bf16.mxu0 0
    %2750 = vmatpush1.bf16.xpose.msra.mxu0 0
    %2751 = vmatprep.subr.bf16.mxu0 0
    %2752 = vmatpush1.bf16.xpose.msra.mxu0 0
    %2753 = vmatprep.subr.bf16.mxu0 0
    %2754 = vmatpush1.bf16.xpose.msra.mxu0 0
    %2755 = vmatprep.subr.bf16.mxu0 0
    %2756 = vmatpush1.bf16.xpose.msra.mxu0 0
    %2757 = vmatprep.subr.bf16.mxu0 0
    %2758 = vmatpush1.bf16.xpose.msra.mxu0 0
    %2759 = vmatprep.subr.bf16.mxu0 0
    %2760 = vmatpush1.bf16.xpose.msra.mxu0 0
    %2761 = vmatprep.subr.bf16.mxu0 0
    %2762 = vmatpush1.bf16.xpose.msra.mxu0 0
    %2763 = vmatprep.subr.bf16.mxu0 0
    %2764 = vmatpush1.bf16.xpose.msra.mxu0 0
    %2765 = vmatprep.subr.bf16.mxu0 0
    %2766 = vmatpush1.bf16.xpose.msra.mxu0 0
    %2767 = vmatprep.subr.bf16.mxu0 0
    %2768 = vmatpush1.bf16.xpose.msra.mxu0 0
    %2769 = vmatprep.subr.bf16.mxu0 0
    %2770 = vmatpush1.bf16.xpose.msra.mxu0 0
    %2771 = vmatprep.subr.bf16.mxu0 0
    %2772 = vmatpush1.bf16.xpose.msra.mxu0 0
    %2773 = vmatprep.subr.bf16.mxu0 0
    %2774 = vmatpush1.bf16.xpose.msra.mxu0 0
    %2775 = vmatprep.subr.bf16.mxu0 0
    %2776 = vmatpush1.bf16.xpose.msra.mxu0 0
    %2777 = vmatprep.subr.bf16.mxu0 0
    %2778 = vmatpush1.bf16.xpose.msra.mxu0 0
    %2779 = vmatprep.mubr.bf16.mxu0 0
    %2780 = vmatmul.mubr.bf16.gmra.mrb[0].mxu0 %v2742
    %v2781 = vpop.f32.mrb[0].mxu0
    %v2782 = vadd.f32 0.0, %v2781
    %v2783 = vpop.f32.mrb[0].mxu0
    %v2784 = vpop.f32.mrb[0].mxu0
    %v2785 = vpop.f32.mrb[0].mxu0
    %2786 = vdwg.mxu0
    %2787 = vrot.lane.b32.xlu0 %v2071, 80
    %v2788 = vpop.permute.xlu0 %2787
    %2789 = vrot.lane.b32.xlu0 %v2073, 80
    %v2790 = vpop.permute.xlu0 %2789
    %v2792 = vsel %vm424, %v2788, 0
    %v2795 = vsel %vm424, %v2790, 0
    %2797 = vmatprep.subr.bf16.mxu0 0
    %2798 = vmatpush1.bf16.xpose.msra.mxu0 %v2795
    %2799 = vmatprep.subr.bf16.mxu0 0
    %2800 = vmatpush1.bf16.xpose.msra.mxu0 0
    %2801 = vmatprep.subr.bf16.mxu0 0
    %2802 = vmatpush1.bf16.xpose.msra.mxu0 0
    %2803 = vmatprep.subr.bf16.mxu0 0
    %2804 = vmatpush1.bf16.xpose.msra.mxu0 0
    %2805 = vmatprep.subr.bf16.mxu0 0
    %2806 = vmatpush1.bf16.xpose.msra.mxu0 0
    %2807 = vmatprep.subr.bf16.mxu0 0
    %2808 = vmatpush1.bf16.xpose.msra.mxu0 0
    %2809 = vmatprep.subr.bf16.mxu0 0
    %2810 = vmatpush1.bf16.xpose.msra.mxu0 0
    %2811 = vmatprep.subr.bf16.mxu0 0
    %2812 = vmatpush1.bf16.xpose.msra.mxu0 0
    %2813 = vmatprep.subr.bf16.mxu0 0
    %2814 = vmatpush1.bf16.xpose.msra.mxu0 0
    %2815 = vmatprep.subr.bf16.mxu0 0
    %2816 = vmatpush1.bf16.xpose.msra.mxu0 0
    %2817 = vmatprep.subr.bf16.mxu0 0
    %2818 = vmatpush1.bf16.xpose.msra.mxu0 0
    %2819 = vmatprep.subr.bf16.mxu0 0
    %2820 = vmatpush1.bf16.xpose.msra.mxu0 0
    %2821 = vmatprep.subr.bf16.mxu0 0
    %2822 = vmatpush1.bf16.xpose.msra.mxu0 0
    %2823 = vmatprep.subr.bf16.mxu0 0
    %2824 = vmatpush1.bf16.xpose.msra.mxu0 0
    %2825 = vmatprep.subr.bf16.mxu0 0
    %2826 = vmatpush1.bf16.xpose.msra.mxu0 0
    %2827 = vmatprep.subr.bf16.mxu0 0
    %2828 = vmatpush1.bf16.xpose.msra.mxu0 0
    %2829 = vmatprep.mubr.bf16.mxu0 0
    %2830 = vmatmul.mubr.bf16.gmra.mrb[0].mxu0 %v2792
    %v2831 = vpop.f32.mrb[0].mxu0
    %v2832 = vadd.f32 0.0, %v2831
    %v2833 = vpop.f32.mrb[0].mxu0
    %v2834 = vpop.f32.mrb[0].mxu0
    %v2835 = vpop.f32.mrb[0].mxu0
    %2836 = vdwg.mxu0
    %v2837 = vmul.f32 %v2782, 0.25
    %v2838 = vmul.f32 %v2832, 0.25
    %v2839 = vsel %vm2168, %v2837, -inf
    %2840 = vmax.xlane.f32.xlu0 %v2839
    %v2841 = vpop.xlane.xlu0 %2840
    %v2842 = vsel %vm2168, %v2838, -inf
    %2843 = vmax.xlane.f32.xlu0 %v2842
    %v2844 = vpop.xlane.xlu0 %2843
    %v2845 = vsub.f32 %v2837, %v2841
    %v2846 = vsub.f32 %v2838, %v2844
    %v2847 = vmul.f32 %v2845, 1.442695
    %v2848 = vpow.pop %v2847
    %v2849 = vmul.f32 %v2846, 1.442695
    %v2850 = vpow.pop %v2849
    %v2851 = vsel %vm2168, %v2848, 0.0
    %2852 = vadd.xlane.f32.xlu0 %v2851
    %v2853 = vpop.xlane.xlu0 %2852
    %v2854 = vsel %vm2168, %v2850, 0.0
    %2855 = vadd.xlane.f32.xlu0 %v2854
    %v2856 = vpop.xlane.xlu0 %2855
    %v2857 = vrcp.pop %v2853
    %v2858 = vrcp.pop %v2856
    %v2859 = vmul.f32 %v2848, %v2857
    %v2860 = vmul.f32 %v2850, %v2858
    %v2861 = vpack.c.bf16 %v2859, %v2859
    %v2862 = vpack.c.bf16 %v2860, %v2860
    %2863 = vrot.lane.b32.xlu0 %v2193, 80
    %v2864 = vpop.permute.xlu0 %2863
    %v2866 = vsel %vm519, %v2861, 0
    %v2869 = vsel %vm136, %v2864, 0
    %2871 = vmatprep.subr.bf16.mxu0 0
    %2872 = vmatpush1.bf16.msra.mxu0 %v2869
    %2873 = vmatprep.subr.bf16.mxu0 0
    %2874 = vmatpush1.bf16.msra.mxu0 0
    %2875 = vmatprep.subr.bf16.mxu0 0
    %2876 = vmatpush1.bf16.msra.mxu0 0
    %2877 = vmatprep.subr.bf16.mxu0 0
    %2878 = vmatpush1.bf16.msra.mxu0 0
    %2879 = vmatprep.subr.bf16.mxu0 0
    %2880 = vmatpush1.bf16.msra.mxu0 0
    %2881 = vmatprep.subr.bf16.mxu0 0
    %2882 = vmatpush1.bf16.msra.mxu0 0
    %2883 = vmatprep.subr.bf16.mxu0 0
    %2884 = vmatpush1.bf16.msra.mxu0 0
    %2885 = vmatprep.subr.bf16.mxu0 0
    %2886 = vmatpush1.bf16.msra.mxu0 0
    %2887 = vmatprep.subr.bf16.mxu0 0
    %2888 = vmatpush1.bf16.msra.mxu0 0
    %2889 = vmatprep.subr.bf16.mxu0 0
    %2890 = vmatpush1.bf16.msra.mxu0 0
    %2891 = vmatprep.subr.bf16.mxu0 0
    %2892 = vmatpush1.bf16.msra.mxu0 0
    %2893 = vmatprep.subr.bf16.mxu0 0
    %2894 = vmatpush1.bf16.msra.mxu0 0
    %2895 = vmatprep.subr.bf16.mxu0 0
    %2896 = vmatpush1.bf16.msra.mxu0 0
    %2897 = vmatprep.subr.bf16.mxu0 0
    %2898 = vmatpush1.bf16.msra.mxu0 0
    %2899 = vmatprep.subr.bf16.mxu0 0
    %2900 = vmatpush1.bf16.msra.mxu0 0
    %2901 = vmatprep.subr.bf16.mxu0 0
    %2902 = vmatpush1.bf16.msra.mxu0 0
    %2903 = vmatprep.mubr.bf16.mxu0 0
    %2904 = vmatmul.mubr.bf16.gmra.mrb[0].mxu0 %v2866
    %v2905 = vpop.f32.mrb[0].mxu0
    %v2906 = vadd.f32 0.0, %v2905
    %v2907 = vpop.f32.mrb[0].mxu0
    %v2908 = vpop.f32.mrb[0].mxu0
    %v2909 = vpop.f32.mrb[0].mxu0
    %2910 = vdwg.mxu0
    %2911 = vrot.lane.b32.xlu0 %v2194, 80
    %v2912 = vpop.permute.xlu0 %2911
    %v2914 = vsel %vm519, %v2862, 0
    %v2917 = vsel %vm136, %v2912, 0
    %2919 = vmatprep.subr.bf16.mxu0 0
    %2920 = vmatpush1.bf16.msra.mxu0 %v2917
    %2921 = vmatprep.subr.bf16.mxu0 0
    %2922 = vmatpush1.bf16.msra.mxu0 0
    %2923 = vmatprep.subr.bf16.mxu0 0
    %2924 = vmatpush1.bf16.msra.mxu0 0
    %2925 = vmatprep.subr.bf16.mxu0 0
    %2926 = vmatpush1.bf16.msra.mxu0 0
    %2927 = vmatprep.subr.bf16.mxu0 0
    %2928 = vmatpush1.bf16.msra.mxu0 0
    %2929 = vmatprep.subr.bf16.mxu0 0
    %2930 = vmatpush1.bf16.msra.mxu0 0
    %2931 = vmatprep.subr.bf16.mxu0 0
    %2932 = vmatpush1.bf16.msra.mxu0 0
    %2933 = vmatprep.subr.bf16.mxu0 0
    %2934 = vmatpush1.bf16.msra.mxu0 0
    %2935 = vmatprep.subr.bf16.mxu0 0
    %2936 = vmatpush1.bf16.msra.mxu0 0
    %2937 = vmatprep.subr.bf16.mxu0 0
    %2938 = vmatpush1.bf16.msra.mxu0 0
    %2939 = vmatprep.subr.bf16.mxu0 0
    %2940 = vmatpush1.bf16.msra.mxu0 0
    %2941 = vmatprep.subr.bf16.mxu0 0
    %2942 = vmatpush1.bf16.msra.mxu0 0
    %2943 = vmatprep.subr.bf16.mxu0 0
    %2944 = vmatpush1.bf16.msra.mxu0 0
    %2945 = vmatprep.subr.bf16.mxu0 0
    %2946 = vmatpush1.bf16.msra.mxu0 0
    %2947 = vmatprep.subr.bf16.mxu0 0
    %2948 = vmatpush1.bf16.msra.mxu0 0
    %2949 = vmatprep.subr.bf16.mxu0 0
    %2950 = vmatpush1.bf16.msra.mxu0 0
    %2951 = vmatprep.mubr.bf16.mxu0 0
    %2952 = vmatmul.mubr.bf16.gmra.mrb[0].mxu0 %v2914
    %v2953 = vpop.f32.mrb[0].mxu0
    %v2954 = vadd.f32 0.0, %v2953
    %v2955 = vpop.f32.mrb[0].mxu0
    %v2956 = vpop.f32.mrb[0].mxu0
    %v2957 = vpop.f32.mrb[0].mxu0
    %2958 = vdwg.mxu0
    %v2961 = vrot.slane %v2282, 7
    %v2962 = vsel %vm1817, %v2961, %v2236
    %v2966 = vrot.slane %v2510, 7
    %v2967 = vsel %vm1817, %v2966, %v2461
    %2968 = vrot.lane.b32.xlu0 %v2967, 16
    %v2969 = vpop.permute.xlu0 %2968
    %v2973 = vrot.slane %v2732, 7
    %v2974 = vsel %vm1817, %v2973, %v2684
    %2975 = vrot.lane.b32.xlu0 %v2974, 32
    %v2976 = vpop.permute.xlu0 %2975
    %v2980 = vrot.slane %v2954, 7
    %v2981 = vsel %vm1817, %v2980, %v2906
    %2982 = vrot.lane.b32.xlu0 %v2981, 48
    %v2983 = vpop.permute.xlu0 %2982
    %v2985 = vsel %vm424, %v2962, %v2969
    %v2986 = vsel %vm1336, %v2985, %v2976
    %v2987 = vsel %vm1339, %v2986, %v2983
    %v2988 = vpack.c.bf16 %v2987, %v2987
    %v2989 = vld [vmem:[#allocation4] sm:$0xf]
    %v2990 = vld [vmem:[#allocation4 + $0x4] sm:$0xf]
    %v2991 = vld [vmem:[#allocation4 + $0x8] sm:$0xf]
    %v2992 = vld [vmem:[#allocation4 + $0xc] sm:$0xf]
    %v2993 = vld [vmem:[#allocation4 + $0x10] sm:$0xf]
    %v2994 = vld [vmem:[#allocation4 + $0x14] sm:$0xf]
    %v2995 = vld [vmem:[#allocation4 + $0x18] sm:$0xf]
    %v2996 = vld [vmem:[#allocation4 + $0x1c] sm:$0xf]
    %v2997 = vlaneseq
    %v2998 = vshrl.u32 %v2997, 7
    %v2999 = vsub.s32 4, %v2998
    %v3000 = vrot.slane %v114, %v2999
    %v3009 = vunpack.c.l.b16 %v2989
    %v3010 = vunpack.c.l.b16 %v2990
    %v3011 = vunpack.c.l.b16 %v2991
    %v3012 = vunpack.c.l.b16 %v2992
    %v3013 = vunpack.c.l.b16 %v2993
    %v3014 = vunpack.c.l.b16 %v2994
    %v3015 = vunpack.c.l.b16 %v2995
    %v3016 = vunpack.c.l.b16 %v2996
    %v3017 = vpack.c.b16 %v3010, %v3009
    %v3018 = vpack.c.b16 %v3012, %v3011
    %v3019 = vpack.c.b16 %v3014, %v3013
    %v3020 = vpack.c.b16 %v3016, %v3015
    %v3026 = vsel %vm221, %v2988, 0
    %3028 = vmatprep.subr.bf16.mxu0 0
    %3029 = vmatpush1.bf16.msra.mxu0 %v3017
    %3030 = vmatprep.subr.bf16.mxu0 0
    %3031 = vmatpush1.bf16.msra.mxu0 %v3018
    %3032 = vmatprep.subr.bf16.mxu0 0
    %3033 = vmatpush1.bf16.msra.mxu0 %v3019
    %3034 = vmatprep.subr.bf16.mxu0 0
    %3035 = vmatpush1.bf16.msra.mxu0 %v3020
    %3036 = vmatprep.subr.bf16.mxu0 0
    %3037 = vmatpush1.bf16.msra.mxu0 0
    %3038 = vmatprep.subr.bf16.mxu0 0
    %3039 = vmatpush1.bf16.msra.mxu0 0
    %3040 = vmatprep.subr.bf16.mxu0 0
    %3041 = vmatpush1.bf16.msra.mxu0 0
    %3042 = vmatprep.subr.bf16.mxu0 0
    %3043 = vmatpush1.bf16.msra.mxu0 0
    %3044 = vmatprep.subr.bf16.mxu0 0
    %3045 = vmatpush1.bf16.msra.mxu0 0
    %3046 = vmatprep.subr.bf16.mxu0 0
    %3047 = vmatpush1.bf16.msra.mxu0 0
    %3048 = vmatprep.subr.bf16.mxu0 0
    %3049 = vmatpush1.bf16.msra.mxu0 0
    %3050 = vmatprep.subr.bf16.mxu0 0
    %3051 = vmatpush1.bf16.msra.mxu0 0
    %3052 = vmatprep.subr.bf16.mxu0 0
    %3053 = vmatpush1.bf16.msra.mxu0 0
    %3054 = vmatprep.subr.bf16.mxu0 0
    %3055 = vmatpush1.bf16.msra.mxu0 0
    %3056 = vmatprep.subr.bf16.mxu0 0
    %3057 = vmatpush1.bf16.msra.mxu0 0
    %3058 = vmatprep.subr.bf16.mxu0 0
    %3059 = vmatpush1.bf16.msra.mxu0 0
    %3060 = vmatprep.mubr.bf16.mxu0 0
    %3061 = vmatmul.mubr.bf16.gmra.mrb[0].mxu0 %v3026
    %v3062 = vpop.f32.mrb[0].mxu0
    %v3063 = vadd.f32 %v3000, %v3062
    %v3064 = vpop.f32.mrb[0].mxu0
    %v3065 = vpop.f32.mrb[0].mxu0
    %v3066 = vpop.f32.mrb[0].mxu0
    %3067 = vdwg.mxu0
    %v3069 = vrot.slane %v3063, 1
    %v3070 = vrot.slane %v3063, 2
    %v3073 = vadd.f32 %v1795, %v3069
    %v3074 = vadd.f32 %v1796, %v3070
    %v3077 = vrot.slane %v3074, 7
    %vm3080 = vcmask 523271
    %v3081 = vsel %vm3080, %v3073, 0.0
    %3082 = vadd.xlane.f32.xlu0 %v3081
    %v3083 = vpop.xlane.xlu0 %3082
    %vm3084 = vcmask 516096
    %v3085 = vsel %vm3084, %v3077, 0.0
    %3086 = vadd.xlane.f32.xlu0 %v3085
    %v3087 = vpop.xlane.xlu0 %3086
    %v3088 = vmul.f32 %v3083, %v1431
    %v3089 = vmul.f32 %v3087, %v1431
    %v3092 = vrot.slane %v3089, 1
    %v3095 = vsub.f32 %v3073, %v3088
    %v3096 = vsub.f32 %v3074, %v3092
    %v3097 = vmul.f32 %v3095, %v3095
    %v3098 = vmul.f32 %v3096, %v3096
    %v3101 = vrot.slane %v3098, 7
    %v3104 = vsel %vm3080, %v3097, 0.0
    %3105 = vadd.xlane.f32.xlu0 %v3104
    %v3106 = vpop.xlane.xlu0 %3105
    %v3107 = vsel %vm3084, %v3101, 0.0
    %3108 = vadd.xlane.f32.xlu0 %v3107
    %v3109 = vpop.xlane.xlu0 %3108
    %v3110 = vmul.f32 %v3106, %v1431
    %v3111 = vmul.f32 %v3109, %v1431
    %v3112 = vadd.f32 %v3110, 1e-05
    %v3113 = vadd.f32 %v3111, 1e-05
    %v3114 = vrsqrt.pop %v3112
    %v3115 = vrsqrt.pop %v3113
    %v3118 = vrot.slane %v3115, 1
    %v3121 = vmul.f32 %v3095, %v3114
    %v3122 = vmul.f32 %v3096, %v3118
    %v3123 = vlaneseq
    %v3124 = vshrl.u32 %v3123, 7
    %v3125 = vsub.s32 6, %v3124
    %v3126 = vrot.slane %v114, %v3125
    %v3127 = vmul.f32 %v3121, %v3126
    %v3128 = vmul.f32 %v3122, %v3126
    %v3129 = vlaneseq
    %v3130 = vshrl.u32 %v3129, 7
    %v3131 = vsub.s32 7, %v3130
    %v3132 = vrot.slane %v114, %v3131
    %v3133 = vadd.f32 %v3127, %v3132
    %v3134 = vadd.f32 %v3128, %v3132
    %v3135 = vpack.c.bf16 %v3133, %v3133
    %v3136 = vpack.c.bf16 %v3134, %v3134
    %v3137 = vld [vmem:[%s13] sm:$0xff]
    %v3138 = vld [vmem:[%s13 + $0x8] sm:$0xff]
    %v3139 = vld [vmem:[%s13 + $0x10] sm:$0xff]
    %v3140 = vld [vmem:[%s13 + $0x18] sm:$0xff]
    %v3141 = vld [vmem:[%s13 + $0x20] sm:$0xff]
    %v3142 = vld [vmem:[%s13 + $0x28] sm:$0xff]
    %v3143 = vld [vmem:[%s13 + $0x30] sm:$0xff]
    %v3144 = vld [vmem:[%s13 + $0x38] sm:$0xff]
    %v3145 = vlaneseq
    %v3146 = vshrl.u32 %v3145, 7
    %v3147 = vsub.s32 1, %v3146
    %v3148 = vrot.slane %v116, %v3147
    %v3149 = vlaneseq
    %v3150 = vshrl.u32 %v3149, 7
    %v3151 = vsub.s32 3, %v3150
    %v3152 = vrot.slane %v116, %v3151
    %v3155 = vlaneseq
    %v3156 = vshrl.u32 %v3155, 7
    %v3157 = vsub.s32 1, %v3156
    %v3158 = vrot.slane %v3148, %v3157
    %v3159 = vlaneseq
    %v3160 = vshrl.u32 %v3159, 7
    %v3161 = vsub.s32 1, %v3160
    %v3162 = vrot.slane %v3152, %v3161
    %v3165 = vunpack.c.l.b16 %v3135
    %v3166 = vunpack.c.l.b16 %v3136
    %v3167 = vrot.slane %v3165, 7
    %v3168 = vrot.slane %v3166, 6
    %v3169 = vsel %vm1817, %v3168, %v3167
    %v3170 = vpack.c.b16 %v3169, %v3169
    %v3179 = vunpack.c.l.b16 %v3137
    %v3180 = vunpack.c.h.b16 %v3137
    %v3181 = vunpack.c.l.b16 %v3138
    %v3182 = vunpack.c.h.b16 %v3138
    %v3183 = vunpack.c.l.b16 %v3139
    %v3184 = vunpack.c.h.b16 %v3139
    %v3185 = vunpack.c.l.b16 %v3140
    %v3186 = vunpack.c.h.b16 %v3140
    %v3187 = vunpack.c.l.b16 %v3141
    %v3188 = vunpack.c.h.b16 %v3141
    %v3189 = vunpack.c.l.b16 %v3142
    %v3190 = vunpack.c.h.b16 %v3142
    %v3191 = vunpack.c.l.b16 %v3143
    %v3192 = vunpack.c.h.b16 %v3143
    %v3193 = vunpack.c.l.b16 %v3144
    %v3194 = vunpack.c.h.b16 %v3144
    %v3195 = vpack.c.b16 %v3181, %v3179
    %v3196 = vpack.c.b16 %v3182, %v3180
    %v3197 = vpack.c.b16 %v3185, %v3183
    %v3198 = vpack.c.b16 %v3186, %v3184
    %v3199 = vpack.c.b16 %v3189, %v3187
    %v3200 = vpack.c.b16 %v3190, %v3188
    %v3201 = vpack.c.b16 %v3193, %v3191
    %v3202 = vpack.c.b16 %v3194, %v3192
    %v3212 = vsel %vm221, %v3170, 0
    %3214 = vmatprep.subr.bf16.mxu0 %v3196
    %3215 = vmatpush1.bf16.msra.mxu0 %v3195
    %3216 = vmatprep.subr.bf16.mxu0 %v3198
    %3217 = vmatpush1.bf16.msra.mxu0 %v3197
    %3218 = vmatprep.subr.bf16.mxu0 %v3200
    %3219 = vmatpush1.bf16.msra.mxu0 %v3199
    %3220 = vmatprep.subr.bf16.mxu0 %v3202
    %3221 = vmatpush1.bf16.msra.mxu0 %v3201
    %3222 = vmatprep.subr.bf16.mxu0 0
    %3223 = vmatpush1.bf16.msra.mxu0 0
    %3224 = vmatprep.subr.bf16.mxu0 0
    %3225 = vmatpush1.bf16.msra.mxu0 0
    %3226 = vmatprep.subr.bf16.mxu0 0
    %3227 = vmatpush1.bf16.msra.mxu0 0
    %3228 = vmatprep.subr.bf16.mxu0 0
    %3229 = vmatpush1.bf16.msra.mxu0 0
    %3230 = vmatprep.subr.bf16.mxu0 0
    %3231 = vmatpush1.bf16.msra.mxu0 0
    %3232 = vmatprep.subr.bf16.mxu0 0
    %3233 = vmatpush1.bf16.msra.mxu0 0
    %3234 = vmatprep.subr.bf16.mxu0 0
    %3235 = vmatpush1.bf16.msra.mxu0 0
    %3236 = vmatprep.subr.bf16.mxu0 0
    %3237 = vmatpush1.bf16.msra.mxu0 0
    %3238 = vmatprep.subr.bf16.mxu0 0
    %3239 = vmatpush1.bf16.msra.mxu0 0
    %3240 = vmatprep.subr.bf16.mxu0 0
    %3241 = vmatpush1.bf16.msra.mxu0 0
    %3242 = vmatprep.subr.bf16.mxu0 0
    %3243 = vmatpush1.bf16.msra.mxu0 0
    %3244 = vmatprep.subr.bf16.mxu0 0
    %3245 = vmatpush1.bf16.msra.mxu0 0
    %3246 = vmatprep.mubr.bf16.mxu0 0
    %3247 = vmatmul.mubr.bf16.gmra.mrb[0].mxu0 %v3212
    %v3248 = vpop.f32.mrb[0].mxu0
    %v3249 = vadd.f32 %v3158, %v3248
    %v3250 = vpop.f32.mrb[0].mxu0
    %v3251 = vadd.f32 %v3162, %v3250
    %v3252 = vpop.f32.mrb[0].mxu0
    %v3253 = vpop.f32.mrb[0].mxu0
    %3254 = vdwg.mxu0
    %v3255 = vmax.f32 %v3249, 0.0
    %v3256 = vmax.f32 %v3251, 0.0
    %v3257 = vpack.c.bf16 %v3255, %v3255
    %v3258 = vpack.c.bf16 %v3256, %v3256
    %v3259 = vld [vmem:[%s14] sm:$0xf]
    %v3260 = vld [vmem:[%s14 + $0x4] sm:$0xf]
    %v3261 = vld [vmem:[%s14 + $0x8] sm:$0xf]
    %v3262 = vld [vmem:[%s14 + $0xc] sm:$0xf]
    %v3263 = vld [vmem:[%s14 + $0x10] sm:$0xf]
    %v3264 = vld [vmem:[%s14 + $0x14] sm:$0xf]
    %v3265 = vld [vmem:[%s14 + $0x18] sm:$0xf]
    %v3266 = vld [vmem:[%s14 + $0x1c] sm:$0xf]
    %v3267 = vld [vmem:[%s14 + $0x20] sm:$0xf]
    %v3268 = vld [vmem:[%s14 + $0x24] sm:$0xf]
    %v3269 = vld [vmem:[%s14 + $0x28] sm:$0xf]
    %v3270 = vld [vmem:[%s14 + $0x2c] sm:$0xf]
    %v3271 = vld [vmem:[%s14 + $0x30] sm:$0xf]
    %v3272 = vld [vmem:[%s14 + $0x34] sm:$0xf]
    %v3273 = vld [vmem:[%s14 + $0x38] sm:$0xf]
    %v3274 = vld [vmem:[%s14 + $0x3c] sm:$0xf]
    %v3275 = vld [vmem:[%s14 + $0x40] sm:$0xf]
    %v3276 = vld [vmem:[%s14 + $0x44] sm:$0xf]
    %v3277 = vld [vmem:[%s14 + $0x48] sm:$0xf]
    %v3278 = vld [vmem:[%s14 + $0x4c] sm:$0xf]
    %v3279 = vld [vmem:[%s14 + $0x50] sm:$0xf]
    %v3280 = vld [vmem:[%s14 + $0x54] sm:$0xf]
    %v3281 = vld [vmem:[%s14 + $0x58] sm:$0xf]
    %v3282 = vld [vmem:[%s14 + $0x5c] sm:$0xf]
    %v3283 = vld [vmem:[%s14 + $0x60] sm:$0xf]
    %v3284 = vld [vmem:[%s14 + $0x64] sm:$0xf]
    %v3285 = vld [vmem:[%s14 + $0x68] sm:$0xf]
    %v3286 = vld [vmem:[%s14 + $0x6c] sm:$0xf]
    %v3287 = vld [vmem:[%s14 + $0x70] sm:$0xf]
    %v3288 = vld [vmem:[%s14 + $0x74] sm:$0xf]
    %v3289 = vld [vmem:[%s14 + $0x78] sm:$0xf]
    %v3290 = vld [vmem:[%s14 + $0x7c] sm:$0xf]
    %v3291 = vlaneseq
    %v3292 = vshrl.u32 %v3291, 7
    %v3293 = vsub.s32 5, %v3292
    %v3294 = vrot.slane %v114, %v3293
    %v3327 = vunpack.c.l.b16 %v3259
    %v3328 = vunpack.c.l.b16 %v3260
    %v3329 = vunpack.c.l.b16 %v3261
    %v3330 = vunpack.c.l.b16 %v3262
    %v3331 = vunpack.c.l.b16 %v3263
    %v3332 = vunpack.c.l.b16 %v3264
    %v3333 = vunpack.c.l.b16 %v3265
    %v3334 = vunpack.c.l.b16 %v3266
    %v3335 = vunpack.c.l.b16 %v3267
    %v3336 = vunpack.c.l.b16 %v3268
    %v3337 = vunpack.c.l.b16 %v3269
    %v3338 = vunpack.c.l.b16 %v3270
    %v3339 = vunpack.c.l.b16 %v3271
    %v3340 = vunpack.c.l.b16 %v3272
    %v3341 = vunpack.c.l.b16 %v3273
    %v3342 = vunpack.c.l.b16 %v3274
    %v3343 = vunpack.c.l.b16 %v3275
    %v3344 = vunpack.c.l.b16 %v3276
    %v3345 = vunpack.c.l.b16 %v3277
    %v3346 = vunpack.c.l.b16 %v3278
    %v3347 = vunpack.c.l.b16 %v3279
    %v3348 = vunpack.c.l.b16 %v3280
    %v3349 = vunpack.c.l.b16 %v3281
    %v3350 = vunpack.c.l.b16 %v3282
    %v3351 = vunpack.c.l.b16 %v3283
    %v3352 = vunpack.c.l.b16 %v3284
    %v3353 = vunpack.c.l.b16 %v3285
    %v3354 = vunpack.c.l.b16 %v3286
    %v3355 = vunpack.c.l.b16 %v3287
    %v3356 = vunpack.c.l.b16 %v3288
    %v3357 = vunpack.c.l.b16 %v3289
    %v3358 = vunpack.c.l.b16 %v3290
    %v3359 = vpack.c.b16 %v3328, %v3327
    %v3360 = vpack.c.b16 %v3330, %v3329
    %v3361 = vpack.c.b16 %v3332, %v3331
    %v3362 = vpack.c.b16 %v3334, %v3333
    %v3363 = vpack.c.b16 %v3336, %v3335
    %v3364 = vpack.c.b16 %v3338, %v3337
    %v3365 = vpack.c.b16 %v3340, %v3339
    %v3366 = vpack.c.b16 %v3342, %v3341
    %v3367 = vpack.c.b16 %v3344, %v3343
    %v3368 = vpack.c.b16 %v3346, %v3345
    %v3369 = vpack.c.b16 %v3348, %v3347
    %v3370 = vpack.c.b16 %v3350, %v3349
    %v3371 = vpack.c.b16 %v3352, %v3351
    %v3372 = vpack.c.b16 %v3354, %v3353
    %v3373 = vpack.c.b16 %v3356, %v3355
    %v3374 = vpack.c.b16 %v3358, %v3357
    %3391 = vmatprep.subr.bf16.mxu0 0
    %3392 = vmatpush1.bf16.msra.mxu0 %v3359
    %3393 = vmatprep.subr.bf16.mxu0 0
    %3394 = vmatpush1.bf16.msra.mxu0 %v3360
    %3395 = vmatprep.subr.bf16.mxu0 0
    %3396 = vmatpush1.bf16.msra.mxu0 %v3361
    %3397 = vmatprep.subr.bf16.mxu0 0
    %3398 = vmatpush1.bf16.msra.mxu0 %v3362
    %3399 = vmatprep.subr.bf16.mxu0 0
    %3400 = vmatpush1.bf16.msra.mxu0 %v3363
    %3401 = vmatprep.subr.bf16.mxu0 0
    %3402 = vmatpush1.bf16.msra.mxu0 %v3364
    %3403 = vmatprep.subr.bf16.mxu0 0
    %3404 = vmatpush1.bf16.msra.mxu0 %v3365
    %3405 = vmatprep.subr.bf16.mxu0 0
    %3406 = vmatpush1.bf16.msra.mxu0 %v3366
    %3407 = vmatprep.subr.bf16.mxu0 0
    %3408 = vmatpush1.bf16.msra.mxu0 %v3367
    %3409 = vmatprep.subr.bf16.mxu0 0
    %3410 = vmatpush1.bf16.msra.mxu0 %v3368
    %3411 = vmatprep.subr.bf16.mxu0 0
    %3412 = vmatpush1.bf16.msra.mxu0 %v3369
    %3413 = vmatprep.subr.bf16.mxu0 0
    %3414 = vmatpush1.bf16.msra.mxu0 %v3370
    %3415 = vmatprep.subr.bf16.mxu0 0
    %3416 = vmatpush1.bf16.msra.mxu0 %v3371
    %3417 = vmatprep.subr.bf16.mxu0 0
    %3418 = vmatpush1.bf16.msra.mxu0 %v3372
    %3419 = vmatprep.subr.bf16.mxu0 0
    %3420 = vmatpush1.bf16.msra.mxu0 %v3373
    %3421 = vmatprep.subr.bf16.mxu0 0
    %3422 = vmatpush1.bf16.msra.mxu0 %v3374
    %3423 = vmatprep.mubr.bf16.mxu0 %v3258
    %3424 = vmatmul.mubr.bf16.gmra.mrb[0].mxu0 %v3257
    %v3425 = vpop.f32.mrb[0].mxu0
    %v3426 = vadd.f32 %v3294, %v3425
    %v3427 = vpop.f32.mrb[0].mxu0
    %v3428 = vpop.f32.mrb[0].mxu0
    %v3429 = vpop.f32.mrb[0].mxu0
    %3430 = vdwg.mxu0
    %v3432 = vrot.slane %v3426, 1
    %v3433 = vrot.slane %v3426, 2
    %v3436 = vadd.f32 %v3133, %v3432
    %v3437 = vadd.f32 %v3134, %v3433
    %v3440 = vrot.slane %v3437, 7
    %v3443 = vsel %vm3080, %v3436, 0.0
    %3444 = vadd.xlane.f32.xlu0 %v3443
    %v3445 = vpop.xlane.xlu0 %3444
    %v3446 = vsel %vm3084, %v3440, 0.0
    %3447 = vadd.xlane.f32.xlu0 %v3446
    %v3448 = vpop.xlane.xlu0 %3447
    %v3449 = vmul.f32 %v3445, %v1431
    %v3450 = vmul.f32 %v3448, %v1431
    %v3453 = vrot.slane %v3450, 1
    %v3456 = vsub.f32 %v3436, %v3449
    %v3457 = vsub.f32 %v3437, %v3453
    %v3458 = vmul.f32 %v3456, %v3456
    %v3459 = vmul.f32 %v3457, %v3457
    %v3462 = vrot.slane %v3459, 7
    %v3465 = vsel %vm3080, %v3458, 0.0
    %3466 = vadd.xlane.f32.xlu0 %v3465
    %v3467 = vpop.xlane.xlu0 %3466
    %v3468 = vsel %vm3084, %v3462, 0.0
    %3469 = vadd.xlane.f32.xlu0 %v3468
    %v3470 = vpop.xlane.xlu0 %3469
    %v3471 = vmul.f32 %v3467, %v1431
    %v3472 = vmul.f32 %v3470, %v1431
    %v3473 = vadd.f32 %v3471, 1e-05
    %v3474 = vadd.f32 %v3472, 1e-05
    %v3475 = vrsqrt.pop %v3473
    %v3476 = vrsqrt.pop %v3474
    %v3479 = vrot.slane %v3476, 1
    %v3482 = vmul.f32 %v3456, %v3475
    %v3483 = vmul.f32 %v3457, %v3479
    %v3484 = vlaneseq
    %v3485 = vshrl.u32 %v3484, 7
    %v3486 = vsub.s32 0, %v3485
    %v3487 = vrot.slane %v115, %v3486
    %v3488 = vmul.f32 %v3482, %v3487
    %v3489 = vmul.f32 %v3483, %v3487
    %v3490 = vlaneseq
    %v3491 = vshrl.u32 %v3490, 7
    %v3492 = vsub.s32 1, %v3491
    %v3493 = vrot.slane %v115, %v3492
    %v3494 = vadd.f32 %v3488, %v3493
    %v3495 = vadd.f32 %v3489, %v3493
    %v3496 = vld [vmem:[%s17] sm:$0xff]
    %v3497 = vld [vmem:[%s17 + $0x8] sm:$0xff]
    %v3498 = vld [vmem:[%s17 + $0x10] sm:$0xff]
    %v3499 = vld [vmem:[%s17 + $0x18] sm:$0xff]
    %v3500 = vld [vmem:[%s17 + $0x20] sm:$0xff]
    %v3501 = vld [vmem:[%s17 + $0x28] sm:$0xff]
    %v3502 = vld [vmem:[%s17 + $0x30] sm:$0xff]
    %v3503 = vld [vmem:[%s17 + $0x38] sm:$0xff]
    %v3504 = vld [vmem:[%s17 + $0x40] sm:$0x1]
    %v3505 = vlaneseq
    %v3506 = vshrl.u32 %v3505, 7
    %v3507 = vsub.s32 0, %v3506
    %v3508 = vrot.slane %v3504, %v3507
    %v3511 = vrot.slane %v3494, 7
    %v3512 = vrot.slane %v3495, 6
    %v3513 = vsel %vm1817, %v3512, %v3511
    %v3514 = vsel %vm221, %v3513, 0
    %3516 = vmatprep.subr.mxu0 0.0
    %3517 = vmatpush1.msra.mxu0 %v3496
    %3518 = vmatprep.subr.mxu0 0.0
    %3519 = vmatpush1.msra.mxu0 %v3497
    %3520 = vmatprep.subr.mxu0 0.0
    %3521 = vmatpush1.msra.mxu0 %v3498
    %3522 = vmatprep.subr.mxu0 0.0
    %3523 = vmatpush1.msra.mxu0 %v3499
    %3524 = vmatprep.subr.mxu0 0.0
    %3525 = vmatpush1.msra.mxu0 %v3500
    %3526 = vmatprep.subr.mxu0 0.0
    %3527 = vmatpush1.msra.mxu0 %v3501
    %3528 = vmatprep.subr.mxu0 0.0
    %3529 = vmatpush1.msra.mxu0 %v3502
    %3530 = vmatprep.subr.mxu0 0.0
    %3531 = vmatpush1.msra.mxu0 %v3503
    %3532 = vmatprep.subr.mxu0 0.0
    %3533 = vmatpush1.msra.mxu0 0.0
    %3534 = vmatprep.subr.mxu0 0.0
    %3535 = vmatpush1.msra.mxu0 0.0
    %3536 = vmatprep.subr.mxu0 0.0
    %3537 = vmatpush1.msra.mxu0 0.0
    %3538 = vmatprep.subr.mxu0 0.0
    %3539 = vmatpush1.msra.mxu0 0.0
    %3540 = vmatprep.subr.mxu0 0.0
    %3541 = vmatpush1.msra.mxu0 0.0
    %3542 = vmatprep.subr.mxu0 0.0
    %3543 = vmatpush1.msra.mxu0 0.0
    %3544 = vmatprep.subr.mxu0 0.0
    %3545 = vmatpush1.msra.mxu0 0.0
    %3546 = vmatprep.subr.mxu0 0.0
    %3547 = vmatpush1.msra.mxu0 0.0
    %3548 = vmatprep.subr.mxu0 0.0
    %3549 = vmatpush1.msra.mxu0 0.0
    %3550 = vmatprep.subr.mxu0 0.0
    %3551 = vmatpush1.msra.mxu0 0.0
    %3552 = vmatprep.subr.mxu0 0.0
    %3553 = vmatpush1.msra.mxu0 0.0
    %3554 = vmatprep.subr.mxu0 0.0
    %3555 = vmatpush1.msra.mxu0 0.0
    %3556 = vmatprep.subr.mxu0 0.0
    %3557 = vmatpush1.msra.mxu0 0.0
    %3558 = vmatprep.subr.mxu0 0.0
    %3559 = vmatpush1.msra.mxu0 0.0
    %3560 = vmatprep.subr.mxu0 0.0
    %3561 = vmatpush1.msra.mxu0 0.0
    %3562 = vmatprep.subr.mxu0 0.0
    %3563 = vmatpush1.msra.mxu0 0.0
    %3564 = vmatprep.subr.mxu0 0.0
    %3565 = vmatpush1.msra.mxu0 0.0
    %3566 = vmatprep.subr.mxu0 0.0
    %3567 = vmatpush1.msra.mxu0 0.0
    %3568 = vmatprep.subr.mxu0 0.0
    %3569 = vmatpush1.msra.mxu0 0.0
    %3570 = vmatprep.subr.mxu0 0.0
    %3571 = vmatpush1.msra.mxu0 0.0
    %3572 = vmatprep.subr.mxu0 0.0
    %3573 = vmatpush1.msra.mxu0 0.0
    %3574 = vmatprep.subr.mxu0 0.0
    %3575 = vmatpush1.msra.mxu0 0.0
    %3576 = vmatprep.subr.mxu0 0.0
    %3577 = vmatpush1.msra.mxu0 0.0
    %3578 = vmatprep.subr.mxu0 0.0
    %3579 = vmatpush1.msra.mxu0 0.0
    %3580 = vmatprep.mubr.f32.mxu0 0.0
    %3581 = vmatmul.mubr.f32.gmra.mrb[0].mxu0 %v3514
    %v3582 = vpop.f32.mrb[0].mxu0
    %v3583 = vadd.f32 %v3508, %v3582
    %v3584 = vpop.f32.mrb[0].mxu0
    %3585 = vdwg.mxu0
    %vm3586 = vcmask 1024
    %3587 = vst.msk [vmem:[%s18] sm:$0x3] %vm3586, %v3583
    // Predicated region
    $region90: #{basic_transformer_forward.1} parent=1 // pred_check
      _
    $region91: #{basic_transformer_forward.1} parent=1 // pred_check_branch
      %3589 = sbr.rel (0) target = $region93
    $region92: #{basic_transformer_forward.1} parent=1 // pred_region
      _
    $region93: #{basic_transformer_forward.1} parent=1 // pred_fallthru
      _
    // Predicated region
    $region94: #{basic_transformer_forward.1} parent=1 // pred_check
      _
    $region95: #{basic_transformer_forward.1} parent=1 // pred_check_branch
      %3591 = sbr.rel (0) target = $region97
    $region96: #{basic_transformer_forward.1} parent=1 // pred_region
      _
    $region97: #{basic_transformer_forward.1} parent=1 // pred_fallthru
      _
    %3592 = vsyncpa [#allocation3], 1
    %3593 = vsyncpa [#allocation5], 1
    %3594 = vsyncpa [#allocation8], 1

</llo_original>
